<compile_context>
chip_gen: v5e
topology: v5e:2x2
jax: 0.10.0
libtpu: 0.0.40
codegen_flags: <defaults>
</compile_context>

<pallas_src>
import functools

import jax
import jax.numpy as jnp
from jax.experimental import pallas as pl
from jax.experimental.pallas import tpu as pltpu


# ----------------------------------------------------------------------------
# Generation-aware sizing helpers
# ----------------------------------------------------------------------------
@functools.lru_cache(maxsize=None)
def _device_kind() -> str:
    try:
        return jax.devices()[0].device_kind.lower()
    except Exception:
        return ""


@functools.lru_cache(maxsize=None)
def _vmem_limit_bytes() -> int:
    cap = None
    try:
        cap = int(pltpu.get_tpu_info().vmem_capacity_bytes)
    except Exception:
        cap = None
    if not cap or cap <= 0:
        kind = _device_kind()
        cap = (64 if ("v7" in kind or "7x" in kind) else 128) * 1024 * 1024
    # ~5/8 of physical VMEM: ~40 MiB on 64 MiB parts (v7x), ~80 MiB on 128 MiB
    # parts (v5e/v6e); leaves headroom for Mosaic internal scratch.
    return max(32 * 1024 * 1024, min(cap * 5 // 8, 96 * 1024 * 1024))


def _softmax_exp_dtype():
    # v5e/v5p have no bf16 EUP; the bf16 exp only helps on v6e / v7x.
    return jnp.float32 if "v5" in _device_kind() else jnp.bfloat16


# ----------------------------------------------------------------------------
# Kernel 1: WSConv2d(3x3, stride 1, pad 1) + bias + LeakyReLU(0.2) + PixelNorm
# ----------------------------------------------------------------------------
def _ws_conv_kernel(xm_ref, xh_ref, col_ref, w_ref, b_ref, o_ref, slab_ref, *,
                    tile_h, width, use_pn):
    """One (batch, row-tile) block.

    xm_ref  : (1, tile_h*W, Cin) bf16  padded rows [i*th, i*th+th), flattened
    xh_ref  : (1, 2*W, Cin)      bf16  next two padded rows (bottom halo)
    col_ref : (tile_h*W, 1)      int32 column index of every output position
    w_ref   : (9, Cin, Cout)     bf16  conv taps (ky*3+kx), WS scale folded in
    b_ref   : (1, Cout)          f32
    o_ref   : (1, tile_h*W, Cout)
    slab_ref: (tile_h*W + 2*W + 16, Cin) bf16 scratch
    """
    th, W = tile_h, width
    n = th * W
    cin = w_ref.shape[1]
    cout = w_ref.shape[2]

    # Sublane-aligned slab: [8 guard | n main | 2*W halo | 8 guard] rows.
    # Guard rows are only read by the (ky=0,kx=0) tap at p=0 and the
    # (ky=2,kx=2) tap at p=n-1; both positions are replaced by 0 via the
    # left/right masks below.  They are zeroed anyway so the coupling with the
    # masking is not load-bearing.
    zeros8 = jnp.zeros((8, cin), slab_ref.dtype)
    slab_ref[0:8] = zeros8
    slab_ref[8:8 + n] = xm_ref[0]
    slab_ref[8 + n:8 + n + 2 * W] = xh_ref[0]
    slab_ref[8 + n + 2 * W:16 + n + 2 * W] = zeros8

    col = col_ref[...]
    left = col == 0            # tap kx=0 would wrap to the previous image row
    right = col == (W - 1)     # tap kx=2 would wrap to the next image row

    acc = jnp.zeros((n, cout), jnp.float32)
    for ky in range(3):
        for kx in range(3):
            start = 7 + ky * W + kx            # main rows start at offset 8
            patch = slab_ref[start:start + n, :]
            if kx == 0:
                patch = jnp.where(left, 0.0, patch)
            elif kx == 2:
                patch = jnp.where(right, 0.0, patch)
            acc = acc + jnp.dot(patch, w_ref[ky * 3 + kx],
                                preferred_element_type=jnp.float32)

    y = acc + b_ref[...]                                     # bias
    y = jnp.where(y >= 0.0, y, 0.2 * y)                      # LeakyReLU(0.2)
    if use_pn:                                               # PixelNorm (channels)
        y = y * jax.lax.rsqrt(jnp.mean(y * y, axis=-1, keepdims=True) + 1e-8)
    o_ref[0] = y.astype(o_ref.dtype)


def _pick_tile_h(H, W, cin, cout, out_itemsize, vmem_limit):
    """Largest even divisor of H whose per-step VMEM footprint fits the budget."""
    if W % 4 != 0 or H % 2 != 0:
        return H
    per_row = W * (2 * 2 * cin                 # input block  (bf16, 2 buffers)
                   + 2 * out_itemsize * cout   # output block (2 buffers)
                   + 2 * cin                   # slab scratch (bf16)
                   + 2 * 4 * cout)             # f32 accumulator + epilogue temp
    fixed = (2 * 9 * cin * cout * 2            # weights (bf16, 2 buffers)
             + 2 * 2 * W * cin * 2             # halo block (bf16, 2 buffers)
             + (2 * W + 16) * cin * 2)         # slab halo + guard rows
    max_rows = max((vmem_limit - fixed - (8 << 20)) // max(per_row, 1), 0)
    best = None
    for d in range(2, H + 1, 2):               # even d -> aligned halo index
        if H % d == 0 and (d * W) % 8 == 0 and d * W <= max_rows:
            best = d
    if best is None:                           # budget too tight: smallest valid
        for d in range(2, H + 1, 2):
            if H % d == 0 and (d * W) % 8 == 0:
                best = d
                break
    return best if best is not None else H


def ws_conv_leaky_pn(x_nhwc, w9, b2, use_pn, *, tile_h=None,
                     out_dtype=jnp.bfloat16):
    """WSConv2d(3x3) + LeakyReLU(0.2) + optional PixelNorm; NHWC in / NHWC out.

    w9 : (9, Cin, Cout) bf16 with the WS scale folded in; b2 : (1, Cout) f32.
    """
    B, H, W, Cin = x_nhwc.shape
    Cout = w9.shape[2]
    vmem_limit = _vmem_limit_bytes()

    if tile_h is None:
        tile_h = _pick_tile_h(H, W, Cin, Cout, jnp.dtype(out_dtype).itemsize,
                              vmem_limit)
    n = tile_h * W
    assert H % tile_h == 0 and tile_h % 2 == 0, "tile_h must be an even divisor of H"
    assert n % 8 == 0 and (2 * W) % 8 == 0, "need W % 4 == 0 for aligned row tiles"
    n_tiles = H // tile_h
    half = tile_h // 2

    # bf16 activations; one zero pad row top/bottom; rows flattened so the
    # kernel sees a lane-dense (rows*W, Cin) layout it can halo-slice.
    xb = x_nhwc.astype(jnp.bfloat16)
    xf = jnp.pad(xb, ((0, 0), (1, 1), (0, 0), (0, 0))).reshape(B, (H + 2) * W, Cin)
    col_idx = (jnp.arange(n, dtype=jnp.int32) % W).reshape(n, 1)

    kernel = functools.partial(_ws_conv_kernel, tile_h=tile_h, width=W,
                               use_pn=use_pn)
    out = pl.pallas_call(
        kernel,
        out_shape=jax.ShapeDtypeStruct((B, H * W, Cout), out_dtype),
        grid_spec=pltpu.PrefetchScalarGridSpec(
            num_scalar_prefetch=0,
            grid=(B, n_tiles),
            in_specs=[
                # main tile: padded rows [i*th, i*th + th), flattened
                pl.BlockSpec((1, n, Cin), lambda b, i: (b, i, 0)),
                # bottom halo: padded rows [(i+1)*th, (i+1)*th + 2)
                pl.BlockSpec((1, 2 * W, Cin), lambda b, i: (b, (i + 1) * half, 0)),
                pl.BlockSpec((n, 1), lambda b, i: (0, 0)),
                pl.BlockSpec((9, Cin, Cout), lambda b, i: (0, 0, 0)),
                pl.BlockSpec((1, Cout), lambda b, i: (0, 0)),
            ],
            out_specs=pl.BlockSpec((1, n, Cout), lambda b, i: (b, i, 0)),
            scratch_shapes=[pltpu.VMEM((n + 2 * W + 16, Cin), jnp.bfloat16)],
        ),
        compiler_params=pltpu.CompilerParams(
            dimension_semantics=("parallel", "parallel"),
            vmem_limit_bytes=vmem_limit),
    )(xf, xf, col_idx, w9, b2)
    return out.reshape(B, H, W, Cout)


# ----------------------------------------------------------------------------
# Kernel 2: Self_Attention (1x1 conv Q/K/V + softmax attention + residual)
# ----------------------------------------------------------------------------
def _attn_kernel(gamma_ref, xq_ref, xkv_ref, wq_ref, bq_ref, wk_ref, bk_ref,
                 wv_ref, bv_ref, o_ref, k_scr, v_scr, *, exp_dtype):
    # K/V are computed once per batch element (first query tile) and cached in
    # VMEM scratch; the query-tile grid axis is sequential ("arbitrary").
    @pl.when(pl.program_id(1) == 0)
    def _():
        xkv = xkv_ref[0]                                          # (N, C) bf16
        k = jnp.dot(xkv, wk_ref[...], preferred_element_type=jnp.float32)
        v = jnp.dot(xkv, wv_ref[...], preferred_element_type=jnp.float32)
        k_scr[...] = (k + bk_ref[...]).astype(jnp.bfloat16)
        v_scr[...] = (v + bv_ref[...]).astype(jnp.bfloat16)

    xq = xq_ref[0]                                                # (TQ, C) bf16
    q = jnp.dot(xq, wq_ref[...], preferred_element_type=jnp.float32) + bq_ref[...]
    q = q.astype(jnp.bfloat16)
    # energy = q @ k^T : bf16 operands on the MXU, f32 accumulation
    energy = jax.lax.dot_general(q, k_scr[...], (((1,), (1,)), ((), ())),
                                 preferred_element_type=jnp.float32)
    m = jnp.max(energy, axis=-1, keepdims=True)
    p = jnp.exp((energy - m).astype(exp_dtype))                   # EUP
    denom = jnp.sum(p.astype(jnp.float32), axis=-1, keepdims=True)
    attn = (p * pl.reciprocal(denom, approx=True)).astype(jnp.bfloat16)
    out = jnp.dot(attn, v_scr[...], preferred_element_type=jnp.float32)
    o_ref[0] = (gamma_ref[0] * out + xq.astype(jnp.float32)).astype(o_ref.dtype)


def self_attention(x_nhwc, ap, *, tile_q=None, out_dtype=jnp.bfloat16):
    """Self_Attention: Q/K/V 1x1 convs + softmax + gamma-scaled residual."""
    B, H, W, C = x_nhwc.shape
    N, C8 = H * W, C // 8
    x_seq = x_nhwc.astype(jnp.bfloat16).reshape(B, N, C)

    if tile_q is None:
        # full-sequence query tiles while the (TQ, N) energy slab stays small
        tile_q = N if N <= 1024 else next(
            (d for d in (1024, 512, 256, 128, 64, 32, 16, 8) if N % d == 0), N)
    assert N % tile_q == 0 and (tile_q % 8 == 0 or tile_q == N)
    nq = N // tile_q

    kernel = functools.partial(_attn_kernel, exp_dtype=_softmax_exp_dtype())
    out = pl.pallas_call(
        kernel,
        out_shape=jax.ShapeDtypeStruct((B, N, C), out_dtype),
        grid_spec=pltpu.PrefetchScalarGridSpec(
            num_scalar_prefetch=0,
            grid=(B, nq),
            in_specs=[
                pl.BlockSpec(memory_space=pltpu.MemorySpace.SMEM),     # gamma
                pl.BlockSpec((1, tile_q, C), lambda b, i: (b, i, 0)),  # queries
                pl.BlockSpec((1, N, C), lambda b, i: (b, 0, 0)),       # keys/vals
                pl.BlockSpec((C, C8), lambda b, i: (0, 0)),
                pl.BlockSpec((1, C8), lambda b, i: (0, 0)),
                pl.BlockSpec((C, C8), lambda b, i: (0, 0)),
                pl.BlockSpec((1, C8), lambda b, i: (0, 0)),
                pl.BlockSpec((C, C), lambda b, i: (0, 0)),
                pl.BlockSpec((1, C), lambda b, i: (0, 0)),
            ],
            out_specs=pl.BlockSpec((1, tile_q, C), lambda b, i: (b, i, 0)),
            scratch_shapes=[pltpu.VMEM((N, C8), jnp.bfloat16),   # cached K
                            pltpu.VMEM((N, C), jnp.bfloat16)],   # cached V
        ),
        compiler_params=pltpu.CompilerParams(
            # query-tile axis reuses the cached K/V -> must run sequentially.
            dimension_semantics=("parallel", "arbitrary"),
            vmem_limit_bytes=_vmem_limit_bytes()),
    )(ap["gamma"], x_seq, x_seq, ap["wq_t"], ap["bq"], ap["wk_t"], ap["bk"],
      ap["wv_t"], ap["bv"])
    return out.reshape(B, H, W, C)


# ----------------------------------------------------------------------------
# Parameter preparation (one-time weight re-layout) and ConvBlock forward
# ----------------------------------------------------------------------------
def prepare_convblock_params(params):
    """Fold the WS scale, transpose to kernel layouts, cast to bf16 — once."""
    def conv_taps(w_oihw):
        cout, cin = w_oihw.shape[0], w_oihw.shape[1]
        scale = (2.0 / (cin * 9)) ** 0.5
        w9 = (jnp.transpose(w_oihw, (2, 3, 1, 0)) * scale).reshape(9, cin, cout)
        return w9.astype(jnp.bfloat16)

    c = params["wv"].shape[0]
    c8 = params["wq"].shape[0]
    return {
        "w1_9": conv_taps(params["w1"]),
        "b1": params["b1"].reshape(1, -1).astype(jnp.float32),
        "w2_9": conv_taps(params["w2"]),
        "b2": params["b2"].reshape(1, -1).astype(jnp.float32),
        "wq_t": params["wq"].T.astype(jnp.bfloat16),
        "wk_t": params["wk"].T.astype(jnp.bfloat16),
        "wv_t": params["wv"].T.astype(jnp.bfloat16),
        "bq": params["bq"].reshape(1, c8).astype(jnp.float32),
        "bk": params["bk"].reshape(1, c8).astype(jnp.float32),
        "bv": params["bv"].reshape(1, c).astype(jnp.float32),
        "gamma": jnp.asarray(params["gamma"], jnp.float32).reshape(1),
    }


def conv_block_forward(x_nchw, prepared, step, use_pixelnorm=True, *,
                       tile_h=None, tile_q=None):
    """ConvBlock.forward(x, step) — NCHW in / NCHW out, like the nn.Module."""
    x = jnp.transpose(x_nchw, (0, 2, 3, 1))                     # NCHW -> NHWC
    x = ws_conv_leaky_pn(x, prepared["w1_9"], prepared["b1"], use_pixelnorm,
                         tile_h=tile_h, out_dtype=jnp.bfloat16)
    if step == 3:
        x = self_attention(x, prepared, tile_q=tile_q, out_dtype=jnp.bfloat16)
    x = ws_conv_leaky_pn(x, prepared["w2_9"], prepared["b2"], use_pixelnorm,
                         tile_h=tile_h, out_dtype=jnp.float32)
    return jnp.transpose(x, (0, 3, 1, 2))                       # NHWC -> NCHW


# ----------------------------------------------------------------------------
# Pure-JAX reference (mirrors the kernel's bf16 operand/storage rounding)
# ----------------------------------------------------------------------------
def conv_block_reference(x_nchw, params, step, use_pixelnorm=True):
    f32 = jnp.float32
    rd = lambda a: a.astype(jnp.bfloat16).astype(f32)
    leaky = lambda y: jnp.where(y >= 0.0, y, 0.2 * y)
    pn = lambda y: y * jax.lax.rsqrt(jnp.mean(y * y, axis=-1, keepdims=True) + 1e-8)

    def ws(x, w, b):
        cin = x.shape[-1]
        scale = (2.0 / (cin * 9)) ** 0.5
        wk = rd(jnp.transpose(w, (2, 3, 1, 0)) * scale)          # HWIO
        y = jax.lax.conv_general_dilated(
            rd(x), wk, (1, 1), "SAME",
            dimension_numbers=("NHWC", "HWIO", "NHWC"))
        return y + b

    y = jnp.transpose(x_nchw, (0, 2, 3, 1)).astype(f32)
    y = leaky(ws(y, params["w1"], params["b1"]))
    if use_pixelnorm:
        y = pn(y)
    y = rd(y)                                                    # stored as bf16
    if step == 3:
        B, H, W, C = y.shape
        xs = y.reshape(B, H * W, C)
        q = rd(rd(xs) @ rd(params["wq"].T) + params["bq"])
        k = rd(rd(xs) @ rd(params["wk"].T) + params["bk"])
        v = rd(rd(xs) @ rd(params["wv"].T) + params["bv"])
        e = jnp.einsum("bnc,bmc->bnm", q, k, precision="highest")
        a = jax.nn.softmax(e, axis=-1)
        o = jnp.einsum("bnm,bmc->bnc", rd(a), v, precision="highest")
        y = (params["gamma"] * o + xs).reshape(B, H, W, C)
        y = rd(y)                                                # stored as bf16
    y = leaky(ws(y, params["w2"], params["b2"]))
    if use_pixelnorm:
        y = pn(y)
    return jnp.transpose(y, (0, 3, 1, 2))


def init_convblock_params(key, in_ch, out_ch, attn_dim=256):
    ks = jax.random.split(key, 8)
    c8 = attn_dim // 8
    return {
        # WSConv2d: weight ~ N(0,1) (nn.init.normal_), bias = 0
        "w1": jax.random.normal(ks[0], (out_ch, in_ch, 3, 3), jnp.float32),
        "b1": jnp.zeros((out_ch,), jnp.float32),
        "w2": jax.random.normal(ks[1], (out_ch, out_ch, 3, 3), jnp.float32),
        "b2": jnp.zeros((out_ch,), jnp.float32),
        # Self_Attention(256): 1x1 convs as dense (out, in) weights
        "wq": 0.05 * jax.random.normal(ks[2], (c8, attn_dim), jnp.float32),
        "bq": 0.05 * jax.random.normal(ks[3], (c8,), jnp.float32),
        "wk": 0.05 * jax.random.normal(ks[4], (c8, attn_dim), jnp.float32),
        "bk": 0.05 * jax.random.normal(ks[5], (c8,), jnp.float32),
        "wv": 0.02 * jax.random.normal(ks[6], (attn_dim, attn_dim), jnp.float32),
        "bv": 0.02 * jax.random.normal(ks[7], (attn_dim,), jnp.float32),
        # torch inits gamma = 0 (attention would be an exact no-op); use 0.5 so
        # the attention kernel is actually exercised by the check below.
        "gamma": 0.5,
    }


if __name__ == "__main__":
    key = jax.random.PRNGKey(0)
    k_p1, k_x1, k_p2, k_x2 = jax.random.split(key, 4)
    TOL = dict(rtol=2e-2, atol=2e-2)

    # --- Test 1: step != 3 (conv -> leaky -> pn, twice); auto row tiling -----
    B, Cin, H, W, Cout = 2, 4, 16, 16, 8
    params1 = init_convblock_params(k_p1, Cin, Cout)
    prep1 = prepare_convblock_params(params1)
    x1 = jax.random.normal(k_x1, (B, Cin, H, W), jnp.float32)
    y1 = jax.block_until_ready(conv_block_forward(x1, prep1, step=2))
    r1 = conv_block_reference(x1, params1, step=2)
    assert y1.shape == (B, Cout, H, W)
    assert bool(jnp.allclose(y1, r1, **TOL)), "conv stage mismatch"

    # --- Test 2: step == 3 exercises Self_Attention (needs 256 channels) -----
    B2, Cin2, H2, W2, Cout2 = 2, 8, 8, 8, 256
    params2 = init_convblock_params(k_p2, Cin2, Cout2)
    prep2 = prepare_convblock_params(params2)
    x2 = jax.random.normal(k_x2, (B2, Cin2, H2, W2), jnp.float32)
    # tile_h=4 -> 2 row-tiles per image (halo path); tile_q=32 -> 2 query tiles
    # (exercises the cached-K/V path across query tiles).
    y2 = jax.block_until_ready(
        conv_block_forward(x2, prep2, step=3, tile_h=4, tile_q=32))
    r2 = conv_block_reference(x2, params2, step=3)
    assert y2.shape == (B2, Cout2, H2, W2)
    assert bool(jnp.allclose(y2, r2, **TOL)), "attention path mismatch"

    print("KERNEL_OK")
</pallas_src>

<mosaic_0001>
module attributes {stable_mosaic.version = 11 : i64} {
  func.func @_ws_conv_kernel(%arg0: i32, %arg1: i32, %arg2: memref<1x256x4xbf16, #tpu.memory_space<vmem>>, %arg3: memref<1x32x4xbf16, #tpu.memory_space<vmem>>, %arg4: memref<256x1xi32, #tpu.memory_space<vmem>>, %arg5: memref<9x4x8xbf16, #tpu.memory_space<vmem>>, %arg6: memref<1x8xf32, #tpu.memory_space<vmem>>, %arg7: memref<1x256x8xbf16, #tpu.memory_space<vmem>>, %arg8: memref<304x4xbf16, #tpu.memory_space<vmem>>) attributes {dimension_semantics = [#tpu.dimension_semantics<parallel>, #tpu.dimension_semantics<parallel>], iteration_bounds = array<i64: 2, 1>, scalar_prefetch = 0 : i64, scratch_operands = 1 : i64, tpu.core_type = #tpu.core_type<tc>, window_params = [{transform_indices = @transform_0, window_bounds = array<i64: 1, 256, 4>}, {transform_indices = @transform_1, window_bounds = array<i64: 1, 32, 4>}, {pipeline_mode = #tpu.pipeline_mode<synchronous>, transform_indices = @transform_2, window_bounds = array<i64: 256, 1>}, {pipeline_mode = #tpu.pipeline_mode<synchronous>, transform_indices = @transform_3, window_bounds = array<i64: 9, 4, 8>}, {pipeline_mode = #tpu.pipeline_mode<synchronous>, transform_indices = @transform_4, window_bounds = array<i64: 1, 8>}, {transform_indices = @transform_5, window_bounds = array<i64: 1, 256, 8>}]} {
    %cst = arith.constant 0.000000e+00 : bf16
    %0 = vector.broadcast %cst : bf16 to vector<8x4xbf16>
    %c0 = arith.constant 0 : index
    %c0_0 = arith.constant 0 : index
    %1 = vector.load %arg8[%c0, %c0_0] : memref<304x4xbf16, #tpu.memory_space<vmem>>, vector<8x4xbf16>
    tpu.vector_store %arg8[%c0, %c0_0], %0 {strides = array<i32>} : memref<304x4xbf16, #tpu.memory_space<vmem>>, vector<8x4xbf16>,
    %c0_1 = arith.constant 0 : index
    %c0_2 = arith.constant 0 : index
    %c0_3 = arith.constant 0 : index
    %2 = vector.load %arg2[%c0_1, %c0_2, %c0_3] : memref<1x256x4xbf16, #tpu.memory_space<vmem>>, vector<1x256x4xbf16>
    %3 = vector.shape_cast %2 : vector<1x256x4xbf16> to vector<256x4xbf16>
    %c8 = arith.constant 8 : index
    %c0_4 = arith.constant 0 : index
    %4 = vector.load %arg8[%c8, %c0_4] : memref<304x4xbf16, #tpu.memory_space<vmem>>, vector<256x4xbf16>
    tpu.vector_store %arg8[%c8, %c0_4], %3 {strides = array<i32>} : memref<304x4xbf16, #tpu.memory_space<vmem>>, vector<256x4xbf16>,
    %c0_5 = arith.constant 0 : index
    %c0_6 = arith.constant 0 : index
    %c0_7 = arith.constant 0 : index
    %5 = vector.load %arg3[%c0_5, %c0_6, %c0_7] : memref<1x32x4xbf16, #tpu.memory_space<vmem>>, vector<1x32x4xbf16>
    %6 = vector.shape_cast %5 : vector<1x32x4xbf16> to vector<32x4xbf16>
    %c264 = arith.constant 264 : index
    %c0_8 = arith.constant 0 : index
    %7 = vector.load %arg8[%c264, %c0_8] : memref<304x4xbf16, #tpu.memory_space<vmem>>, vector<32x4xbf16>
    tpu.vector_store %arg8[%c264, %c0_8], %6 {strides = array<i32>} : memref<304x4xbf16, #tpu.memory_space<vmem>>, vector<32x4xbf16>,
    %c296 = arith.constant 296 : index
    %c0_9 = arith.constant 0 : index
    %8 = vector.load %arg8[%c296, %c0_9] : memref<304x4xbf16, #tpu.memory_space<vmem>>, vector<8x4xbf16>
    tpu.vector_store %arg8[%c296, %c0_9], %0 {strides = array<i32>} : memref<304x4xbf16, #tpu.memory_space<vmem>>, vector<8x4xbf16>,
    %c0_10 = arith.constant 0 : index
    %c0_11 = arith.constant 0 : index
    %9 = vector.load %arg4[%c0_10, %c0_11] : memref<256x1xi32, #tpu.memory_space<vmem>>, vector<256x1xi32>
    %c0_i32 = arith.constant 0 : i32
    %10 = vector.broadcast %c0_i32 : i32 to vector<256x1xi32>
    %11 = arith.cmpi eq, %9, %10 : vector<256x1xi32>
    %c15_i32 = arith.constant 15 : i32
    %12 = vector.broadcast %c15_i32 : i32 to vector<256x1xi32>
    %13 = arith.cmpi eq, %9, %12 : vector<256x1xi32>
    %cst_12 = arith.constant 0.000000e+00 : f32
    %14 = vector.broadcast %cst_12 : f32 to vector<256x8xf32>
    %c7 = arith.constant 7 : index
    %c0_13 = arith.constant 0 : index
    %15 = vector.load %arg8[%c7, %c0_13] : memref<304x4xbf16, #tpu.memory_space<vmem>>, vector<256x4xbf16>
    %cst_14 = arith.constant 0.000000e+00 : f32
    %16 = arith.truncf %cst_14 : f32 to bf16
    %17 = vector.shape_cast %11 : vector<256x1xi1> to vector<256x1xi1>
    %18 = vector.broadcast %17 : vector<256x1xi1> to vector<256x4xi1>
    %19 = vector.broadcast %16 : bf16 to vector<256x4xbf16>
    %20 = arith.select %18, %19, %15 : vector<256x4xi1>, vector<256x4xbf16>
    %c0_15 = arith.constant 0 : index
    %c0_16 = arith.constant 0 : index
    %c0_17 = arith.constant 0 : index
    %21 = vector.load %arg5[%c0_15, %c0_16, %c0_17] : memref<9x4x8xbf16, #tpu.memory_space<vmem>>, vector<1x4x8xbf16>
    %22 = vector.shape_cast %21 : vector<1x4x8xbf16> to vector<4x8xbf16>
    %cst_18 = arith.constant dense<0.000000e+00> : vector<256x8xf32>
    %23 = tpu.matmul %20, %22, %cst_18 {dimension_numbers = #tpu.dot_dimension_numbers<[1], [0], [0], [1], [0, 0, 1, 1], [], []>} : vector<256x4xbf16>, vector<4x8xbf16>, vector<256x8xf32> -> vector<256x8xf32>
    %24 = arith.addf %14, %23 : vector<256x8xf32>
    %c8_19 = arith.constant 8 : index
    %c0_20 = arith.constant 0 : index
    %25 = vector.load %arg8[%c8_19, %c0_20] : memref<304x4xbf16, #tpu.memory_space<vmem>>, vector<256x4xbf16>
    %c1 = arith.constant 1 : index
    %c0_21 = arith.constant 0 : index
    %c0_22 = arith.constant 0 : index
    %26 = vector.load %arg5[%c1, %c0_21, %c0_22] : memref<9x4x8xbf16, #tpu.memory_space<vmem>>, vector<1x4x8xbf16>
    %27 = vector.shape_cast %26 : vector<1x4x8xbf16> to vector<4x8xbf16>
    %cst_23 = arith.constant dense<0.000000e+00> : vector<256x8xf32>
    %28 = tpu.matmul %25, %27, %cst_23 {dimension_numbers = #tpu.dot_dimension_numbers<[1], [0], [0], [1], [0, 0, 1, 1], [], []>} : vector<256x4xbf16>, vector<4x8xbf16>, vector<256x8xf32> -> vector<256x8xf32>
    %29 = arith.addf %24, %28 : vector<256x8xf32>
    %c9 = arith.constant 9 : index
    %c0_24 = arith.constant 0 : index
    %30 = vector.load %arg8[%c9, %c0_24] : memref<304x4xbf16, #tpu.memory_space<vmem>>, vector<256x4xbf16>
    %cst_25 = arith.constant 0.000000e+00 : f32
    %31 = arith.truncf %cst_25 : f32 to bf16
    %32 = vector.shape_cast %13 : vector<256x1xi1> to vector<256x1xi1>
    %33 = vector.broadcast %32 : vector<256x1xi1> to vector<256x4xi1>
    %34 = vector.broadcast %31 : bf16 to vector<256x4xbf16>
    %35 = arith.select %33, %34, %30 : vector<256x4xi1>, vector<256x4xbf16>
    %c2 = arith.constant 2 : index
    %c0_26 = arith.constant 0 : index
    %c0_27 = arith.constant 0 : index
    %36 = vector.load %arg5[%c2, %c0_26, %c0_27] : memref<9x4x8xbf16, #tpu.memory_space<vmem>>, vector<1x4x8xbf16>
    %37 = vector.shape_cast %36 : vector<1x4x8xbf16> to vector<4x8xbf16>
    %cst_28 = arith.constant dense<0.000000e+00> : vector<256x8xf32>
    %38 = tpu.matmul %35, %37, %cst_28 {dimension_numbers = #tpu.dot_dimension_numbers<[1], [0], [0], [1], [0, 0, 1, 1], [], []>} : vector<256x4xbf16>, vector<4x8xbf16>, vector<256x8xf32> -> vector<256x8xf32>
    %39 = arith.addf %29, %38 : vector<256x8xf32>
    %c23 = arith.constant 23 : index
    %c0_29 = arith.constant 0 : index
    %40 = vector.load %arg8[%c23, %c0_29] : memref<304x4xbf16, #tpu.memory_space<vmem>>, vector<256x4xbf16>
    %cst_30 = arith.constant 0.000000e+00 : f32
    %41 = arith.truncf %cst_30 : f32 to bf16
    %42 = vector.shape_cast %11 : vector<256x1xi1> to vector<256x1xi1>
    %43 = vector.broadcast %42 : vector<256x1xi1> to vector<256x4xi1>
    %44 = vector.broadcast %41 : bf16 to vector<256x4xbf16>
    %45 = arith.select %43, %44, %40 : vector<256x4xi1>, vector<256x4xbf16>
    %c3 = arith.constant 3 : index
    %c0_31 = arith.constant 0 : index
    %c0_32 = arith.constant 0 : index
    %46 = vector.load %arg5[%c3, %c0_31, %c0_32] : memref<9x4x8xbf16, #tpu.memory_space<vmem>>, vector<1x4x8xbf16>
    %47 = vector.shape_cast %46 : vector<1x4x8xbf16> to vector<4x8xbf16>
    %cst_33 = arith.constant dense<0.000000e+00> : vector<256x8xf32>
    %48 = tpu.matmul %45, %47, %cst_33 {dimension_numbers = #tpu.dot_dimension_numbers<[1], [0], [0], [1], [0, 0, 1, 1], [], []>} : vector<256x4xbf16>, vector<4x8xbf16>, vector<256x8xf32> -> vector<256x8xf32>
    %49 = arith.addf %39, %48 : vector<256x8xf32>
    %c24 = arith.constant 24 : index
    %c0_34 = arith.constant 0 : index
    %50 = vector.load %arg8[%c24, %c0_34] : memref<304x4xbf16, #tpu.memory_space<vmem>>, vector<256x4xbf16>
    %c4 = arith.constant 4 : index
    %c0_35 = arith.constant 0 : index
    %c0_36 = arith.constant 0 : index
    %51 = vector.load %arg5[%c4, %c0_35, %c0_36] : memref<9x4x8xbf16, #tpu.memory_space<vmem>>, vector<1x4x8xbf16>
    %52 = vector.shape_cast %51 : vector<1x4x8xbf16> to vector<4x8xbf16>
    %cst_37 = arith.constant dense<0.000000e+00> : vector<256x8xf32>
    %53 = tpu.matmul %50, %52, %cst_37 {dimension_numbers = #tpu.dot_dimension_numbers<[1], [0], [0], [1], [0, 0, 1, 1], [], []>} : vector<256x4xbf16>, vector<4x8xbf16>, vector<256x8xf32> -> vector<256x8xf32>
    %54 = arith.addf %49, %53 : vector<256x8xf32>
    %c25 = arith.constant 25 : index
    %c0_38 = arith.constant 0 : index
    %55 = vector.load %arg8[%c25, %c0_38] : memref<304x4xbf16, #tpu.memory_space<vmem>>, vector<256x4xbf16>
    %cst_39 = arith.constant 0.000000e+00 : f32
    %56 = arith.truncf %cst_39 : f32 to bf16
    %57 = vector.shape_cast %13 : vector<256x1xi1> to vector<256x1xi1>
    %58 = vector.broadcast %57 : vector<256x1xi1> to vector<256x4xi1>
    %59 = vector.broadcast %56 : bf16 to vector<256x4xbf16>
    %60 = arith.select %58, %59, %55 : vector<256x4xi1>, vector<256x4xbf16>
    %c5 = arith.constant 5 : index
    %c0_40 = arith.constant 0 : index
    %c0_41 = arith.constant 0 : index
    %61 = vector.load %arg5[%c5, %c0_40, %c0_41] : memref<9x4x8xbf16, #tpu.memory_space<vmem>>, vector<1x4x8xbf16>
    %62 = vector.shape_cast %61 : vector<1x4x8xbf16> to vector<4x8xbf16>
    %cst_42 = arith.constant dense<0.000000e+00> : vector<256x8xf32>
    %63 = tpu.matmul %60, %62, %cst_42 {dimension_numbers = #tpu.dot_dimension_numbers<[1], [0], [0], [1], [0, 0, 1, 1], [], []>} : vector<256x4xbf16>, vector<4x8xbf16>, vector<256x8xf32> -> vector<256x8xf32>
    %64 = arith.addf %54, %63 : vector<256x8xf32>
    %c39 = arith.constant 39 : index
    %c0_43 = arith.constant 0 : index
    %65 = vector.load %arg8[%c39, %c0_43] : memref<304x4xbf16, #tpu.memory_space<vmem>>, vector<256x4xbf16>
    %cst_44 = arith.constant 0.000000e+00 : f32
    %66 = arith.truncf %cst_44 : f32 to bf16
    %67 = vector.shape_cast %11 : vector<256x1xi1> to vector<256x1xi1>
    %68 = vector.broadcast %67 : vector<256x1xi1> to vector<256x4xi1>
    %69 = vector.broadcast %66 : bf16 to vector<256x4xbf16>
    %70 = arith.select %68, %69, %65 : vector<256x4xi1>, vector<256x4xbf16>
    %c6 = arith.constant 6 : index
    %c0_45 = arith.constant 0 : index
    %c0_46 = arith.constant 0 : index
    %71 = vector.load %arg5[%c6, %c0_45, %c0_46] : memref<9x4x8xbf16, #tpu.memory_space<vmem>>, vector<1x4x8xbf16>
    %72 = vector.shape_cast %71 : vector<1x4x8xbf16> to vector<4x8xbf16>
    %cst_47 = arith.constant dense<0.000000e+00> : vector<256x8xf32>
    %73 = tpu.matmul %70, %72, %cst_47 {dimension_numbers = #tpu.dot_dimension_numbers<[1], [0], [0], [1], [0, 0, 1, 1], [], []>} : vector<256x4xbf16>, vector<4x8xbf16>, vector<256x8xf32> -> vector<256x8xf32>
    %74 = arith.addf %64, %73 : vector<256x8xf32>
    %c40 = arith.constant 40 : index
    %c0_48 = arith.constant 0 : index
    %75 = vector.load %arg8[%c40, %c0_48] : memref<304x4xbf16, #tpu.memory_space<vmem>>, vector<256x4xbf16>
    %c7_49 = arith.constant 7 : index
    %c0_50 = arith.constant 0 : index
    %c0_51 = arith.constant 0 : index
    %76 = vector.load %arg5[%c7_49, %c0_50, %c0_51] : memref<9x4x8xbf16, #tpu.memory_space<vmem>>, vector<1x4x8xbf16>
    %77 = vector.shape_cast %76 : vector<1x4x8xbf16> to vector<4x8xbf16>
    %cst_52 = arith.constant dense<0.000000e+00> : vector<256x8xf32>
    %78 = tpu.matmul %75, %77, %cst_52 {dimension_numbers = #tpu.dot_dimension_numbers<[1], [0], [0], [1], [0, 0, 1, 1], [], []>} : vector<256x4xbf16>, vector<4x8xbf16>, vector<256x8xf32> -> vector<256x8xf32>
    %79 = arith.addf %74, %78 : vector<256x8xf32>
    %c41 = arith.constant 41 : index
    %c0_53 = arith.constant 0 : index
    %80 = vector.load %arg8[%c41, %c0_53] : memref<304x4xbf16, #tpu.memory_space<vmem>>, vector<256x4xbf16>
    %cst_54 = arith.constant 0.000000e+00 : f32
    %81 = arith.truncf %cst_54 : f32 to bf16
    %82 = vector.shape_cast %13 : vector<256x1xi1> to vector<256x1xi1>
    %83 = vector.broadcast %82 : vector<256x1xi1> to vector<256x4xi1>
    %84 = vector.broadcast %81 : bf16 to vector<256x4xbf16>
    %85 = arith.select %83, %84, %80 : vector<256x4xi1>, vector<256x4xbf16>
    %c8_55 = arith.constant 8 : index
    %c0_56 = arith.constant 0 : index
    %c0_57 = arith.constant 0 : index
    %86 = vector.load %arg5[%c8_55, %c0_56, %c0_57] : memref<9x4x8xbf16, #tpu.memory_space<vmem>>, vector<1x4x8xbf16>
    %87 = vector.shape_cast %86 : vector<1x4x8xbf16> to vector<4x8xbf16>
    %cst_58 = arith.constant dense<0.000000e+00> : vector<256x8xf32>
    %88 = tpu.matmul %85, %87, %cst_58 {dimension_numbers = #tpu.dot_dimension_numbers<[1], [0], [0], [1], [0, 0, 1, 1], [], []>} : vector<256x4xbf16>, vector<4x8xbf16>, vector<256x8xf32> -> vector<256x8xf32>
    %89 = arith.addf %79, %88 : vector<256x8xf32>
    %c0_59 = arith.constant 0 : index
    %c0_60 = arith.constant 0 : index
    %90 = vector.load %arg6[%c0_59, %c0_60] : memref<1x8xf32, #tpu.memory_space<vmem>>, vector<1x8xf32>
    %91 = vector.broadcast %90 : vector<1x8xf32> to vector<256x8xf32>
    %92 = arith.addf %89, %91 : vector<256x8xf32>
    %cst_61 = arith.constant 0.000000e+00 : f32
    %93 = vector.broadcast %cst_61 : f32 to vector<256x8xf32>
    %94 = arith.cmpf oge, %92, %93 : vector<256x8xf32>
    %cst_62 = arith.constant 2.000000e-01 : f32
    %95 = vector.broadcast %cst_62 : f32 to vector<256x8xf32>
    %96 = arith.mulf %95, %92 : vector<256x8xf32>
    %97 = arith.select %94, %92, %96 : vector<256x8xi1>, vector<256x8xf32>
    %98 = arith.mulf %97, %97 : vector<256x8xf32>
    %cst_63 = arith.constant dense<0.000000e+00> : vector<256xf32>
    %99 = vector.multi_reduction <add>, %98, %cst_63 [1] : vector<256x8xf32> to vector<256xf32>
    %100 = vector.shape_cast %99 : vector<256xf32> to vector<256x1xf32>
    %cst_64 = arith.constant 8.000000e+00 : f32
    %101 = vector.broadcast %cst_64 : f32 to vector<256x1xf32>
    %102 = arith.divf %100, %101 : vector<256x1xf32>
    %cst_65 = arith.constant 9.99999993E-9 : f32
    %103 = vector.broadcast %cst_65 : f32 to vector<256x1xf32>
    %104 = arith.addf %102, %103 : vector<256x1xf32>
    %105 = math.rsqrt %104 : vector<256x1xf32>
    %106 = vector.broadcast %105 : vector<256x1xf32> to vector<256x8xf32>
    %107 = arith.mulf %97, %106 : vector<256x8xf32>
    %108 = arith.truncf %107 : vector<256x8xf32> to vector<256x8xbf16>
    %c0_66 = arith.constant 0 : index
    %c0_67 = arith.constant 0 : index
    %c0_68 = arith.constant 0 : index
    %109 = vector.load %arg7[%c0_66, %c0_67, %c0_68] : memref<1x256x8xbf16, #tpu.memory_space<vmem>>, vector<1x256x8xbf16>
    %110 = vector.shape_cast %109 : vector<1x256x8xbf16> to vector<256x8xbf16>
    %111 = vector.shape_cast %108 : vector<256x8xbf16> to vector<1x256x8xbf16>
    tpu.vector_store %arg7[%c0_66, %c0_67, %c0_68], %111 {strides = array<i32>} : memref<1x256x8xbf16, #tpu.memory_space<vmem>>, vector<1x256x8xbf16>,
    return
  }
  func.func @transform_0(%arg0: i32, %arg1: i32) -> (i32, i32, i32) {
    %c0_i32 = arith.constant 0 : i32
    %c0_i32_0 = arith.constant 0 : i32
    return %arg0, %arg1, %c0_i32 : i32, i32, i32
  }
  func.func @transform_1(%arg0: i32, %arg1: i32) -> (i32, i32, i32) {
    %c1_i32 = arith.constant 1 : i32
    %0 = arith.addi %arg1, %c1_i32 : i32
    %c8_i32 = arith.constant 8 : i32
    %1 = arith.muli %0, %c8_i32 : i32
    %c0_i32 = arith.constant 0 : i32
    %c0_i32_0 = arith.constant 0 : i32
    return %arg0, %1, %c0_i32 : i32, i32, i32
  }
  func.func @transform_2(%arg0: i32, %arg1: i32) -> (i32, i32) {
    %c0_i32 = arith.constant 0 : i32
    %c0_i32_0 = arith.constant 0 : i32
    %c0_i32_1 = arith.constant 0 : i32
    return %c0_i32, %c0_i32_0 : i32, i32
  }
  func.func @transform_3(%arg0: i32, %arg1: i32) -> (i32, i32, i32) {
    %c0_i32 = arith.constant 0 : i32
    %c0_i32_0 = arith.constant 0 : i32
    %c0_i32_1 = arith.constant 0 : i32
    %c0_i32_2 = arith.constant 0 : i32
    return %c0_i32, %c0_i32_0, %c0_i32_1 : i32, i32, i32
  }
  func.func @transform_4(%arg0: i32, %arg1: i32) -> (i32, i32) {
    %c0_i32 = arith.constant 0 : i32
    %c0_i32_0 = arith.constant 0 : i32
    %c0_i32_1 = arith.constant 0 : i32
    return %c0_i32, %c0_i32_0 : i32, i32
  }
  func.func @transform_5(%arg0: i32, %arg1: i32) -> (i32, i32, i32) {
    %c0_i32 = arith.constant 0 : i32
    %c0_i32_0 = arith.constant 0 : i32
    return %arg0, %arg1, %c0_i32 : i32, i32, i32
  }
}

</mosaic_0001>

<llo_original>
// kernel: tpu_custom_call.1
$region0: #{tpu_custom_call.1}
  #allocation0 [shape = 'u32[]', space=smem, size = 0x4, offset = 0x4, fixed_abs, tag = 'smem constant byte address 0x4 - core index']
  #allocation1 [shape = 'u32[72,128]{1,0:T(1,128)}', space=vmem, size = 0x9000, scoped, tag = 'internal scratch']
  #allocation2 [shape = 'bf16[304,4]{1,0:T(8,128)(2,1)}', space=vmem, size = 0x13000, scoped, tag = 'scratch operand']
  %s0 = inlined_call_operand.vmem [shape: bf16[2,288,4], index: 0, kind: input, shape index: {}]
  %s1 = inlined_call_operand.vmem [shape: bf16[2,288,4], index: 1, kind: input, shape index: {}]
  %s2 = inlined_call_operand.vmem [shape: s32[256,1], index: 2, kind: input, shape index: {}]
  %s3 = inlined_call_operand.vmem [shape: bf16[9,4,8], index: 3, kind: input, shape index: {}]
  %s4 = inlined_call_operand.vmem [shape: f32[1,8], index: 4, kind: input, shape index: {}]
  %s5 = inlined_call_operand.vmem [shape: bf16[2,256,8], index: 5, kind: output, shape index: {}]
  %s6 = sld [smem:[#allocation0]]
  $region53: #{tpu_custom_call.1} parent=0
    _
  %s8 = ssub.s32 1, %s6
  %s9 = scalar_select 0, %s8, %s6
  loop: start=0, step=1, limit=4
  $region2: #{tpu_custom_call.1} parent=0 // loop_pre_header
    _
  $region3: #{tpu_custom_call.1} parent=0 // loop_header
    %s11 = sphi 0, %s15
    %p12 = scmp.ge.s32.totalorder %s11, 4
    %s18 = sphi 0, %s30
    %s19 = sphi 0, %s26
    %s20 = sphi 0, %s18
    %s21 = sphi 0, %s19
    %s22 = sphi 0, %s20
    %s23 = sphi 0, %s21
    %s35 = sphi 0, %s37
    %s38 = sphi 0, %s35
    %s39 = sphi 0, %s38
    %s55 = sphi 0, %s39
    %s67 = sphi 0, %s69
    %s70 = sphi 0, %s67
    %s71 = sphi 0, %s70
    %s87 = sphi 0, %s71
    %s91 = sphi 0, %s91
    %s93 = sphi 0, %s91
    %s94 = sphi 0, %s93
    %s108 = sphi 0, %s94
    %s112 = sphi 0, %s112
    %s114 = sphi 0, %s112
    %s115 = sphi 0, %s114
    %s129 = sphi 0, %s115
    %s133 = sphi 0, %s133
    %s135 = sphi 0, %s133
    %s136 = sphi 0, %s135
    %s150 = sphi 0, %s136
    %s158 = sphi 0, %s160
    %s161 = sphi 0, %s158
    %s162 = sphi 0, %s161
    %s178 = sphi 0, %s162
  $region4: #{tpu_custom_call.1} parent=0 // loop_header_branch
    %14 = sbr.rel (%p12) target = $region8
  $region5: #{tpu_custom_call.1} parent=0 // loop_body
    %s16 = ssub.s32 %s11, 1
    %s17 = ssub.s32 %s11, 2
    %s24 = sadd.s32 1, %s19
    %p25 = scmp.ge.s32.totalorder %s24, 1
    %s26 = scalar_select %p25, 0, %s24
    %s27 = sadd.s32 1, %s18
    %s28 = scalar_select %p25, %s27, %s18
    %p29 = scmp.ge.s32.totalorder %s28, 2
    %s30 = scalar_select %p29, 0, %s28
    %s31 = ssub.s32 %s18, %s30
    %s32 = ssub.s32 %s19, %s26
    %s33 = sor.u32 %s31, %s32
    %p34 = scmp.eq.s32.totalorder %s33, 0
    %s36 = sadd.s32 %s35, 1
    %s37 = scalar_select %p34, %s35, %s36
    %p40 = pneg %p34
    %p41 = scmp.eq.s32.totalorder %s11, 1
    %p42 = por %p40, %p41
    %p43 = scmp.ne.s32.totalorder %s35, %s38
    %p44 = scmp.eq.s32.totalorder %s11, 0
    %p45 = por %p43, %p44
    %p46 = scmp.ne.s32.totalorder %s35, %s38
    %p47 = scmp.eq.s32.totalorder %s16, 1
    %p48 = por %p46, %p47
    %p49 = scmp.ne.s32.totalorder %s38, %s39
    %p50 = scmp.eq.s32.totalorder %s16, 0
    %p51 = por %p49, %p50
    %p52 = scmp.ne.s32.totalorder %s38, %s39
    %p53 = scmp.eq.s32.totalorder %s17, 1
    %p54 = por %p52, %p53
    %p56 = scmp.ne.s32.totalorder %s39, %s55
    %p57 = scmp.eq.s32.totalorder %s17, 0
    %p58 = por %p56, %p57
    %s59 = sadd.s32 %s19, 1
    %s60 = smul.u32 %s59, 8
    %s61 = sadd.s32 %s26, 1
    %s62 = smul.u32 %s61, 8
    %s63 = ssub.s32 %s18, %s30
    %s64 = ssub.s32 %s60, %s62
    %s65 = sor.u32 %s63, %s64
    %p66 = scmp.eq.s32.totalorder %s65, 0
    %s68 = sadd.s32 %s67, 1
    %s69 = scalar_select %p66, %s67, %s68
    %p72 = pneg %p66
    %p73 = scmp.eq.s32.totalorder %s11, 1
    %p74 = por %p72, %p73
    %p75 = scmp.ne.s32.totalorder %s67, %s70
    %p76 = scmp.eq.s32.totalorder %s11, 0
    %p77 = por %p75, %p76
    %p78 = scmp.ne.s32.totalorder %s67, %s70
    %p79 = scmp.eq.s32.totalorder %s16, 1
    %p80 = por %p78, %p79
    %p81 = scmp.ne.s32.totalorder %s70, %s71
    %p82 = scmp.eq.s32.totalorder %s16, 0
    %p83 = por %p81, %p82
    %p84 = scmp.ne.s32.totalorder %s70, %s71
    %p85 = scmp.eq.s32.totalorder %s17, 1
    %p86 = por %p84, %p85
    %p88 = scmp.ne.s32.totalorder %s71, %s87
    %p89 = scmp.eq.s32.totalorder %s17, 0
    %p90 = por %p88, %p89
    %s92 = sadd.s32 %s91, 1
    %p95 = scmp.eq.s32.totalorder %s11, 1
    %p96 = scmp.ne.s32.totalorder %s91, %s93
    %p97 = scmp.eq.s32.totalorder %s11, 0
    %p98 = por %p96, %p97
    %p99 = scmp.ne.s32.totalorder %s91, %s93
    %p100 = scmp.eq.s32.totalorder %s16, 1
    %p101 = por %p99, %p100
    %p102 = scmp.ne.s32.totalorder %s93, %s94
    %p103 = scmp.eq.s32.totalorder %s16, 0
    %p104 = por %p102, %p103
    %p105 = scmp.ne.s32.totalorder %s93, %s94
    %p106 = scmp.eq.s32.totalorder %s17, 1
    %p107 = por %p105, %p106
    %p109 = scmp.ne.s32.totalorder %s94, %s108
    %p110 = scmp.eq.s32.totalorder %s17, 0
    %p111 = por %p109, %p110
    %s113 = sadd.s32 %s112, 1
    %p116 = scmp.eq.s32.totalorder %s11, 1
    %p117 = scmp.ne.s32.totalorder %s112, %s114
    %p118 = scmp.eq.s32.totalorder %s11, 0
    %p119 = por %p117, %p118
    %p120 = scmp.ne.s32.totalorder %s112, %s114
    %p121 = scmp.eq.s32.totalorder %s16, 1
    %p122 = por %p120, %p121
    %p123 = scmp.ne.s32.totalorder %s114, %s115
    %p124 = scmp.eq.s32.totalorder %s16, 0
    %p125 = por %p123, %p124
    %p126 = scmp.ne.s32.totalorder %s114, %s115
    %p127 = scmp.eq.s32.totalorder %s17, 1
    %p128 = por %p126, %p127
    %p130 = scmp.ne.s32.totalorder %s115, %s129
    %p131 = scmp.eq.s32.totalorder %s17, 0
    %p132 = por %p130, %p131
    %s134 = sadd.s32 %s133, 1
    %p137 = scmp.eq.s32.totalorder %s11, 1
    %p138 = scmp.ne.s32.totalorder %s133, %s135
    %p139 = scmp.eq.s32.totalorder %s11, 0
    %p140 = por %p138, %p139
    %p141 = scmp.ne.s32.totalorder %s133, %s135
    %p142 = scmp.eq.s32.totalorder %s16, 1
    %p143 = por %p141, %p142
    %p144 = scmp.ne.s32.totalorder %s135, %s136
    %p145 = scmp.eq.s32.totalorder %s16, 0
    %p146 = por %p144, %p145
    %p147 = scmp.ne.s32.totalorder %s135, %s136
    %p148 = scmp.eq.s32.totalorder %s17, 1
    %p149 = por %p147, %p148
    %p151 = scmp.ne.s32.totalorder %s136, %s150
    %p152 = scmp.eq.s32.totalorder %s17, 0
    %p153 = por %p151, %p152
    %s154 = ssub.s32 %s18, %s30
    %s155 = ssub.s32 %s19, %s26
    %s156 = sor.u32 %s154, %s155
    %p157 = scmp.eq.s32.totalorder %s156, 0
    %s159 = sadd.s32 %s158, 1
    %s160 = scalar_select %p157, %s158, %s159
    %p163 = pneg %p157
    %p164 = scmp.eq.s32.totalorder %s11, 1
    %p165 = por %p163, %p164
    %p166 = scmp.ne.s32.totalorder %s158, %s161
    %p167 = scmp.eq.s32.totalorder %s11, 0
    %p168 = por %p166, %p167
    %p169 = scmp.ne.s32.totalorder %s158, %s161
    %p170 = scmp.eq.s32.totalorder %s16, 1
    %p171 = por %p169, %p170
    %p172 = scmp.ne.s32.totalorder %s161, %s162
    %p173 = scmp.eq.s32.totalorder %s16, 0
    %p174 = por %p172, %p173
    %p175 = scmp.ne.s32.totalorder %s161, %s162
    %p176 = scmp.eq.s32.totalorder %s17, 1
    %p177 = por %p175, %p176
    %p179 = scmp.ne.s32.totalorder %s162, %s178
    %p180 = scmp.eq.s32.totalorder %s17, 0
    %p181 = por %p179, %p180
    %p182 = scmp.le.s32.totalorder 1, %s11
    %p183 = scmp.lt.s32.totalorder %s11, 3
    %p184 = pnand %p182, %p183
    %p185 = pneg %p184
    // Predicated region
    $region9: #{tpu_custom_call.1} parent=5 // pred_check
      _
    $region10: #{tpu_custom_call.1} parent=5 // pred_check_branch
      %187 = sbr.rel (%p184) target = $region12
    $region11: #{tpu_custom_call.1} parent=5 // pred_region
      %s188 = ssub.s32 %s11, 1
      // Predicated region
      $region13: #{tpu_custom_call.1} parent=11 // pred_check
        %p189 = pneg %p104
      $region14: #{tpu_custom_call.1} parent=11 // pred_check_branch
        %191 = sbr.rel (%p189) target = $region16
      $region15: #{tpu_custom_call.1} parent=11 // pred_region
        _
      $region16: #{tpu_custom_call.1} parent=11 // pred_fallthru
        _
      // Predicated region
      $region17: #{tpu_custom_call.1} parent=11 // pred_check
        %p192 = pneg %p125
      $region18: #{tpu_custom_call.1} parent=11 // pred_check_branch
        %194 = sbr.rel (%p192) target = $region20
      $region19: #{tpu_custom_call.1} parent=11 // pred_region
        _
      $region20: #{tpu_custom_call.1} parent=11 // pred_fallthru
        _
      // Predicated region
      $region21: #{tpu_custom_call.1} parent=11 // pred_check
        %p195 = pneg %p146
      $region22: #{tpu_custom_call.1} parent=11 // pred_check_branch
        %197 = sbr.rel (%p195) target = $region24
      $region23: #{tpu_custom_call.1} parent=11 // pred_region
        _
      $region24: #{tpu_custom_call.1} parent=11 // pred_fallthru
        _
    $region12: #{tpu_custom_call.1} parent=5 // pred_fallthru
      _
    %p198 = scmp.lt.s32.totalorder %s11, 2
    // Predicated region
    $region25: #{tpu_custom_call.1} parent=5 // pred_check
      %p199 = pneg %p198
    $region26: #{tpu_custom_call.1} parent=5 // pred_check_branch
      %201 = sbr.rel (%p199) target = $region28
    $region27: #{tpu_custom_call.1} parent=5 // pred_region
      // Predicated region
      $region29: #{tpu_custom_call.1} parent=27 // pred_check
        %p202 = pneg %p45
      $region30: #{tpu_custom_call.1} parent=27 // pred_check_branch
        %204 = sbr.rel (%p202) target = $region32
      $region31: #{tpu_custom_call.1} parent=27 // pred_region
        %s205 = smul.u32 32, %s19
        %s206 = ssub.s32 36, %s205
        %p207 = scmp.lt.s32.totalorder %s206, 32
        %s208 = scalar_select %p207, %s206, 32
        %s209 = smul.u32 4, %s208
        %p210 = scmp.lt.s32.totalorder %s18, 1
        %s211 = scalar_select %p210, %s18, 1
        %p212 = scmp.lt.s32.totalorder %s205, 35
        %s213 = scalar_select %p212, %s205, 35
        %s214 = smul.addr %s211, 36
        %s215 = sadd.s32 %s213, %s214
        %s216 = smul.addr %s215, 4
        %s217 = scalar_lea.vmem %s0, %s216
        %s218 = smul.u32 32, %s19
        %s219 = ssub.s32 36, %s218
        %p220 = scmp.lt.s32.totalorder %s219, 32
        %s221 = scalar_select %p220, %s219, 32
        %s222 = smul.u32 4, %s221
      $region32: #{tpu_custom_call.1} parent=27 // pred_fallthru
        _
      // Predicated region
      $region33: #{tpu_custom_call.1} parent=27 // pred_check
        %p223 = pneg %p77
      $region34: #{tpu_custom_call.1} parent=27 // pred_check_branch
        %225 = sbr.rel (%p223) target = $region36
      $region35: #{tpu_custom_call.1} parent=27 // pred_region
        %s226 = sadd.s32 %s19, 1
        %s227 = smul.u32 %s226, 8
        %s228 = smul.u32 4, %s227
        %p229 = scmp.lt.s32.totalorder %s18, 1
        %s230 = scalar_select %p229, %s18, 1
        %p231 = scmp.lt.s32.totalorder %s228, 35
        %s232 = scalar_select %p231, %s228, 35
        %s233 = smul.addr %s230, 36
        %s234 = sadd.s32 %s232, %s233
        %s235 = smul.addr %s234, 4
        %s236 = scalar_lea.vmem %s1, %s235
        %s237 = sadd.s32 %s19, 1
        %s238 = smul.u32 %s237, 8
        %s239 = smul.u32 4, %s238
      $region36: #{tpu_custom_call.1} parent=27 // pred_fallthru
        _
    $region28: #{tpu_custom_call.1} parent=5 // pred_fallthru
      _
    %p240 = scmp.le.s32.totalorder 1, %s11
    %p241 = scmp.lt.s32.totalorder %s11, 3
    %p242 = pnand %p240, %p241
    %p243 = pneg %p242
    // Predicated region
    $region37: #{tpu_custom_call.1} parent=5 // pred_check
      _
    $region38: #{tpu_custom_call.1} parent=5 // pred_check_branch
      %245 = sbr.rel (%p242) target = $region40
    $region39: #{tpu_custom_call.1} parent=5 // pred_region
      %s246 = ssub.s32 %s11, 1
      %s247 = smul.u32 32, %s21
      %s248 = ssub.s32 36, %s247
      %p249 = scmp.lt.s32.totalorder %s248, 32
      %s250 = scalar_select %p249, %s248, 32
      %s251 = smul.u32 4, %s250
      %p252 = scmp.lt.s32.totalorder %s20, 1
      %s253 = scalar_select %p252, %s20, 1
      %p254 = scmp.lt.s32.totalorder %s247, 35
      %s255 = scalar_select %p254, %s247, 35
      %s256 = smul.addr %s253, 36
      %s257 = sadd.s32 %s255, %s256
      %s258 = smul.addr %s257, 4
      %s259 = scalar_lea.vmem %s0, %s258
      %p260 = pneg %p51
      %p261 = pneg %p48
      %s262 = sadd.s32 %s21, 1
      %s263 = smul.u32 %s262, 8
      %s264 = smul.u32 4, %s263
      %p265 = scmp.lt.s32.totalorder %s20, 1
      %s266 = scalar_select %p265, %s20, 1
      %p267 = scmp.lt.s32.totalorder %s264, 35
      %s268 = scalar_select %p267, %s264, 35
      %s269 = smul.addr %s266, 36
      %s270 = sadd.s32 %s268, %s269
      %s271 = smul.addr %s270, 4
      %s272 = scalar_lea.vmem %s1, %s271
      %p273 = pneg %p83
      %p274 = pneg %p80
      %p275 = pneg %p104
      %p276 = pneg %p101
      %p277 = pneg %p125
      %p278 = pneg %p122
      %p279 = pneg %p146
      %p280 = pneg %p143
      %p281 = pneg %p174
      %p282 = pneg %p171
      %s283 = smul.u32 32, %s21
      %p284 = scmp.lt.s32.totalorder %s20, 1
      %s285 = scalar_select %p284, %s20, 1
      %p286 = scmp.lt.s32.totalorder %s283, 31
      %s287 = scalar_select %p286, %s283, 31
      %s288 = smul.addr %s285, 32
      %s289 = sadd.s32 %s287, %s288
      %s290 = smul.addr %s289, 4
      %s291 = scalar_lea.vmem %s5, %s290
      %s292 = smul.u32 32, %s21
      %s293 = ssub.s32 36, %s292
      %p294 = scmp.lt.s32.totalorder %s293, 32
      %s295 = scalar_select %p294, %s293, 32
      %s296 = smul.u32 4, %s295
      %p297 = scmp.lt.s32.totalorder %s20, 1
      %s298 = scalar_select %p297, %s20, 1
      %p299 = scmp.lt.s32.totalorder %s292, 35
      %s300 = scalar_select %p299, %s292, 35
      %s301 = smul.addr %s298, 36
      %s302 = sadd.s32 %s300, %s301
      %s303 = smul.addr %s302, 4
      %s304 = scalar_lea.vmem %s0, %s303
      %s305 = smul.u32 32, %s21
      %s306 = ssub.s32 36, %s305
      %p307 = scmp.lt.s32.totalorder %s306, 32
      %s308 = scalar_select %p307, %s306, 32
      %s309 = smul.u32 4, %s308
      %s310 = sadd.s32 %s21, 1
      %s311 = smul.u32 %s310, 8
      %s312 = smul.u32 4, %s311
      %p313 = scmp.lt.s32.totalorder %s20, 1
      %s314 = scalar_select %p313, %s20, 1
      %p315 = scmp.lt.s32.totalorder %s312, 35
      %s316 = scalar_select %p315, %s312, 35
      %s317 = smul.addr %s314, 36
      %s318 = sadd.s32 %s316, %s317
      %s319 = smul.addr %s318, 4
      %s320 = scalar_lea.vmem %s1, %s319
      %s321 = sadd.s32 %s21, 1
      %s322 = smul.u32 %s321, 8
      %s323 = smul.u32 4, %s322
      %s324 = smul.u32 32, %s21
      %p325 = scmp.lt.s32.totalorder %s20, 1
      %s326 = scalar_select %p325, %s20, 1
      %p327 = scmp.lt.s32.totalorder %s324, 31
      %s328 = scalar_select %p327, %s324, 31
      %s329 = smul.addr %s326, 32
      %s330 = sadd.s32 %s328, %s329
      %s331 = smul.addr %s330, 4
      %s332 = scalar_lea.vmem %s5, %s331
      %s333 = smul.u32 32, %s21
      %vm337 = vcmask 27648
      %338 = vst.msk [vmem:[#allocation2] sm:$0xf] %vm337, 0
      %v339 = vld [vmem:[%s304] sm:$0xf]
      %v340 = vld [vmem:[%s304 + $0x4] sm:$0xf]
      %v341 = vld [vmem:[%s304 + $0x8] sm:$0xf]
      %v342 = vld [vmem:[%s304 + $0xc] sm:$0xf]
      %v343 = vld [vmem:[%s304 + $0x10] sm:$0xf]
      %v344 = vld [vmem:[%s304 + $0x14] sm:$0xf]
      %v345 = vld [vmem:[%s304 + $0x18] sm:$0xf]
      %v346 = vld [vmem:[%s304 + $0x1c] sm:$0xf]
      %v347 = vld [vmem:[%s304 + $0x20] sm:$0xf]
      %v348 = vld [vmem:[%s304 + $0x24] sm:$0xf]
      %v349 = vld [vmem:[%s304 + $0x28] sm:$0xf]
      %v350 = vld [vmem:[%s304 + $0x2c] sm:$0xf]
      %v351 = vld [vmem:[%s304 + $0x30] sm:$0xf]
      %v352 = vld [vmem:[%s304 + $0x34] sm:$0xf]
      %v353 = vld [vmem:[%s304 + $0x38] sm:$0xf]
      %v354 = vld [vmem:[%s304 + $0x3c] sm:$0xf]
      %v355 = vld [vmem:[%s304 + $0x40] sm:$0xf]
      %v356 = vld [vmem:[%s304 + $0x44] sm:$0xf]
      %v357 = vld [vmem:[%s304 + $0x48] sm:$0xf]
      %v358 = vld [vmem:[%s304 + $0x4c] sm:$0xf]
      %v359 = vld [vmem:[%s304 + $0x50] sm:$0xf]
      %v360 = vld [vmem:[%s304 + $0x54] sm:$0xf]
      %v361 = vld [vmem:[%s304 + $0x58] sm:$0xf]
      %v362 = vld [vmem:[%s304 + $0x5c] sm:$0xf]
      %v363 = vld [vmem:[%s304 + $0x60] sm:$0xf]
      %v364 = vld [vmem:[%s304 + $0x64] sm:$0xf]
      %v365 = vld [vmem:[%s304 + $0x68] sm:$0xf]
      %v366 = vld [vmem:[%s304 + $0x6c] sm:$0xf]
      %v367 = vld [vmem:[%s304 + $0x70] sm:$0xf]
      %v368 = vld [vmem:[%s304 + $0x74] sm:$0xf]
      %v369 = vld [vmem:[%s304 + $0x78] sm:$0xf]
      %v370 = vld [vmem:[%s304 + $0x7c] sm:$0xf]
      %371 = vst.msk [vmem:[#allocation2 + $0x4] sm:$0xf] %vm337, %v339
      %372 = vst.msk [vmem:[#allocation2 + $0x8] sm:$0xf] %vm337, %v340
      %373 = vst.msk [vmem:[#allocation2 + $0xc] sm:$0xf] %vm337, %v341
      %374 = vst.msk [vmem:[#allocation2 + $0x10] sm:$0xf] %vm337, %v342
      %375 = vst.msk [vmem:[#allocation2 + $0x14] sm:$0xf] %vm337, %v343
      %376 = vst.msk [vmem:[#allocation2 + $0x18] sm:$0xf] %vm337, %v344
      %377 = vst.msk [vmem:[#allocation2 + $0x1c] sm:$0xf] %vm337, %v345
      %378 = vst.msk [vmem:[#allocation2 + $0x20] sm:$0xf] %vm337, %v346
      %379 = vst.msk [vmem:[#allocation2 + $0x24] sm:$0xf] %vm337, %v347
      %380 = vst.msk [vmem:[#allocation2 + $0x28] sm:$0xf] %vm337, %v348
      %381 = vst.msk [vmem:[#allocation2 + $0x2c] sm:$0xf] %vm337, %v349
      %382 = vst.msk [vmem:[#allocation2 + $0x30] sm:$0xf] %vm337, %v350
      %383 = vst.msk [vmem:[#allocation2 + $0x34] sm:$0xf] %vm337, %v351
      %384 = vst.msk [vmem:[#allocation2 + $0x38] sm:$0xf] %vm337, %v352
      %385 = vst.msk [vmem:[#allocation2 + $0x3c] sm:$0xf] %vm337, %v353
      %386 = vst.msk [vmem:[#allocation2 + $0x40] sm:$0xf] %vm337, %v354
      %387 = vst.msk [vmem:[#allocation2 + $0x44] sm:$0xf] %vm337, %v355
      %388 = vst.msk [vmem:[#allocation2 + $0x48] sm:$0xf] %vm337, %v356
      %389 = vst.msk [vmem:[#allocation2 + $0x4c] sm:$0xf] %vm337, %v357
      %390 = vst.msk [vmem:[#allocation2 + $0x50] sm:$0xf] %vm337, %v358
      %391 = vst.msk [vmem:[#allocation2 + $0x54] sm:$0xf] %vm337, %v359
      %392 = vst.msk [vmem:[#allocation2 + $0x58] sm:$0xf] %vm337, %v360
      %393 = vst.msk [vmem:[#allocation2 + $0x5c] sm:$0xf] %vm337, %v361
      %394 = vst.msk [vmem:[#allocation2 + $0x60] sm:$0xf] %vm337, %v362
      %395 = vst.msk [vmem:[#allocation2 + $0x64] sm:$0xf] %vm337, %v363
      %396 = vst.msk [vmem:[#allocation2 + $0x68] sm:$0xf] %vm337, %v364
      %397 = vst.msk [vmem:[#allocation2 + $0x6c] sm:$0xf] %vm337, %v365
      %398 = vst.msk [vmem:[#allocation2 + $0x70] sm:$0xf] %vm337, %v366
      %399 = vst.msk [vmem:[#allocation2 + $0x74] sm:$0xf] %vm337, %v367
      %400 = vst.msk [vmem:[#allocation2 + $0x78] sm:$0xf] %vm337, %v368
      %401 = vst.msk [vmem:[#allocation2 + $0x7c] sm:$0xf] %vm337, %v369
      %402 = vst.msk [vmem:[#allocation2 + $0x80] sm:$0xf] %vm337, %v370
      %v403 = vld [vmem:[%s320] sm:$0xf]
      %v404 = vld [vmem:[%s320 + $0x4] sm:$0xf]
      %v405 = vld [vmem:[%s320 + $0x8] sm:$0xf]
      %v406 = vld [vmem:[%s320 + $0xc] sm:$0xf]
      %407 = vst.msk [vmem:[#allocation2 + $0x84] sm:$0xf] %vm337, %v403
      %408 = vst.msk [vmem:[#allocation2 + $0x88] sm:$0xf] %vm337, %v404
      %409 = vst.msk [vmem:[#allocation2 + $0x8c] sm:$0xf] %vm337, %v405
      %410 = vst.msk [vmem:[#allocation2 + $0x90] sm:$0xf] %vm337, %v406
      %411 = vst.msk [vmem:[#allocation2 + $0x94] sm:$0xf] %vm337, 0
      %v412 = vld [vmem:[%s2] sm:$0xff]
      %v413 = vld [vmem:[%s2 + $0x8] sm:$0xff]
      %v414 = vld [vmem:[%s2 + $0x10] sm:$0xff]
      %v415 = vld [vmem:[%s2 + $0x18] sm:$0xff]
      %v416 = vld [vmem:[%s2 + $0x20] sm:$0xff]
      %v417 = vld [vmem:[%s2 + $0x28] sm:$0xff]
      %v418 = vld [vmem:[%s2 + $0x30] sm:$0xff]
      %v419 = vld [vmem:[%s2 + $0x38] sm:$0xff]
      %v420 = vld [vmem:[%s2 + $0x40] sm:$0xff]
      %v421 = vld [vmem:[%s2 + $0x48] sm:$0xff]
      %v422 = vld [vmem:[%s2 + $0x50] sm:$0xff]
      %v423 = vld [vmem:[%s2 + $0x58] sm:$0xff]
      %v424 = vld [vmem:[%s2 + $0x60] sm:$0xff]
      %v425 = vld [vmem:[%s2 + $0x68] sm:$0xff]
      %v426 = vld [vmem:[%s2 + $0x70] sm:$0xff]
      %v427 = vld [vmem:[%s2 + $0x78] sm:$0xff]
      %v428 = vld [vmem:[%s2 + $0x80] sm:$0xff]
      %v429 = vld [vmem:[%s2 + $0x88] sm:$0xff]
      %v430 = vld [vmem:[%s2 + $0x90] sm:$0xff]
      %v431 = vld [vmem:[%s2 + $0x98] sm:$0xff]
      %v432 = vld [vmem:[%s2 + $0xa0] sm:$0xff]
      %v433 = vld [vmem:[%s2 + $0xa8] sm:$0xff]
      %v434 = vld [vmem:[%s2 + $0xb0] sm:$0xff]
      %v435 = vld [vmem:[%s2 + $0xb8] sm:$0xff]
      %v436 = vld [vmem:[%s2 + $0xc0] sm:$0xff]
      %v437 = vld [vmem:[%s2 + $0xc8] sm:$0xff]
      %v438 = vld [vmem:[%s2 + $0xd0] sm:$0xff]
      %v439 = vld [vmem:[%s2 + $0xd8] sm:$0xff]
      %v440 = vld [vmem:[%s2 + $0xe0] sm:$0xff]
      %v441 = vld [vmem:[%s2 + $0xe8] sm:$0xff]
      %v442 = vld [vmem:[%s2 + $0xf0] sm:$0xff]
      %v443 = vld [vmem:[%s2 + $0xf8] sm:$0xff]
      %vm444 = vcmp.eq.s32.totalorder %v412, 0
      %vm445 = vcmp.eq.s32.totalorder %v413, 0
      %vm446 = vcmp.eq.s32.totalorder %v414, 0
      %vm447 = vcmp.eq.s32.totalorder %v415, 0
      %vm448 = vcmp.eq.s32.totalorder %v416, 0
      %vm449 = vcmp.eq.s32.totalorder %v417, 0
      %vm450 = vcmp.eq.s32.totalorder %v418, 0
      %vm451 = vcmp.eq.s32.totalorder %v419, 0
      %vm452 = vcmp.eq.s32.totalorder %v420, 0
      %vm453 = vcmp.eq.s32.totalorder %v421, 0
      %vm454 = vcmp.eq.s32.totalorder %v422, 0
      %vm455 = vcmp.eq.s32.totalorder %v423, 0
      %vm456 = vcmp.eq.s32.totalorder %v424, 0
      %vm457 = vcmp.eq.s32.totalorder %v425, 0
      %vm458 = vcmp.eq.s32.totalorder %v426, 0
      %vm459 = vcmp.eq.s32.totalorder %v427, 0
      %vm460 = vcmp.eq.s32.totalorder %v428, 0
      %vm461 = vcmp.eq.s32.totalorder %v429, 0
      %vm462 = vcmp.eq.s32.totalorder %v430, 0
      %vm463 = vcmp.eq.s32.totalorder %v431, 0
      %vm464 = vcmp.eq.s32.totalorder %v432, 0
      %vm465 = vcmp.eq.s32.totalorder %v433, 0
      %vm466 = vcmp.eq.s32.totalorder %v434, 0
      %vm467 = vcmp.eq.s32.totalorder %v435, 0
      %vm468 = vcmp.eq.s32.totalorder %v436, 0
      %vm469 = vcmp.eq.s32.totalorder %v437, 0
      %vm470 = vcmp.eq.s32.totalorder %v438, 0
      %vm471 = vcmp.eq.s32.totalorder %v439, 0
      %vm472 = vcmp.eq.s32.totalorder %v440, 0
      %vm473 = vcmp.eq.s32.totalorder %v441, 0
      %vm474 = vcmp.eq.s32.totalorder %v442, 0
      %vm475 = vcmp.eq.s32.totalorder %v443, 0
      %vm476 = vcmp.eq.s32.totalorder %v412, 15
      %vm477 = vcmp.eq.s32.totalorder %v413, 15
      %vm478 = vcmp.eq.s32.totalorder %v414, 15
      %vm479 = vcmp.eq.s32.totalorder %v415, 15
      %vm480 = vcmp.eq.s32.totalorder %v416, 15
      %vm481 = vcmp.eq.s32.totalorder %v417, 15
      %vm482 = vcmp.eq.s32.totalorder %v418, 15
      %vm483 = vcmp.eq.s32.totalorder %v419, 15
      %vm484 = vcmp.eq.s32.totalorder %v420, 15
      %vm485 = vcmp.eq.s32.totalorder %v421, 15
      %vm486 = vcmp.eq.s32.totalorder %v422, 15
      %vm487 = vcmp.eq.s32.totalorder %v423, 15
      %vm488 = vcmp.eq.s32.totalorder %v424, 15
      %vm489 = vcmp.eq.s32.totalorder %v425, 15
      %vm490 = vcmp.eq.s32.totalorder %v426, 15
      %vm491 = vcmp.eq.s32.totalorder %v427, 15
      %vm492 = vcmp.eq.s32.totalorder %v428, 15
      %vm493 = vcmp.eq.s32.totalorder %v429, 15
      %vm494 = vcmp.eq.s32.totalorder %v430, 15
      %vm495 = vcmp.eq.s32.totalorder %v431, 15
      %vm496 = vcmp.eq.s32.totalorder %v432, 15
      %vm497 = vcmp.eq.s32.totalorder %v433, 15
      %vm498 = vcmp.eq.s32.totalorder %v434, 15
      %vm499 = vcmp.eq.s32.totalorder %v435, 15
      %vm500 = vcmp.eq.s32.totalorder %v436, 15
      %vm501 = vcmp.eq.s32.totalorder %v437, 15
      %vm502 = vcmp.eq.s32.totalorder %v438, 15
      %vm503 = vcmp.eq.s32.totalorder %v439, 15
      %vm504 = vcmp.eq.s32.totalorder %v440, 15
      %vm505 = vcmp.eq.s32.totalorder %v441, 15
      %vm506 = vcmp.eq.s32.totalorder %v442, 15
      %vm507 = vcmp.eq.s32.totalorder %v443, 15
      %v508 = vld [vmem:[#allocation2] sm:$0x8]
      %v509 = vld [vmem:[#allocation2 + $0x4] sm:$0xf]
      %v510 = vld [vmem:[#allocation2 + $0x8] sm:$0xf]
      %v511 = vld [vmem:[#allocation2 + $0xc] sm:$0xf]
      %v512 = vld [vmem:[#allocation2 + $0x10] sm:$0xf]
      %v513 = vld [vmem:[#allocation2 + $0x14] sm:$0xf]
      %v514 = vld [vmem:[#allocation2 + $0x18] sm:$0xf]
      %v515 = vld [vmem:[#allocation2 + $0x1c] sm:$0xf]
      %v516 = vld [vmem:[#allocation2 + $0x20] sm:$0xf]
      %v517 = vld [vmem:[#allocation2 + $0x24] sm:$0xf]
      %v518 = vld [vmem:[#allocation2 + $0x28] sm:$0xf]
      %v519 = vld [vmem:[#allocation2 + $0x2c] sm:$0xf]
      %v520 = vld [vmem:[#allocation2 + $0x30] sm:$0xf]
      %v521 = vld [vmem:[#allocation2 + $0x34] sm:$0xf]
      %v522 = vld [vmem:[#allocation2 + $0x38] sm:$0xf]
      %v523 = vld [vmem:[#allocation2 + $0x3c] sm:$0xf]
      %v524 = vld [vmem:[#allocation2 + $0x40] sm:$0xf]
      %v525 = vld [vmem:[#allocation2 + $0x44] sm:$0xf]
      %v526 = vld [vmem:[#allocation2 + $0x48] sm:$0xf]
      %v527 = vld [vmem:[#allocation2 + $0x4c] sm:$0xf]
      %v528 = vld [vmem:[#allocation2 + $0x50] sm:$0xf]
      %v529 = vld [vmem:[#allocation2 + $0x54] sm:$0xf]
      %v530 = vld [vmem:[#allocation2 + $0x58] sm:$0xf]
      %v531 = vld [vmem:[#allocation2 + $0x5c] sm:$0xf]
      %v532 = vld [vmem:[#allocation2 + $0x60] sm:$0xf]
      %v533 = vld [vmem:[#allocation2 + $0x64] sm:$0xf]
      %v534 = vld [vmem:[#allocation2 + $0x68] sm:$0xf]
      %v535 = vld [vmem:[#allocation2 + $0x6c] sm:$0xf]
      %v536 = vld [vmem:[#allocation2 + $0x70] sm:$0xf]
      %v537 = vld [vmem:[#allocation2 + $0x74] sm:$0xf]
      %v538 = vld [vmem:[#allocation2 + $0x78] sm:$0xf]
      %v539 = vld [vmem:[#allocation2 + $0x7c] sm:$0xf]
      %v540 = vld [vmem:[#allocation2 + $0x80] sm:$0xf]
      %v541 = vsel %vm444, 1, 0
      %v542 = vsel %vm445, 1, 0
      %v543 = vsel %vm446, 1, 0
      %v544 = vsel %vm447, 1, 0
      %v545 = vsel %vm448, 1, 0
      %v546 = vsel %vm449, 1, 0
      %v547 = vsel %vm450, 1, 0
      %v548 = vsel %vm451, 1, 0
      %v549 = vsel %vm452, 1, 0
      %v550 = vsel %vm453, 1, 0
      %v551 = vsel %vm454, 1, 0
      %v552 = vsel %vm455, 1, 0
      %v553 = vsel %vm456, 1, 0
      %v554 = vsel %vm457, 1, 0
      %v555 = vsel %vm458, 1, 0
      %v556 = vsel %vm459, 1, 0
      %v557 = vsel %vm460, 1, 0
      %v558 = vsel %vm461, 1, 0
      %v559 = vsel %vm462, 1, 0
      %v560 = vsel %vm463, 1, 0
      %v561 = vsel %vm464, 1, 0
      %v562 = vsel %vm465, 1, 0
      %v563 = vsel %vm466, 1, 0
      %v564 = vsel %vm467, 1, 0
      %v565 = vsel %vm468, 1, 0
      %v566 = vsel %vm469, 1, 0
      %v567 = vsel %vm470, 1, 0
      %v568 = vsel %vm471, 1, 0
      %v569 = vsel %vm472, 1, 0
      %v570 = vsel %vm473, 1, 0
      %v571 = vsel %vm474, 1, 0
      %v572 = vsel %vm475, 1, 0
      %573 = vset.pattern.permute.xlu0 0
      %574 = vperm.xlu0 %573, %v541
      %v575 = vpop.permute.xlu0 %574
      %576 = vset.pattern.permute.xlu0 0
      %577 = vperm.xlu0 %576, %v542
      %v578 = vpop.permute.xlu0 %577
      %579 = vset.pattern.permute.xlu0 0
      %580 = vperm.xlu0 %579, %v543
      %v581 = vpop.permute.xlu0 %580
      %582 = vset.pattern.permute.xlu0 0
      %583 = vperm.xlu0 %582, %v544
      %v584 = vpop.permute.xlu0 %583
      %585 = vset.pattern.permute.xlu0 0
      %586 = vperm.xlu0 %585, %v545
      %v587 = vpop.permute.xlu0 %586
      %588 = vset.pattern.permute.xlu0 0
      %589 = vperm.xlu0 %588, %v546
      %v590 = vpop.permute.xlu0 %589
      %591 = vset.pattern.permute.xlu0 0
      %592 = vperm.xlu0 %591, %v547
      %v593 = vpop.permute.xlu0 %592
      %594 = vset.pattern.permute.xlu0 0
      %595 = vperm.xlu0 %594, %v548
      %v596 = vpop.permute.xlu0 %595
      %597 = vset.pattern.permute.xlu0 0
      %598 = vperm.xlu0 %597, %v549
      %v599 = vpop.permute.xlu0 %598
      %600 = vset.pattern.permute.xlu0 0
      %601 = vperm.xlu0 %600, %v550
      %v602 = vpop.permute.xlu0 %601
      %603 = vset.pattern.permute.xlu0 0
      %604 = vperm.xlu0 %603, %v551
      %v605 = vpop.permute.xlu0 %604
      %606 = vset.pattern.permute.xlu0 0
      %607 = vperm.xlu0 %606, %v552
      %v608 = vpop.permute.xlu0 %607
      %609 = vset.pattern.permute.xlu0 0
      %610 = vperm.xlu0 %609, %v553
      %v611 = vpop.permute.xlu0 %610
      %612 = vset.pattern.permute.xlu0 0
      %613 = vperm.xlu0 %612, %v554
      %v614 = vpop.permute.xlu0 %613
      %615 = vset.pattern.permute.xlu0 0
      %616 = vperm.xlu0 %615, %v555
      %v617 = vpop.permute.xlu0 %616
      %618 = vset.pattern.permute.xlu0 0
      %619 = vperm.xlu0 %618, %v556
      %v620 = vpop.permute.xlu0 %619
      %621 = vset.pattern.permute.xlu0 0
      %622 = vperm.xlu0 %621, %v557
      %v623 = vpop.permute.xlu0 %622
      %624 = vset.pattern.permute.xlu0 0
      %625 = vperm.xlu0 %624, %v558
      %v626 = vpop.permute.xlu0 %625
      %627 = vset.pattern.permute.xlu0 0
      %628 = vperm.xlu0 %627, %v559
      %v629 = vpop.permute.xlu0 %628
      %630 = vset.pattern.permute.xlu0 0
      %631 = vperm.xlu0 %630, %v560
      %v632 = vpop.permute.xlu0 %631
      %633 = vset.pattern.permute.xlu0 0
      %634 = vperm.xlu0 %633, %v561
      %v635 = vpop.permute.xlu0 %634
      %636 = vset.pattern.permute.xlu0 0
      %637 = vperm.xlu0 %636, %v562
      %v638 = vpop.permute.xlu0 %637
      %639 = vset.pattern.permute.xlu0 0
      %640 = vperm.xlu0 %639, %v563
      %v641 = vpop.permute.xlu0 %640
      %642 = vset.pattern.permute.xlu0 0
      %643 = vperm.xlu0 %642, %v564
      %v644 = vpop.permute.xlu0 %643
      %645 = vset.pattern.permute.xlu0 0
      %646 = vperm.xlu0 %645, %v565
      %v647 = vpop.permute.xlu0 %646
      %648 = vset.pattern.permute.xlu0 0
      %649 = vperm.xlu0 %648, %v566
      %v650 = vpop.permute.xlu0 %649
      %651 = vset.pattern.permute.xlu0 0
      %652 = vperm.xlu0 %651, %v567
      %v653 = vpop.permute.xlu0 %652
      %654 = vset.pattern.permute.xlu0 0
      %655 = vperm.xlu0 %654, %v568
      %v656 = vpop.permute.xlu0 %655
      %657 = vset.pattern.permute.xlu0 0
      %658 = vperm.xlu0 %657, %v569
      %v659 = vpop.permute.xlu0 %658
      %660 = vset.pattern.permute.xlu0 0
      %661 = vperm.xlu0 %660, %v570
      %v662 = vpop.permute.xlu0 %661
      %663 = vset.pattern.permute.xlu0 0
      %664 = vperm.xlu0 %663, %v571
      %v665 = vpop.permute.xlu0 %664
      %666 = vset.pattern.permute.xlu0 0
      %667 = vperm.xlu0 %666, %v572
      %v668 = vpop.permute.xlu0 %667
      %vm669 = vcmp.eq.s32.totalorder %v575, 1
      %vm670 = vcmp.eq.s32.totalorder %v578, 1
      %vm671 = vcmp.eq.s32.totalorder %v581, 1
      %vm672 = vcmp.eq.s32.totalorder %v584, 1
      %vm673 = vcmp.eq.s32.totalorder %v587, 1
      %vm674 = vcmp.eq.s32.totalorder %v590, 1
      %vm675 = vcmp.eq.s32.totalorder %v593, 1
      %vm676 = vcmp.eq.s32.totalorder %v596, 1
      %vm677 = vcmp.eq.s32.totalorder %v599, 1
      %vm678 = vcmp.eq.s32.totalorder %v602, 1
      %vm679 = vcmp.eq.s32.totalorder %v605, 1
      %vm680 = vcmp.eq.s32.totalorder %v608, 1
      %vm681 = vcmp.eq.s32.totalorder %v611, 1
      %vm682 = vcmp.eq.s32.totalorder %v614, 1
      %vm683 = vcmp.eq.s32.totalorder %v617, 1
      %vm684 = vcmp.eq.s32.totalorder %v620, 1
      %vm685 = vcmp.eq.s32.totalorder %v623, 1
      %vm686 = vcmp.eq.s32.totalorder %v626, 1
      %vm687 = vcmp.eq.s32.totalorder %v629, 1
      %vm688 = vcmp.eq.s32.totalorder %v632, 1
      %vm689 = vcmp.eq.s32.totalorder %v635, 1
      %vm690 = vcmp.eq.s32.totalorder %v638, 1
      %vm691 = vcmp.eq.s32.totalorder %v641, 1
      %vm692 = vcmp.eq.s32.totalorder %v644, 1
      %vm693 = vcmp.eq.s32.totalorder %v647, 1
      %vm694 = vcmp.eq.s32.totalorder %v650, 1
      %vm695 = vcmp.eq.s32.totalorder %v653, 1
      %vm696 = vcmp.eq.s32.totalorder %v656, 1
      %vm697 = vcmp.eq.s32.totalorder %v659, 1
      %vm698 = vcmp.eq.s32.totalorder %v662, 1
      %vm699 = vcmp.eq.s32.totalorder %v665, 1
      %vm700 = vcmp.eq.s32.totalorder %v668, 1
      %vm701 = vmpackc.low %vm669, %vm669
      %vm702 = vmpackc.low %vm670, %vm670
      %vm703 = vmpackc.low %vm671, %vm671
      %vm704 = vmpackc.low %vm672, %vm672
      %vm705 = vmpackc.low %vm673, %vm673
      %vm706 = vmpackc.low %vm674, %vm674
      %vm707 = vmpackc.low %vm675, %vm675
      %vm708 = vmpackc.low %vm676, %vm676
      %vm709 = vmpackc.low %vm677, %vm677
      %vm710 = vmpackc.low %vm678, %vm678
      %vm711 = vmpackc.low %vm679, %vm679
      %vm712 = vmpackc.low %vm680, %vm680
      %vm713 = vmpackc.low %vm681, %vm681
      %vm714 = vmpackc.low %vm682, %vm682
      %vm715 = vmpackc.low %vm683, %vm683
      %vm716 = vmpackc.low %vm684, %vm684
      %vm717 = vmpackc.low %vm685, %vm685
      %vm718 = vmpackc.low %vm686, %vm686
      %vm719 = vmpackc.low %vm687, %vm687
      %vm720 = vmpackc.low %vm688, %vm688
      %vm721 = vmpackc.low %vm689, %vm689
      %vm722 = vmpackc.low %vm690, %vm690
      %vm723 = vmpackc.low %vm691, %vm691
      %vm724 = vmpackc.low %vm692, %vm692
      %vm725 = vmpackc.low %vm693, %vm693
      %vm726 = vmpackc.low %vm694, %vm694
      %vm727 = vmpackc.low %vm695, %vm695
      %vm728 = vmpackc.low %vm696, %vm696
      %vm729 = vmpackc.low %vm697, %vm697
      %vm730 = vmpackc.low %vm698, %vm698
      %vm731 = vmpackc.low %vm699, %vm699
      %vm732 = vmpackc.low %vm700, %vm700
      %v733 = vsel %vm701, 65537, 0
      %v734 = vsel %vm702, 65537, 0
      %v735 = vsel %vm703, 65537, 0
      %v736 = vsel %vm704, 65537, 0
      %v737 = vsel %vm705, 65537, 0
      %v738 = vsel %vm706, 65537, 0
      %v739 = vsel %vm707, 65537, 0
      %v740 = vsel %vm708, 65537, 0
      %v741 = vsel %vm709, 65537, 0
      %v742 = vsel %vm710, 65537, 0
      %v743 = vsel %vm711, 65537, 0
      %v744 = vsel %vm712, 65537, 0
      %v745 = vsel %vm713, 65537, 0
      %v746 = vsel %vm714, 65537, 0
      %v747 = vsel %vm715, 65537, 0
      %v748 = vsel %vm716, 65537, 0
      %v749 = vsel %vm717, 65537, 0
      %v750 = vsel %vm718, 65537, 0
      %v751 = vsel %vm719, 65537, 0
      %v752 = vsel %vm720, 65537, 0
      %v753 = vsel %vm721, 65537, 0
      %v754 = vsel %vm722, 65537, 0
      %v755 = vsel %vm723, 65537, 0
      %v756 = vsel %vm724, 65537, 0
      %v757 = vsel %vm725, 65537, 0
      %v758 = vsel %vm726, 65537, 0
      %v759 = vsel %vm727, 65537, 0
      %v760 = vsel %vm728, 65537, 0
      %v761 = vsel %vm729, 65537, 0
      %v762 = vsel %vm730, 65537, 0
      %v763 = vsel %vm731, 65537, 0
      %v764 = vsel %vm732, 65537, 0
      %vm765 = vsmask.f32 3328
      %vm766 = vsmask.f32 7440
      %vm767 = vmor %vm765, %vm766
      %v769 = vshll.u32 %v733, 16
      %v771 = vrot.slane %v769, 5
      %v772 = vshrl.u32 %v733, 16
      %v774 = vrot.slane %v772, 4
      %v775 = vor.u32 %v774, %v771
      %v776 = vrot.slane %v775, 4
      %v778 = vshll.u32 %v734, 16
      %v780 = vrot.slane %v778, 5
      %v781 = vsel %vm767, %v776, %v780
      %v782 = vshrl.u32 %v734, 16
      %v784 = vrot.slane %v782, 4
      %v785 = vor.u32 %v784, %v780
      %v786 = vrot.slane %v785, 4
      %v788 = vshll.u32 %v735, 16
      %v790 = vrot.slane %v788, 5
      %v791 = vsel %vm767, %v786, %v790
      %v792 = vshrl.u32 %v735, 16
      %v794 = vrot.slane %v792, 4
      %v795 = vor.u32 %v794, %v790
      %v796 = vrot.slane %v795, 4
      %v798 = vshll.u32 %v736, 16
      %v800 = vrot.slane %v798, 5
      %v801 = vsel %vm767, %v796, %v800
      %v802 = vshrl.u32 %v736, 16
      %v804 = vrot.slane %v802, 4
      %v805 = vor.u32 %v804, %v800
      %v806 = vrot.slane %v805, 4
      %v808 = vshll.u32 %v737, 16
      %v810 = vrot.slane %v808, 5
      %v811 = vsel %vm767, %v806, %v810
      %v812 = vshrl.u32 %v737, 16
      %v814 = vrot.slane %v812, 4
      %v815 = vor.u32 %v814, %v810
      %v816 = vrot.slane %v815, 4
      %v818 = vshll.u32 %v738, 16
      %v820 = vrot.slane %v818, 5
      %v821 = vsel %vm767, %v816, %v820
      %v822 = vshrl.u32 %v738, 16
      %v824 = vrot.slane %v822, 4
      %v825 = vor.u32 %v824, %v820
      %v826 = vrot.slane %v825, 4
      %v828 = vshll.u32 %v739, 16
      %v830 = vrot.slane %v828, 5
      %v831 = vsel %vm767, %v826, %v830
      %v832 = vshrl.u32 %v739, 16
      %v834 = vrot.slane %v832, 4
      %v835 = vor.u32 %v834, %v830
      %v836 = vrot.slane %v835, 4
      %v838 = vshll.u32 %v740, 16
      %v840 = vrot.slane %v838, 5
      %v841 = vsel %vm767, %v836, %v840
      %v842 = vshrl.u32 %v740, 16
      %v844 = vrot.slane %v842, 4
      %v845 = vor.u32 %v844, %v840
      %v846 = vrot.slane %v845, 4
      %v848 = vshll.u32 %v741, 16
      %v850 = vrot.slane %v848, 5
      %v851 = vsel %vm767, %v846, %v850
      %v852 = vshrl.u32 %v741, 16
      %v854 = vrot.slane %v852, 4
      %v855 = vor.u32 %v854, %v850
      %v856 = vrot.slane %v855, 4
      %v858 = vshll.u32 %v742, 16
      %v860 = vrot.slane %v858, 5
      %v861 = vsel %vm767, %v856, %v860
      %v862 = vshrl.u32 %v742, 16
      %v864 = vrot.slane %v862, 4
      %v865 = vor.u32 %v864, %v860
      %v866 = vrot.slane %v865, 4
      %v868 = vshll.u32 %v743, 16
      %v870 = vrot.slane %v868, 5
      %v871 = vsel %vm767, %v866, %v870
      %v872 = vshrl.u32 %v743, 16
      %v874 = vrot.slane %v872, 4
      %v875 = vor.u32 %v874, %v870
      %v876 = vrot.slane %v875, 4
      %v878 = vshll.u32 %v744, 16
      %v880 = vrot.slane %v878, 5
      %v881 = vsel %vm767, %v876, %v880
      %v882 = vshrl.u32 %v744, 16
      %v884 = vrot.slane %v882, 4
      %v885 = vor.u32 %v884, %v880
      %v886 = vrot.slane %v885, 4
      %v888 = vshll.u32 %v745, 16
      %v890 = vrot.slane %v888, 5
      %v891 = vsel %vm767, %v886, %v890
      %v892 = vshrl.u32 %v745, 16
      %v894 = vrot.slane %v892, 4
      %v895 = vor.u32 %v894, %v890
      %v896 = vrot.slane %v895, 4
      %v898 = vshll.u32 %v746, 16
      %v900 = vrot.slane %v898, 5
      %v901 = vsel %vm767, %v896, %v900
      %v902 = vshrl.u32 %v746, 16
      %v904 = vrot.slane %v902, 4
      %v905 = vor.u32 %v904, %v900
      %v906 = vrot.slane %v905, 4
      %v908 = vshll.u32 %v747, 16
      %v910 = vrot.slane %v908, 5
      %v911 = vsel %vm767, %v906, %v910
      %v912 = vshrl.u32 %v747, 16
      %v914 = vrot.slane %v912, 4
      %v915 = vor.u32 %v914, %v910
      %v916 = vrot.slane %v915, 4
      %v918 = vshll.u32 %v748, 16
      %v920 = vrot.slane %v918, 5
      %v921 = vsel %vm767, %v916, %v920
      %v922 = vshrl.u32 %v748, 16
      %v924 = vrot.slane %v922, 4
      %v925 = vor.u32 %v924, %v920
      %v926 = vrot.slane %v925, 4
      %v928 = vshll.u32 %v749, 16
      %v930 = vrot.slane %v928, 5
      %v931 = vsel %vm767, %v926, %v930
      %v932 = vshrl.u32 %v749, 16
      %v934 = vrot.slane %v932, 4
      %v935 = vor.u32 %v934, %v930
      %v936 = vrot.slane %v935, 4
      %v938 = vshll.u32 %v750, 16
      %v940 = vrot.slane %v938, 5
      %v941 = vsel %vm767, %v936, %v940
      %v942 = vshrl.u32 %v750, 16
      %v944 = vrot.slane %v942, 4
      %v945 = vor.u32 %v944, %v940
      %v946 = vrot.slane %v945, 4
      %v948 = vshll.u32 %v751, 16
      %v950 = vrot.slane %v948, 5
      %v951 = vsel %vm767, %v946, %v950
      %v952 = vshrl.u32 %v751, 16
      %v954 = vrot.slane %v952, 4
      %v955 = vor.u32 %v954, %v950
      %v956 = vrot.slane %v955, 4
      %v958 = vshll.u32 %v752, 16
      %v960 = vrot.slane %v958, 5
      %v961 = vsel %vm767, %v956, %v960
      %v962 = vshrl.u32 %v752, 16
      %v964 = vrot.slane %v962, 4
      %v965 = vor.u32 %v964, %v960
      %v966 = vrot.slane %v965, 4
      %v968 = vshll.u32 %v753, 16
      %v970 = vrot.slane %v968, 5
      %v971 = vsel %vm767, %v966, %v970
      %v972 = vshrl.u32 %v753, 16
      %v974 = vrot.slane %v972, 4
      %v975 = vor.u32 %v974, %v970
      %v976 = vrot.slane %v975, 4
      %v978 = vshll.u32 %v754, 16
      %v980 = vrot.slane %v978, 5
      %v981 = vsel %vm767, %v976, %v980
      %v982 = vshrl.u32 %v754, 16
      %v984 = vrot.slane %v982, 4
      %v985 = vor.u32 %v984, %v980
      %v986 = vrot.slane %v985, 4
      %v988 = vshll.u32 %v755, 16
      %v990 = vrot.slane %v988, 5
      %v991 = vsel %vm767, %v986, %v990
      %v992 = vshrl.u32 %v755, 16
      %v994 = vrot.slane %v992, 4
      %v995 = vor.u32 %v994, %v990
      %v996 = vrot.slane %v995, 4
      %v998 = vshll.u32 %v756, 16
      %v1000 = vrot.slane %v998, 5
      %v1001 = vsel %vm767, %v996, %v1000
      %v1002 = vshrl.u32 %v756, 16
      %v1004 = vrot.slane %v1002, 4
      %v1005 = vor.u32 %v1004, %v1000
      %v1006 = vrot.slane %v1005, 4
      %v1008 = vshll.u32 %v757, 16
      %v1010 = vrot.slane %v1008, 5
      %v1011 = vsel %vm767, %v1006, %v1010
      %v1012 = vshrl.u32 %v757, 16
      %v1014 = vrot.slane %v1012, 4
      %v1015 = vor.u32 %v1014, %v1010
      %v1016 = vrot.slane %v1015, 4
      %v1018 = vshll.u32 %v758, 16
      %v1020 = vrot.slane %v1018, 5
      %v1021 = vsel %vm767, %v1016, %v1020
      %v1022 = vshrl.u32 %v758, 16
      %v1024 = vrot.slane %v1022, 4
      %v1025 = vor.u32 %v1024, %v1020
      %v1026 = vrot.slane %v1025, 4
      %v1028 = vshll.u32 %v759, 16
      %v1030 = vrot.slane %v1028, 5
      %v1031 = vsel %vm767, %v1026, %v1030
      %v1032 = vshrl.u32 %v759, 16
      %v1034 = vrot.slane %v1032, 4
      %v1035 = vor.u32 %v1034, %v1030
      %v1036 = vrot.slane %v1035, 4
      %v1038 = vshll.u32 %v760, 16
      %v1040 = vrot.slane %v1038, 5
      %v1041 = vsel %vm767, %v1036, %v1040
      %v1042 = vshrl.u32 %v760, 16
      %v1044 = vrot.slane %v1042, 4
      %v1045 = vor.u32 %v1044, %v1040
      %v1046 = vrot.slane %v1045, 4
      %v1048 = vshll.u32 %v761, 16
      %v1050 = vrot.slane %v1048, 5
      %v1051 = vsel %vm767, %v1046, %v1050
      %v1052 = vshrl.u32 %v761, 16
      %v1054 = vrot.slane %v1052, 4
      %v1055 = vor.u32 %v1054, %v1050
      %v1056 = vrot.slane %v1055, 4
      %v1058 = vshll.u32 %v762, 16
      %v1060 = vrot.slane %v1058, 5
      %v1061 = vsel %vm767, %v1056, %v1060
      %v1062 = vshrl.u32 %v762, 16
      %v1064 = vrot.slane %v1062, 4
      %v1065 = vor.u32 %v1064, %v1060
      %v1066 = vrot.slane %v1065, 4
      %v1068 = vshll.u32 %v763, 16
      %v1070 = vrot.slane %v1068, 5
      %v1071 = vsel %vm767, %v1066, %v1070
      %v1072 = vshrl.u32 %v763, 16
      %v1074 = vrot.slane %v1072, 4
      %v1075 = vor.u32 %v1074, %v1070
      %v1076 = vrot.slane %v1075, 4
      %v1078 = vshll.u32 %v764, 16
      %v1080 = vrot.slane %v1078, 5
      %v1081 = vsel %vm767, %v1076, %v1080
      %v1082 = vshrl.u32 %v764, 16
      %v1084 = vrot.slane %v1082, 4
      %v1085 = vor.u32 %v1084, %v1080
      %v1086 = vrot.slane %v1085, 4
      %v1087 = vunpack.c.l.b16 %v771
      %v1088 = vunpack.c.h.b16 %v771
      %v1089 = vunpack.c.l.b16 0
      %v1090 = vunpack.c.h.b16 0
      %vm1091 = vcmp.ne.s32.totalorder %v1087, %v1089
      %vm1092 = vcmp.ne.s32.totalorder %v1088, %v1090
      %vm1093 = vmpackc.low %vm1092, %vm1091
      %v1094 = vunpack.c.l.b16 %v781
      %v1095 = vunpack.c.h.b16 %v781
      %v1096 = vunpack.c.l.b16 0
      %v1097 = vunpack.c.h.b16 0
      %vm1098 = vcmp.ne.s32.totalorder %v1094, %v1096
      %vm1099 = vcmp.ne.s32.totalorder %v1095, %v1097
      %vm1100 = vmpackc.low %vm1099, %vm1098
      %v1101 = vunpack.c.l.b16 %v791
      %v1102 = vunpack.c.h.b16 %v791
      %v1103 = vunpack.c.l.b16 0
      %v1104 = vunpack.c.h.b16 0
      %vm1105 = vcmp.ne.s32.totalorder %v1101, %v1103
      %vm1106 = vcmp.ne.s32.totalorder %v1102, %v1104
      %vm1107 = vmpackc.low %vm1106, %vm1105
      %v1108 = vunpack.c.l.b16 %v801
      %v1109 = vunpack.c.h.b16 %v801
      %v1110 = vunpack.c.l.b16 0
      %v1111 = vunpack.c.h.b16 0
      %vm1112 = vcmp.ne.s32.totalorder %v1108, %v1110
      %vm1113 = vcmp.ne.s32.totalorder %v1109, %v1111
      %vm1114 = vmpackc.low %vm1113, %vm1112
      %v1115 = vunpack.c.l.b16 %v811
      %v1116 = vunpack.c.h.b16 %v811
      %v1117 = vunpack.c.l.b16 0
      %v1118 = vunpack.c.h.b16 0
      %vm1119 = vcmp.ne.s32.totalorder %v1115, %v1117
      %vm1120 = vcmp.ne.s32.totalorder %v1116, %v1118
      %vm1121 = vmpackc.low %vm1120, %vm1119
      %v1122 = vunpack.c.l.b16 %v821
      %v1123 = vunpack.c.h.b16 %v821
      %v1124 = vunpack.c.l.b16 0
      %v1125 = vunpack.c.h.b16 0
      %vm1126 = vcmp.ne.s32.totalorder %v1122, %v1124
      %vm1127 = vcmp.ne.s32.totalorder %v1123, %v1125
      %vm1128 = vmpackc.low %vm1127, %vm1126
      %v1129 = vunpack.c.l.b16 %v831
      %v1130 = vunpack.c.h.b16 %v831
      %v1131 = vunpack.c.l.b16 0
      %v1132 = vunpack.c.h.b16 0
      %vm1133 = vcmp.ne.s32.totalorder %v1129, %v1131
      %vm1134 = vcmp.ne.s32.totalorder %v1130, %v1132
      %vm1135 = vmpackc.low %vm1134, %vm1133
      %v1136 = vunpack.c.l.b16 %v841
      %v1137 = vunpack.c.h.b16 %v841
      %v1138 = vunpack.c.l.b16 0
      %v1139 = vunpack.c.h.b16 0
      %vm1140 = vcmp.ne.s32.totalorder %v1136, %v1138
      %vm1141 = vcmp.ne.s32.totalorder %v1137, %v1139
      %vm1142 = vmpackc.low %vm1141, %vm1140
      %v1143 = vunpack.c.l.b16 %v851
      %v1144 = vunpack.c.h.b16 %v851
      %v1145 = vunpack.c.l.b16 0
      %v1146 = vunpack.c.h.b16 0
      %vm1147 = vcmp.ne.s32.totalorder %v1143, %v1145
      %vm1148 = vcmp.ne.s32.totalorder %v1144, %v1146
      %vm1149 = vmpackc.low %vm1148, %vm1147
      %v1150 = vunpack.c.l.b16 %v861
      %v1151 = vunpack.c.h.b16 %v861
      %v1152 = vunpack.c.l.b16 0
      %v1153 = vunpack.c.h.b16 0
      %vm1154 = vcmp.ne.s32.totalorder %v1150, %v1152
      %vm1155 = vcmp.ne.s32.totalorder %v1151, %v1153
      %vm1156 = vmpackc.low %vm1155, %vm1154
      %v1157 = vunpack.c.l.b16 %v871
      %v1158 = vunpack.c.h.b16 %v871
      %v1159 = vunpack.c.l.b16 0
      %v1160 = vunpack.c.h.b16 0
      %vm1161 = vcmp.ne.s32.totalorder %v1157, %v1159
      %vm1162 = vcmp.ne.s32.totalorder %v1158, %v1160
      %vm1163 = vmpackc.low %vm1162, %vm1161
      %v1164 = vunpack.c.l.b16 %v881
      %v1165 = vunpack.c.h.b16 %v881
      %v1166 = vunpack.c.l.b16 0
      %v1167 = vunpack.c.h.b16 0
      %vm1168 = vcmp.ne.s32.totalorder %v1164, %v1166
      %vm1169 = vcmp.ne.s32.totalorder %v1165, %v1167
      %vm1170 = vmpackc.low %vm1169, %vm1168
      %v1171 = vunpack.c.l.b16 %v891
      %v1172 = vunpack.c.h.b16 %v891
      %v1173 = vunpack.c.l.b16 0
      %v1174 = vunpack.c.h.b16 0
      %vm1175 = vcmp.ne.s32.totalorder %v1171, %v1173
      %vm1176 = vcmp.ne.s32.totalorder %v1172, %v1174
      %vm1177 = vmpackc.low %vm1176, %vm1175
      %v1178 = vunpack.c.l.b16 %v901
      %v1179 = vunpack.c.h.b16 %v901
      %v1180 = vunpack.c.l.b16 0
      %v1181 = vunpack.c.h.b16 0
      %vm1182 = vcmp.ne.s32.totalorder %v1178, %v1180
      %vm1183 = vcmp.ne.s32.totalorder %v1179, %v1181
      %vm1184 = vmpackc.low %vm1183, %vm1182
      %v1185 = vunpack.c.l.b16 %v911
      %v1186 = vunpack.c.h.b16 %v911
      %v1187 = vunpack.c.l.b16 0
      %v1188 = vunpack.c.h.b16 0
      %vm1189 = vcmp.ne.s32.totalorder %v1185, %v1187
      %vm1190 = vcmp.ne.s32.totalorder %v1186, %v1188
      %vm1191 = vmpackc.low %vm1190, %vm1189
      %v1192 = vunpack.c.l.b16 %v921
      %v1193 = vunpack.c.h.b16 %v921
      %v1194 = vunpack.c.l.b16 0
      %v1195 = vunpack.c.h.b16 0
      %vm1196 = vcmp.ne.s32.totalorder %v1192, %v1194
      %vm1197 = vcmp.ne.s32.totalorder %v1193, %v1195
      %vm1198 = vmpackc.low %vm1197, %vm1196
      %v1199 = vunpack.c.l.b16 %v931
      %v1200 = vunpack.c.h.b16 %v931
      %v1201 = vunpack.c.l.b16 0
      %v1202 = vunpack.c.h.b16 0
      %vm1203 = vcmp.ne.s32.totalorder %v1199, %v1201
      %vm1204 = vcmp.ne.s32.totalorder %v1200, %v1202
      %vm1205 = vmpackc.low %vm1204, %vm1203
      %v1206 = vunpack.c.l.b16 %v941
      %v1207 = vunpack.c.h.b16 %v941
      %v1208 = vunpack.c.l.b16 0
      %v1209 = vunpack.c.h.b16 0
      %vm1210 = vcmp.ne.s32.totalorder %v1206, %v1208
      %vm1211 = vcmp.ne.s32.totalorder %v1207, %v1209
      %vm1212 = vmpackc.low %vm1211, %vm1210
      %v1213 = vunpack.c.l.b16 %v951
      %v1214 = vunpack.c.h.b16 %v951
      %v1215 = vunpack.c.l.b16 0
      %v1216 = vunpack.c.h.b16 0
      %vm1217 = vcmp.ne.s32.totalorder %v1213, %v1215
      %vm1218 = vcmp.ne.s32.totalorder %v1214, %v1216
      %vm1219 = vmpackc.low %vm1218, %vm1217
      %v1220 = vunpack.c.l.b16 %v961
      %v1221 = vunpack.c.h.b16 %v961
      %v1222 = vunpack.c.l.b16 0
      %v1223 = vunpack.c.h.b16 0
      %vm1224 = vcmp.ne.s32.totalorder %v1220, %v1222
      %vm1225 = vcmp.ne.s32.totalorder %v1221, %v1223
      %vm1226 = vmpackc.low %vm1225, %vm1224
      %v1227 = vunpack.c.l.b16 %v971
      %v1228 = vunpack.c.h.b16 %v971
      %v1229 = vunpack.c.l.b16 0
      %v1230 = vunpack.c.h.b16 0
      %vm1231 = vcmp.ne.s32.totalorder %v1227, %v1229
      %vm1232 = vcmp.ne.s32.totalorder %v1228, %v1230
      %vm1233 = vmpackc.low %vm1232, %vm1231
      %v1234 = vunpack.c.l.b16 %v981
      %v1235 = vunpack.c.h.b16 %v981
      %v1236 = vunpack.c.l.b16 0
      %v1237 = vunpack.c.h.b16 0
      %vm1238 = vcmp.ne.s32.totalorder %v1234, %v1236
      %vm1239 = vcmp.ne.s32.totalorder %v1235, %v1237
      %vm1240 = vmpackc.low %vm1239, %vm1238
      %v1241 = vunpack.c.l.b16 %v991
      %v1242 = vunpack.c.h.b16 %v991
      %v1243 = vunpack.c.l.b16 0
      %v1244 = vunpack.c.h.b16 0
      %vm1245 = vcmp.ne.s32.totalorder %v1241, %v1243
      %vm1246 = vcmp.ne.s32.totalorder %v1242, %v1244
      %vm1247 = vmpackc.low %vm1246, %vm1245
      %v1248 = vunpack.c.l.b16 %v1001
      %v1249 = vunpack.c.h.b16 %v1001
      %v1250 = vunpack.c.l.b16 0
      %v1251 = vunpack.c.h.b16 0
      %vm1252 = vcmp.ne.s32.totalorder %v1248, %v1250
      %vm1253 = vcmp.ne.s32.totalorder %v1249, %v1251
      %vm1254 = vmpackc.low %vm1253, %vm1252
      %v1255 = vunpack.c.l.b16 %v1011
      %v1256 = vunpack.c.h.b16 %v1011
      %v1257 = vunpack.c.l.b16 0
      %v1258 = vunpack.c.h.b16 0
      %vm1259 = vcmp.ne.s32.totalorder %v1255, %v1257
      %vm1260 = vcmp.ne.s32.totalorder %v1256, %v1258
      %vm1261 = vmpackc.low %vm1260, %vm1259
      %v1262 = vunpack.c.l.b16 %v1021
      %v1263 = vunpack.c.h.b16 %v1021
      %v1264 = vunpack.c.l.b16 0
      %v1265 = vunpack.c.h.b16 0
      %vm1266 = vcmp.ne.s32.totalorder %v1262, %v1264
      %vm1267 = vcmp.ne.s32.totalorder %v1263, %v1265
      %vm1268 = vmpackc.low %vm1267, %vm1266
      %v1269 = vunpack.c.l.b16 %v1031
      %v1270 = vunpack.c.h.b16 %v1031
      %v1271 = vunpack.c.l.b16 0
      %v1272 = vunpack.c.h.b16 0
      %vm1273 = vcmp.ne.s32.totalorder %v1269, %v1271
      %vm1274 = vcmp.ne.s32.totalorder %v1270, %v1272
      %vm1275 = vmpackc.low %vm1274, %vm1273
      %v1276 = vunpack.c.l.b16 %v1041
      %v1277 = vunpack.c.h.b16 %v1041
      %v1278 = vunpack.c.l.b16 0
      %v1279 = vunpack.c.h.b16 0
      %vm1280 = vcmp.ne.s32.totalorder %v1276, %v1278
      %vm1281 = vcmp.ne.s32.totalorder %v1277, %v1279
      %vm1282 = vmpackc.low %vm1281, %vm1280
      %v1283 = vunpack.c.l.b16 %v1051
      %v1284 = vunpack.c.h.b16 %v1051
      %v1285 = vunpack.c.l.b16 0
      %v1286 = vunpack.c.h.b16 0
      %vm1287 = vcmp.ne.s32.totalorder %v1283, %v1285
      %vm1288 = vcmp.ne.s32.totalorder %v1284, %v1286
      %vm1289 = vmpackc.low %vm1288, %vm1287
      %v1290 = vunpack.c.l.b16 %v1061
      %v1291 = vunpack.c.h.b16 %v1061
      %v1292 = vunpack.c.l.b16 0
      %v1293 = vunpack.c.h.b16 0
      %vm1294 = vcmp.ne.s32.totalorder %v1290, %v1292
      %vm1295 = vcmp.ne.s32.totalorder %v1291, %v1293
      %vm1296 = vmpackc.low %vm1295, %vm1294
      %v1297 = vunpack.c.l.b16 %v1071
      %v1298 = vunpack.c.h.b16 %v1071
      %v1299 = vunpack.c.l.b16 0
      %v1300 = vunpack.c.h.b16 0
      %vm1301 = vcmp.ne.s32.totalorder %v1297, %v1299
      %vm1302 = vcmp.ne.s32.totalorder %v1298, %v1300
      %vm1303 = vmpackc.low %vm1302, %vm1301
      %v1304 = vunpack.c.l.b16 %v1081
      %v1305 = vunpack.c.h.b16 %v1081
      %v1306 = vunpack.c.l.b16 0
      %v1307 = vunpack.c.h.b16 0
      %vm1308 = vcmp.ne.s32.totalorder %v1304, %v1306
      %vm1309 = vcmp.ne.s32.totalorder %v1305, %v1307
      %vm1310 = vmpackc.low %vm1309, %vm1308
      %v1311 = vunpack.c.l.b16 %v1086
      %v1312 = vunpack.c.h.b16 %v1086
      %v1313 = vunpack.c.l.b16 0
      %v1314 = vunpack.c.h.b16 0
      %vm1315 = vcmp.ne.s32.totalorder %v1311, %v1313
      %vm1316 = vcmp.ne.s32.totalorder %v1312, %v1314
      %vm1317 = vmpackc.low %vm1316, %vm1315
      %v1318 = vsel %vm1093, 0, %v508
      %v1319 = vsel %vm1100, 0, %v509
      %v1320 = vsel %vm1107, 0, %v510
      %v1321 = vsel %vm1114, 0, %v511
      %v1322 = vsel %vm1121, 0, %v512
      %v1323 = vsel %vm1128, 0, %v513
      %v1324 = vsel %vm1135, 0, %v514
      %v1325 = vsel %vm1142, 0, %v515
      %v1326 = vsel %vm1149, 0, %v516
      %v1327 = vsel %vm1156, 0, %v517
      %v1328 = vsel %vm1163, 0, %v518
      %v1329 = vsel %vm1170, 0, %v519
      %v1330 = vsel %vm1177, 0, %v520
      %v1331 = vsel %vm1184, 0, %v521
      %v1332 = vsel %vm1191, 0, %v522
      %v1333 = vsel %vm1198, 0, %v523
      %v1334 = vsel %vm1205, 0, %v524
      %v1335 = vsel %vm1212, 0, %v525
      %v1336 = vsel %vm1219, 0, %v526
      %v1337 = vsel %vm1226, 0, %v527
      %v1338 = vsel %vm1233, 0, %v528
      %v1339 = vsel %vm1240, 0, %v529
      %v1340 = vsel %vm1247, 0, %v530
      %v1341 = vsel %vm1254, 0, %v531
      %v1342 = vsel %vm1261, 0, %v532
      %v1343 = vsel %vm1268, 0, %v533
      %v1344 = vsel %vm1275, 0, %v534
      %v1345 = vsel %vm1282, 0, %v535
      %v1346 = vsel %vm1289, 0, %v536
      %v1347 = vsel %vm1296, 0, %v537
      %v1348 = vsel %vm1303, 0, %v538
      %v1349 = vsel %vm1310, 0, %v539
      %v1350 = vsel %vm1317, 0, %v540
      %v1351 = vld [vmem:[%s3] sm:$0x3]
      %s1352 = scalar_lea.vmem %s3, 2
      %v1353 = vld [vmem:[%s1352] sm:$0x3]
      %v1386 = vunpack.c.l.b16 %v509
      %v1387 = vunpack.c.l.b16 %v510
      %v1388 = vunpack.c.l.b16 %v511
      %v1389 = vunpack.c.l.b16 %v512
      %v1390 = vunpack.c.l.b16 %v513
      %v1391 = vunpack.c.l.b16 %v514
      %v1392 = vunpack.c.l.b16 %v515
      %v1393 = vunpack.c.l.b16 %v516
      %v1394 = vunpack.c.l.b16 %v517
      %v1395 = vunpack.c.l.b16 %v518
      %v1396 = vunpack.c.l.b16 %v519
      %v1397 = vunpack.c.l.b16 %v520
      %v1398 = vunpack.c.l.b16 %v521
      %v1399 = vunpack.c.l.b16 %v522
      %v1400 = vunpack.c.l.b16 %v523
      %v1401 = vunpack.c.l.b16 %v524
      %v1402 = vunpack.c.l.b16 %v525
      %v1403 = vunpack.c.l.b16 %v526
      %v1404 = vunpack.c.l.b16 %v527
      %v1405 = vunpack.c.l.b16 %v528
      %v1406 = vunpack.c.l.b16 %v529
      %v1407 = vunpack.c.l.b16 %v530
      %v1408 = vunpack.c.l.b16 %v531
      %v1409 = vunpack.c.l.b16 %v532
      %v1410 = vunpack.c.l.b16 %v533
      %v1411 = vunpack.c.l.b16 %v534
      %v1412 = vunpack.c.l.b16 %v535
      %v1413 = vunpack.c.l.b16 %v536
      %v1414 = vunpack.c.l.b16 %v537
      %v1415 = vunpack.c.l.b16 %v538
      %v1416 = vunpack.c.l.b16 %v539
      %v1417 = vunpack.c.l.b16 %v540
      %v1418 = vpack.c.b16 %v1387, %v1386
      %v1419 = vpack.c.b16 %v1389, %v1388
      %v1420 = vpack.c.b16 %v1391, %v1390
      %v1421 = vpack.c.b16 %v1393, %v1392
      %v1422 = vpack.c.b16 %v1395, %v1394
      %v1423 = vpack.c.b16 %v1397, %v1396
      %v1424 = vpack.c.b16 %v1399, %v1398
      %v1425 = vpack.c.b16 %v1401, %v1400
      %v1426 = vpack.c.b16 %v1403, %v1402
      %v1427 = vpack.c.b16 %v1405, %v1404
      %v1428 = vpack.c.b16 %v1407, %v1406
      %v1429 = vpack.c.b16 %v1409, %v1408
      %v1430 = vpack.c.b16 %v1411, %v1410
      %v1431 = vpack.c.b16 %v1413, %v1412
      %v1432 = vpack.c.b16 %v1415, %v1414
      %v1433 = vpack.c.b16 %v1417, %v1416
      %vm1434 = vcmask 31744
      %v1436 = vsel %vm1434, %v1418, 0
      %v1439 = vsel %vm1434, %v1419, 0
      %v1442 = vsel %vm1434, %v1420, 0
      %v1445 = vsel %vm1434, %v1421, 0
      %v1448 = vsel %vm1434, %v1422, 0
      %v1451 = vsel %vm1434, %v1423, 0
      %v1454 = vsel %vm1434, %v1424, 0
      %v1457 = vsel %vm1434, %v1425, 0
      %v1460 = vsel %vm1434, %v1426, 0
      %v1463 = vsel %vm1434, %v1427, 0
      %v1466 = vsel %vm1434, %v1428, 0
      %v1469 = vsel %vm1434, %v1429, 0
      %v1472 = vsel %vm1434, %v1430, 0
      %v1475 = vsel %vm1434, %v1431, 0
      %v1478 = vsel %vm1434, %v1432, 0
      %v1481 = vsel %vm1434, %v1433, 0
      %vm1483 = vcmask 1041408
      %v1485 = vsel %vm1483, %v1353, 0
      %1487 = vmatpush.bf16.msra.mxu0 0
      %1488 = vmatpush.bf16.msra.mxu0 0
      %1489 = vmatpush.bf16.msra.mxu0 0
      %1490 = vmatpush.bf16.msra.mxu0 0
      %1491 = vmatpush.bf16.msra.mxu0 0
      %1492 = vmatpush.bf16.msra.mxu0 0
      %1493 = vmatpush.bf16.msra.mxu0 0
      %1494 = vmatpush.bf16.msra.mxu0 %v1485
      %1495 = vmatmul.bf16.gmra.mxu0 %v1436
      %v1496 = vpop.f32.mrf.mxu0
      %v1497 = vadd.f32 0.0, %v1496
      %v1498 = vpop.f32.mrf.mxu0
      %v1499 = vadd.f32 0.0, %v1498
      %1500 = vmatmul.bf16.gmra.mxu0 %v1439
      %v1501 = vpop.f32.mrf.mxu0
      %v1502 = vadd.f32 0.0, %v1501
      %v1503 = vpop.f32.mrf.mxu0
      %v1504 = vadd.f32 0.0, %v1503
      %1505 = vmatmul.bf16.gmra.mxu0 %v1442
      %v1506 = vpop.f32.mrf.mxu0
      %v1507 = vadd.f32 0.0, %v1506
      %v1508 = vpop.f32.mrf.mxu0
      %v1509 = vadd.f32 0.0, %v1508
      %1510 = vmatmul.bf16.gmra.mxu0 %v1445
      %v1511 = vpop.f32.mrf.mxu0
      %v1512 = vadd.f32 0.0, %v1511
      %v1513 = vpop.f32.mrf.mxu0
      %v1514 = vadd.f32 0.0, %v1513
      %1515 = vmatmul.bf16.gmra.mxu0 %v1448
      %v1516 = vpop.f32.mrf.mxu0
      %v1517 = vadd.f32 0.0, %v1516
      %v1518 = vpop.f32.mrf.mxu0
      %v1519 = vadd.f32 0.0, %v1518
      %1520 = vmatmul.bf16.gmra.mxu0 %v1451
      %v1521 = vpop.f32.mrf.mxu0
      %v1522 = vadd.f32 0.0, %v1521
      %v1523 = vpop.f32.mrf.mxu0
      %v1524 = vadd.f32 0.0, %v1523
      %1525 = vmatmul.bf16.gmra.mxu0 %v1454
      %v1526 = vpop.f32.mrf.mxu0
      %v1527 = vadd.f32 0.0, %v1526
      %v1528 = vpop.f32.mrf.mxu0
      %v1529 = vadd.f32 0.0, %v1528
      %1530 = vmatmul.bf16.gmra.mxu0 %v1457
      %v1531 = vpop.f32.mrf.mxu0
      %v1532 = vadd.f32 0.0, %v1531
      %v1533 = vpop.f32.mrf.mxu0
      %v1534 = vadd.f32 0.0, %v1533
      %1535 = vmatmul.bf16.gmra.mxu0 %v1460
      %v1536 = vpop.f32.mrf.mxu0
      %v1537 = vadd.f32 0.0, %v1536
      %v1538 = vpop.f32.mrf.mxu0
      %v1539 = vadd.f32 0.0, %v1538
      %1540 = vmatmul.bf16.gmra.mxu0 %v1463
      %v1541 = vpop.f32.mrf.mxu0
      %v1542 = vadd.f32 0.0, %v1541
      %v1543 = vpop.f32.mrf.mxu0
      %v1544 = vadd.f32 0.0, %v1543
      %1545 = vmatmul.bf16.gmra.mxu0 %v1466
      %v1546 = vpop.f32.mrf.mxu0
      %v1547 = vadd.f32 0.0, %v1546
      %v1548 = vpop.f32.mrf.mxu0
      %v1549 = vadd.f32 0.0, %v1548
      %1550 = vmatmul.bf16.gmra.mxu0 %v1469
      %v1551 = vpop.f32.mrf.mxu0
      %v1552 = vadd.f32 0.0, %v1551
      %v1553 = vpop.f32.mrf.mxu0
      %v1554 = vadd.f32 0.0, %v1553
      %1555 = vmatmul.bf16.gmra.mxu0 %v1472
      %v1556 = vpop.f32.mrf.mxu0
      %v1557 = vadd.f32 0.0, %v1556
      %v1558 = vpop.f32.mrf.mxu0
      %v1559 = vadd.f32 0.0, %v1558
      %1560 = vmatmul.bf16.gmra.mxu0 %v1475
      %v1561 = vpop.f32.mrf.mxu0
      %v1562 = vadd.f32 0.0, %v1561
      %v1563 = vpop.f32.mrf.mxu0
      %v1564 = vadd.f32 0.0, %v1563
      %1565 = vmatmul.bf16.gmra.mxu0 %v1478
      %v1566 = vpop.f32.mrf.mxu0
      %v1567 = vadd.f32 0.0, %v1566
      %v1568 = vpop.f32.mrf.mxu0
      %v1569 = vadd.f32 0.0, %v1568
      %1570 = vmatmul.bf16.gmra.mxu0 %v1481
      %v1571 = vpop.f32.mrf.mxu0
      %v1572 = vadd.f32 0.0, %v1571
      %v1573 = vpop.f32.mrf.mxu0
      %v1574 = vadd.f32 0.0, %v1573
      %1575 = vdwg.mxu0
      %v1609 = vunpack.c.l.b16 %v1318
      %v1610 = vunpack.c.l.b16 %v1319
      %v1611 = vunpack.c.l.b16 %v1320
      %v1612 = vunpack.c.l.b16 %v1321
      %v1613 = vunpack.c.l.b16 %v1322
      %v1614 = vunpack.c.l.b16 %v1323
      %v1615 = vunpack.c.l.b16 %v1324
      %v1616 = vunpack.c.l.b16 %v1325
      %v1617 = vunpack.c.l.b16 %v1326
      %v1618 = vunpack.c.l.b16 %v1327
      %v1619 = vunpack.c.l.b16 %v1328
      %v1620 = vunpack.c.l.b16 %v1329
      %v1621 = vunpack.c.l.b16 %v1330
      %v1622 = vunpack.c.l.b16 %v1331
      %v1623 = vunpack.c.l.b16 %v1332
      %v1624 = vunpack.c.l.b16 %v1333
      %v1625 = vunpack.c.l.b16 %v1334
      %v1626 = vunpack.c.l.b16 %v1335
      %v1627 = vunpack.c.l.b16 %v1336
      %v1628 = vunpack.c.l.b16 %v1337
      %v1629 = vunpack.c.l.b16 %v1338
      %v1630 = vunpack.c.l.b16 %v1339
      %v1631 = vunpack.c.l.b16 %v1340
      %v1632 = vunpack.c.l.b16 %v1341
      %v1633 = vunpack.c.l.b16 %v1342
      %v1634 = vunpack.c.l.b16 %v1343
      %v1635 = vunpack.c.l.b16 %v1344
      %v1636 = vunpack.c.l.b16 %v1345
      %v1637 = vunpack.c.l.b16 %v1346
      %v1638 = vunpack.c.l.b16 %v1347
      %v1639 = vunpack.c.l.b16 %v1348
      %v1640 = vunpack.c.l.b16 %v1349
      %v1641 = vunpack.c.l.b16 %v1350
      %v1642 = vpack.c.b16 %v1610, %v1609
      %v1643 = vpack.c.b16 %v1612, %v1611
      %v1644 = vpack.c.b16 %v1614, %v1613
      %v1645 = vpack.c.b16 %v1616, %v1615
      %v1646 = vpack.c.b16 %v1618, %v1617
      %v1647 = vpack.c.b16 %v1620, %v1619
      %v1648 = vpack.c.b16 %v1622, %v1621
      %v1649 = vpack.c.b16 %v1624, %v1623
      %v1650 = vpack.c.b16 %v1626, %v1625
      %v1651 = vpack.c.b16 %v1628, %v1627
      %v1652 = vpack.c.b16 %v1630, %v1629
      %v1653 = vpack.c.b16 %v1632, %v1631
      %v1654 = vpack.c.b16 %v1634, %v1633
      %v1655 = vpack.c.b16 %v1636, %v1635
      %v1656 = vpack.c.b16 %v1638, %v1637
      %v1657 = vpack.c.b16 %v1640, %v1639
      %v1658 = vpack.c.b16 %v1641, %v1641
      %vm1659 = vsmask.f32 4352
      %v1661 = vshrl.u32 %v1642, 16
      %v1663 = vrot.slane %v1661, 3
      %v1664 = vshll.u32 %v1642, 16
      %v1666 = vrot.slane %v1664, 4
      %v1667 = vor.u32 %v1663, %v1666
      %v1669 = vshrl.u32 %v1643, 16
      %v1671 = vrot.slane %v1669, 3
      %v1672 = vshll.u32 %v1643, 16
      %v1674 = vrot.slane %v1672, 4
      %v1675 = vor.u32 %v1671, %v1674
      %v1676 = vsel %vm1659, %v1667, %v1675
      %v1678 = vshrl.u32 %v1644, 16
      %v1680 = vrot.slane %v1678, 3
      %v1681 = vshll.u32 %v1644, 16
      %v1683 = vrot.slane %v1681, 4
      %v1684 = vor.u32 %v1680, %v1683
      %v1685 = vsel %vm1659, %v1675, %v1684
      %v1687 = vshrl.u32 %v1645, 16
      %v1689 = vrot.slane %v1687, 3
      %v1690 = vshll.u32 %v1645, 16
      %v1692 = vrot.slane %v1690, 4
      %v1693 = vor.u32 %v1689, %v1692
      %v1694 = vsel %vm1659, %v1684, %v1693
      %v1696 = vshrl.u32 %v1646, 16
      %v1698 = vrot.slane %v1696, 3
      %v1699 = vshll.u32 %v1646, 16
      %v1701 = vrot.slane %v1699, 4
      %v1702 = vor.u32 %v1698, %v1701
      %v1703 = vsel %vm1659, %v1693, %v1702
      %v1705 = vshrl.u32 %v1647, 16
      %v1707 = vrot.slane %v1705, 3
      %v1708 = vshll.u32 %v1647, 16
      %v1710 = vrot.slane %v1708, 4
      %v1711 = vor.u32 %v1707, %v1710
      %v1712 = vsel %vm1659, %v1702, %v1711
      %v1714 = vshrl.u32 %v1648, 16
      %v1716 = vrot.slane %v1714, 3
      %v1717 = vshll.u32 %v1648, 16
      %v1719 = vrot.slane %v1717, 4
      %v1720 = vor.u32 %v1716, %v1719
      %v1721 = vsel %vm1659, %v1711, %v1720
      %v1723 = vshrl.u32 %v1649, 16
      %v1725 = vrot.slane %v1723, 3
      %v1726 = vshll.u32 %v1649, 16
      %v1728 = vrot.slane %v1726, 4
      %v1729 = vor.u32 %v1725, %v1728
      %v1730 = vsel %vm1659, %v1720, %v1729
      %v1732 = vshrl.u32 %v1650, 16
      %v1734 = vrot.slane %v1732, 3
      %v1735 = vshll.u32 %v1650, 16
      %v1737 = vrot.slane %v1735, 4
      %v1738 = vor.u32 %v1734, %v1737
      %v1739 = vsel %vm1659, %v1729, %v1738
      %v1741 = vshrl.u32 %v1651, 16
      %v1743 = vrot.slane %v1741, 3
      %v1744 = vshll.u32 %v1651, 16
      %v1746 = vrot.slane %v1744, 4
      %v1747 = vor.u32 %v1743, %v1746
      %v1748 = vsel %vm1659, %v1738, %v1747
      %v1750 = vshrl.u32 %v1652, 16
      %v1752 = vrot.slane %v1750, 3
      %v1753 = vshll.u32 %v1652, 16
      %v1755 = vrot.slane %v1753, 4
      %v1756 = vor.u32 %v1752, %v1755
      %v1757 = vsel %vm1659, %v1747, %v1756
      %v1759 = vshrl.u32 %v1653, 16
      %v1761 = vrot.slane %v1759, 3
      %v1762 = vshll.u32 %v1653, 16
      %v1764 = vrot.slane %v1762, 4
      %v1765 = vor.u32 %v1761, %v1764
      %v1766 = vsel %vm1659, %v1756, %v1765
      %v1768 = vshrl.u32 %v1654, 16
      %v1770 = vrot.slane %v1768, 3
      %v1771 = vshll.u32 %v1654, 16
      %v1773 = vrot.slane %v1771, 4
      %v1774 = vor.u32 %v1770, %v1773
      %v1775 = vsel %vm1659, %v1765, %v1774
      %v1777 = vshrl.u32 %v1655, 16
      %v1779 = vrot.slane %v1777, 3
      %v1780 = vshll.u32 %v1655, 16
      %v1782 = vrot.slane %v1780, 4
      %v1783 = vor.u32 %v1779, %v1782
      %v1784 = vsel %vm1659, %v1774, %v1783
      %v1786 = vshrl.u32 %v1656, 16
      %v1788 = vrot.slane %v1786, 3
      %v1789 = vshll.u32 %v1656, 16
      %v1791 = vrot.slane %v1789, 4
      %v1792 = vor.u32 %v1788, %v1791
      %v1793 = vsel %vm1659, %v1783, %v1792
      %v1795 = vshrl.u32 %v1657, 16
      %v1797 = vrot.slane %v1795, 3
      %v1798 = vshll.u32 %v1657, 16
      %v1800 = vrot.slane %v1798, 4
      %v1801 = vor.u32 %v1797, %v1800
      %v1802 = vsel %vm1659, %v1792, %v1801
      %v1804 = vshrl.u32 %v1658, 16
      %v1806 = vrot.slane %v1804, 3
      %v1807 = vshll.u32 %v1658, 16
      %v1809 = vrot.slane %v1807, 4
      %v1810 = vor.u32 %v1806, %v1809
      %v1811 = vsel %vm1659, %v1801, %v1810
      %v1813 = vsel %vm1434, %v1676, 0
      %v1816 = vsel %vm1434, %v1685, 0
      %v1819 = vsel %vm1434, %v1694, 0
      %v1822 = vsel %vm1434, %v1703, 0
      %v1825 = vsel %vm1434, %v1712, 0
      %v1828 = vsel %vm1434, %v1721, 0
      %v1831 = vsel %vm1434, %v1730, 0
      %v1834 = vsel %vm1434, %v1739, 0
      %v1837 = vsel %vm1434, %v1748, 0
      %v1840 = vsel %vm1434, %v1757, 0
      %v1843 = vsel %vm1434, %v1766, 0
      %v1846 = vsel %vm1434, %v1775, 0
      %v1849 = vsel %vm1434, %v1784, 0
      %v1852 = vsel %vm1434, %v1793, 0
      %v1855 = vsel %vm1434, %v1802, 0
      %v1858 = vsel %vm1434, %v1811, 0
      %v1861 = vsel %vm1483, %v1351, 0
      %1863 = vmatpush.bf16.msra.mxu0 0
      %1864 = vmatpush.bf16.msra.mxu0 0
      %1865 = vmatpush.bf16.msra.mxu0 0
      %1866 = vmatpush.bf16.msra.mxu0 0
      %1867 = vmatpush.bf16.msra.mxu0 0
      %1868 = vmatpush.bf16.msra.mxu0 0
      %1869 = vmatpush.bf16.msra.mxu0 0
      %1870 = vmatpush.bf16.msra.mxu0 %v1861
      %1871 = vmatmul.bf16.gmra.mxu0 %v1813
      %v1872 = vpop.f32.mrf.mxu0
      %v1873 = vadd.f32 %v1497, %v1872
      %v1874 = vpop.f32.mrf.mxu0
      %v1875 = vadd.f32 %v1499, %v1874
      %1876 = vmatmul.bf16.gmra.mxu0 %v1816
      %v1877 = vpop.f32.mrf.mxu0
      %v1878 = vadd.f32 %v1502, %v1877
      %v1879 = vpop.f32.mrf.mxu0
      %v1880 = vadd.f32 %v1504, %v1879
      %1881 = vmatmul.bf16.gmra.mxu0 %v1819
      %v1882 = vpop.f32.mrf.mxu0
      %v1883 = vadd.f32 %v1507, %v1882
      %v1884 = vpop.f32.mrf.mxu0
      %v1885 = vadd.f32 %v1509, %v1884
      %1886 = vmatmul.bf16.gmra.mxu0 %v1822
      %v1887 = vpop.f32.mrf.mxu0
      %v1888 = vadd.f32 %v1512, %v1887
      %v1889 = vpop.f32.mrf.mxu0
      %v1890 = vadd.f32 %v1514, %v1889
      %1891 = vmatmul.bf16.gmra.mxu0 %v1825
      %v1892 = vpop.f32.mrf.mxu0
      %v1893 = vadd.f32 %v1517, %v1892
      %v1894 = vpop.f32.mrf.mxu0
      %v1895 = vadd.f32 %v1519, %v1894
      %1896 = vmatmul.bf16.gmra.mxu0 %v1828
      %v1897 = vpop.f32.mrf.mxu0
      %v1898 = vadd.f32 %v1522, %v1897
      %v1899 = vpop.f32.mrf.mxu0
      %v1900 = vadd.f32 %v1524, %v1899
      %1901 = vmatmul.bf16.gmra.mxu0 %v1831
      %v1902 = vpop.f32.mrf.mxu0
      %v1903 = vadd.f32 %v1527, %v1902
      %v1904 = vpop.f32.mrf.mxu0
      %v1905 = vadd.f32 %v1529, %v1904
      %1906 = vmatmul.bf16.gmra.mxu0 %v1834
      %v1907 = vpop.f32.mrf.mxu0
      %v1908 = vadd.f32 %v1532, %v1907
      %v1909 = vpop.f32.mrf.mxu0
      %v1910 = vadd.f32 %v1534, %v1909
      %1911 = vmatmul.bf16.gmra.mxu0 %v1837
      %v1912 = vpop.f32.mrf.mxu0
      %v1913 = vadd.f32 %v1537, %v1912
      %v1914 = vpop.f32.mrf.mxu0
      %v1915 = vadd.f32 %v1539, %v1914
      %1916 = vmatmul.bf16.gmra.mxu0 %v1840
      %v1917 = vpop.f32.mrf.mxu0
      %v1918 = vadd.f32 %v1542, %v1917
      %v1919 = vpop.f32.mrf.mxu0
      %v1920 = vadd.f32 %v1544, %v1919
      %1921 = vmatmul.bf16.gmra.mxu0 %v1843
      %v1922 = vpop.f32.mrf.mxu0
      %v1923 = vadd.f32 %v1547, %v1922
      %v1924 = vpop.f32.mrf.mxu0
      %v1925 = vadd.f32 %v1549, %v1924
      %1926 = vmatmul.bf16.gmra.mxu0 %v1846
      %v1927 = vpop.f32.mrf.mxu0
      %v1928 = vadd.f32 %v1552, %v1927
      %v1929 = vpop.f32.mrf.mxu0
      %v1930 = vadd.f32 %v1554, %v1929
      %1931 = vmatmul.bf16.gmra.mxu0 %v1849
      %v1932 = vpop.f32.mrf.mxu0
      %v1933 = vadd.f32 %v1557, %v1932
      %v1934 = vpop.f32.mrf.mxu0
      %v1935 = vadd.f32 %v1559, %v1934
      %1936 = vmatmul.bf16.gmra.mxu0 %v1852
      %v1937 = vpop.f32.mrf.mxu0
      %v1938 = vadd.f32 %v1562, %v1937
      %v1939 = vpop.f32.mrf.mxu0
      %v1940 = vadd.f32 %v1564, %v1939
      %1941 = vmatmul.bf16.gmra.mxu0 %v1855
      %v1942 = vpop.f32.mrf.mxu0
      %v1943 = vadd.f32 %v1567, %v1942
      %v1944 = vpop.f32.mrf.mxu0
      %v1945 = vadd.f32 %v1569, %v1944
      %1946 = vmatmul.bf16.gmra.mxu0 %v1858
      %v1947 = vpop.f32.mrf.mxu0
      %v1948 = vadd.f32 %v1572, %v1947
      %v1949 = vpop.f32.mrf.mxu0
      %v1950 = vadd.f32 %v1574, %v1949
      %1951 = vdwg.mxu0
      %v1952 = vld [vmem:[#allocation2 + $0x4] sm:$0xf]
      %v1953 = vld [vmem:[#allocation2 + $0x8] sm:$0xf]
      %v1954 = vld [vmem:[#allocation2 + $0xc] sm:$0xf]
      %v1955 = vld [vmem:[#allocation2 + $0x10] sm:$0xf]
      %v1956 = vld [vmem:[#allocation2 + $0x14] sm:$0xf]
      %v1957 = vld [vmem:[#allocation2 + $0x18] sm:$0xf]
      %v1958 = vld [vmem:[#allocation2 + $0x1c] sm:$0xf]
      %v1959 = vld [vmem:[#allocation2 + $0x20] sm:$0xf]
      %v1960 = vld [vmem:[#allocation2 + $0x24] sm:$0xf]
      %v1961 = vld [vmem:[#allocation2 + $0x28] sm:$0xf]
      %v1962 = vld [vmem:[#allocation2 + $0x2c] sm:$0xf]
      %v1963 = vld [vmem:[#allocation2 + $0x30] sm:$0xf]
      %v1964 = vld [vmem:[#allocation2 + $0x34] sm:$0xf]
      %v1965 = vld [vmem:[#allocation2 + $0x38] sm:$0xf]
      %v1966 = vld [vmem:[#allocation2 + $0x3c] sm:$0xf]
      %v1967 = vld [vmem:[#allocation2 + $0x40] sm:$0xf]
      %v1968 = vld [vmem:[#allocation2 + $0x44] sm:$0xf]
      %v1969 = vld [vmem:[#allocation2 + $0x48] sm:$0xf]
      %v1970 = vld [vmem:[#allocation2 + $0x4c] sm:$0xf]
      %v1971 = vld [vmem:[#allocation2 + $0x50] sm:$0xf]
      %v1972 = vld [vmem:[#allocation2 + $0x54] sm:$0xf]
      %v1973 = vld [vmem:[#allocation2 + $0x58] sm:$0xf]
      %v1974 = vld [vmem:[#allocation2 + $0x5c] sm:$0xf]
      %v1975 = vld [vmem:[#allocation2 + $0x60] sm:$0xf]
      %v1976 = vld [vmem:[#allocation2 + $0x64] sm:$0xf]
      %v1977 = vld [vmem:[#allocation2 + $0x68] sm:$0xf]
      %v1978 = vld [vmem:[#allocation2 + $0x6c] sm:$0xf]
      %v1979 = vld [vmem:[#allocation2 + $0x70] sm:$0xf]
      %v1980 = vld [vmem:[#allocation2 + $0x74] sm:$0xf]
      %v1981 = vld [vmem:[#allocation2 + $0x78] sm:$0xf]
      %v1982 = vld [vmem:[#allocation2 + $0x7c] sm:$0xf]
      %v1983 = vld [vmem:[#allocation2 + $0x80] sm:$0xf]
      %v1984 = vld [vmem:[#allocation2 + $0x84] sm:$0x1]
      %v1985 = vsel %vm476, 1, 0
      %v1986 = vsel %vm477, 1, 0
      %v1987 = vsel %vm478, 1, 0
      %v1988 = vsel %vm479, 1, 0
      %v1989 = vsel %vm480, 1, 0
      %v1990 = vsel %vm481, 1, 0
      %v1991 = vsel %vm482, 1, 0
      %v1992 = vsel %vm483, 1, 0
      %v1993 = vsel %vm484, 1, 0
      %v1994 = vsel %vm485, 1, 0
      %v1995 = vsel %vm486, 1, 0
      %v1996 = vsel %vm487, 1, 0
      %v1997 = vsel %vm488, 1, 0
      %v1998 = vsel %vm489, 1, 0
      %v1999 = vsel %vm490, 1, 0
      %v2000 = vsel %vm491, 1, 0
      %v2001 = vsel %vm492, 1, 0
      %v2002 = vsel %vm493, 1, 0
      %v2003 = vsel %vm494, 1, 0
      %v2004 = vsel %vm495, 1, 0
      %v2005 = vsel %vm496, 1, 0
      %v2006 = vsel %vm497, 1, 0
      %v2007 = vsel %vm498, 1, 0
      %v2008 = vsel %vm499, 1, 0
      %v2009 = vsel %vm500, 1, 0
      %v2010 = vsel %vm501, 1, 0
      %v2011 = vsel %vm502, 1, 0
      %v2012 = vsel %vm503, 1, 0
      %v2013 = vsel %vm504, 1, 0
      %v2014 = vsel %vm505, 1, 0
      %v2015 = vsel %vm506, 1, 0
      %v2016 = vsel %vm507, 1, 0
      %2017 = vset.pattern.permute.xlu0 0
      %2018 = vperm.xlu0 %2017, %v1985
      %v2019 = vpop.permute.xlu0 %2018
      %2020 = vset.pattern.permute.xlu0 0
      %2021 = vperm.xlu0 %2020, %v1986
      %v2022 = vpop.permute.xlu0 %2021
      %2023 = vset.pattern.permute.xlu0 0
      %2024 = vperm.xlu0 %2023, %v1987
      %v2025 = vpop.permute.xlu0 %2024
      %2026 = vset.pattern.permute.xlu0 0
      %2027 = vperm.xlu0 %2026, %v1988
      %v2028 = vpop.permute.xlu0 %2027
      %2029 = vset.pattern.permute.xlu0 0
      %2030 = vperm.xlu0 %2029, %v1989
      %v2031 = vpop.permute.xlu0 %2030
      %2032 = vset.pattern.permute.xlu0 0
      %2033 = vperm.xlu0 %2032, %v1990
      %v2034 = vpop.permute.xlu0 %2033
      %2035 = vset.pattern.permute.xlu0 0
      %2036 = vperm.xlu0 %2035, %v1991
      %v2037 = vpop.permute.xlu0 %2036
      %2038 = vset.pattern.permute.xlu0 0
      %2039 = vperm.xlu0 %2038, %v1992
      %v2040 = vpop.permute.xlu0 %2039
      %2041 = vset.pattern.permute.xlu0 0
      %2042 = vperm.xlu0 %2041, %v1993
      %v2043 = vpop.permute.xlu0 %2042
      %2044 = vset.pattern.permute.xlu0 0
      %2045 = vperm.xlu0 %2044, %v1994
      %v2046 = vpop.permute.xlu0 %2045
      %2047 = vset.pattern.permute.xlu0 0
      %2048 = vperm.xlu0 %2047, %v1995
      %v2049 = vpop.permute.xlu0 %2048
      %2050 = vset.pattern.permute.xlu0 0
      %2051 = vperm.xlu0 %2050, %v1996
      %v2052 = vpop.permute.xlu0 %2051
      %2053 = vset.pattern.permute.xlu0 0
      %2054 = vperm.xlu0 %2053, %v1997
      %v2055 = vpop.permute.xlu0 %2054
      %2056 = vset.pattern.permute.xlu0 0
      %2057 = vperm.xlu0 %2056, %v1998
      %v2058 = vpop.permute.xlu0 %2057
      %2059 = vset.pattern.permute.xlu0 0
      %2060 = vperm.xlu0 %2059, %v1999
      %v2061 = vpop.permute.xlu0 %2060
      %2062 = vset.pattern.permute.xlu0 0
      %2063 = vperm.xlu0 %2062, %v2000
      %v2064 = vpop.permute.xlu0 %2063
      %2065 = vset.pattern.permute.xlu0 0
      %2066 = vperm.xlu0 %2065, %v2001
      %v2067 = vpop.permute.xlu0 %2066
      %2068 = vset.pattern.permute.xlu0 0
      %2069 = vperm.xlu0 %2068, %v2002
      %v2070 = vpop.permute.xlu0 %2069
      %2071 = vset.pattern.permute.xlu0 0
      %2072 = vperm.xlu0 %2071, %v2003
      %v2073 = vpop.permute.xlu0 %2072
      %2074 = vset.pattern.permute.xlu0 0
      %2075 = vperm.xlu0 %2074, %v2004
      %v2076 = vpop.permute.xlu0 %2075
      %2077 = vset.pattern.permute.xlu0 0
      %2078 = vperm.xlu0 %2077, %v2005
      %v2079 = vpop.permute.xlu0 %2078
      %2080 = vset.pattern.permute.xlu0 0
      %2081 = vperm.xlu0 %2080, %v2006
      %v2082 = vpop.permute.xlu0 %2081
      %2083 = vset.pattern.permute.xlu0 0
      %2084 = vperm.xlu0 %2083, %v2007
      %v2085 = vpop.permute.xlu0 %2084
      %2086 = vset.pattern.permute.xlu0 0
      %2087 = vperm.xlu0 %2086, %v2008
      %v2088 = vpop.permute.xlu0 %2087
      %2089 = vset.pattern.permute.xlu0 0
      %2090 = vperm.xlu0 %2089, %v2009
      %v2091 = vpop.permute.xlu0 %2090
      %2092 = vset.pattern.permute.xlu0 0
      %2093 = vperm.xlu0 %2092, %v2010
      %v2094 = vpop.permute.xlu0 %2093
      %2095 = vset.pattern.permute.xlu0 0
      %2096 = vperm.xlu0 %2095, %v2011
      %v2097 = vpop.permute.xlu0 %2096
      %2098 = vset.pattern.permute.xlu0 0
      %2099 = vperm.xlu0 %2098, %v2012
      %v2100 = vpop.permute.xlu0 %2099
      %2101 = vset.pattern.permute.xlu0 0
      %2102 = vperm.xlu0 %2101, %v2013
      %v2103 = vpop.permute.xlu0 %2102
      %2104 = vset.pattern.permute.xlu0 0
      %2105 = vperm.xlu0 %2104, %v2014
      %v2106 = vpop.permute.xlu0 %2105
      %2107 = vset.pattern.permute.xlu0 0
      %2108 = vperm.xlu0 %2107, %v2015
      %v2109 = vpop.permute.xlu0 %2108
      %2110 = vset.pattern.permute.xlu0 0
      %2111 = vperm.xlu0 %2110, %v2016
      %v2112 = vpop.permute.xlu0 %2111
      %vm2113 = vcmp.eq.s32.totalorder %v2019, 1
      %vm2114 = vcmp.eq.s32.totalorder %v2022, 1
      %vm2115 = vcmp.eq.s32.totalorder %v2025, 1
      %vm2116 = vcmp.eq.s32.totalorder %v2028, 1
      %vm2117 = vcmp.eq.s32.totalorder %v2031, 1
      %vm2118 = vcmp.eq.s32.totalorder %v2034, 1
      %vm2119 = vcmp.eq.s32.totalorder %v2037, 1
      %vm2120 = vcmp.eq.s32.totalorder %v2040, 1
      %vm2121 = vcmp.eq.s32.totalorder %v2043, 1
      %vm2122 = vcmp.eq.s32.totalorder %v2046, 1
      %vm2123 = vcmp.eq.s32.totalorder %v2049, 1
      %vm2124 = vcmp.eq.s32.totalorder %v2052, 1
      %vm2125 = vcmp.eq.s32.totalorder %v2055, 1
      %vm2126 = vcmp.eq.s32.totalorder %v2058, 1
      %vm2127 = vcmp.eq.s32.totalorder %v2061, 1
      %vm2128 = vcmp.eq.s32.totalorder %v2064, 1
      %vm2129 = vcmp.eq.s32.totalorder %v2067, 1
      %vm2130 = vcmp.eq.s32.totalorder %v2070, 1
      %vm2131 = vcmp.eq.s32.totalorder %v2073, 1
      %vm2132 = vcmp.eq.s32.totalorder %v2076, 1
      %vm2133 = vcmp.eq.s32.totalorder %v2079, 1
      %vm2134 = vcmp.eq.s32.totalorder %v2082, 1
      %vm2135 = vcmp.eq.s32.totalorder %v2085, 1
      %vm2136 = vcmp.eq.s32.totalorder %v2088, 1
      %vm2137 = vcmp.eq.s32.totalorder %v2091, 1
      %vm2138 = vcmp.eq.s32.totalorder %v2094, 1
      %vm2139 = vcmp.eq.s32.totalorder %v2097, 1
      %vm2140 = vcmp.eq.s32.totalorder %v2100, 1
      %vm2141 = vcmp.eq.s32.totalorder %v2103, 1
      %vm2142 = vcmp.eq.s32.totalorder %v2106, 1
      %vm2143 = vcmp.eq.s32.totalorder %v2109, 1
      %vm2144 = vcmp.eq.s32.totalorder %v2112, 1
      %vm2145 = vmpackc.low %vm2113, %vm2113
      %vm2146 = vmpackc.low %vm2114, %vm2114
      %vm2147 = vmpackc.low %vm2115, %vm2115
      %vm2148 = vmpackc.low %vm2116, %vm2116
      %vm2149 = vmpackc.low %vm2117, %vm2117
      %vm2150 = vmpackc.low %vm2118, %vm2118
      %vm2151 = vmpackc.low %vm2119, %vm2119
      %vm2152 = vmpackc.low %vm2120, %vm2120
      %vm2153 = vmpackc.low %vm2121, %vm2121
      %vm2154 = vmpackc.low %vm2122, %vm2122
      %vm2155 = vmpackc.low %vm2123, %vm2123
      %vm2156 = vmpackc.low %vm2124, %vm2124
      %vm2157 = vmpackc.low %vm2125, %vm2125
      %vm2158 = vmpackc.low %vm2126, %vm2126
      %vm2159 = vmpackc.low %vm2127, %vm2127
      %vm2160 = vmpackc.low %vm2128, %vm2128
      %vm2161 = vmpackc.low %vm2129, %vm2129
      %vm2162 = vmpackc.low %vm2130, %vm2130
      %vm2163 = vmpackc.low %vm2131, %vm2131
      %vm2164 = vmpackc.low %vm2132, %vm2132
      %vm2165 = vmpackc.low %vm2133, %vm2133
      %vm2166 = vmpackc.low %vm2134, %vm2134
      %vm2167 = vmpackc.low %vm2135, %vm2135
      %vm2168 = vmpackc.low %vm2136, %vm2136
      %vm2169 = vmpackc.low %vm2137, %vm2137
      %vm2170 = vmpackc.low %vm2138, %vm2138
      %vm2171 = vmpackc.low %vm2139, %vm2139
      %vm2172 = vmpackc.low %vm2140, %vm2140
      %vm2173 = vmpackc.low %vm2141, %vm2141
      %vm2174 = vmpackc.low %vm2142, %vm2142
      %vm2175 = vmpackc.low %vm2143, %vm2143
      %vm2176 = vmpackc.low %vm2144, %vm2144
      %v2177 = vsel %vm2145, 65537, 0
      %v2178 = vsel %vm2146, 65537, 0
      %v2179 = vsel %vm2147, 65537, 0
      %v2180 = vsel %vm2148, 65537, 0
      %v2181 = vsel %vm2149, 65537, 0
      %v2182 = vsel %vm2150, 65537, 0
      %v2183 = vsel %vm2151, 65537, 0
      %v2184 = vsel %vm2152, 65537, 0
      %v2185 = vsel %vm2153, 65537, 0
      %v2186 = vsel %vm2154, 65537, 0
      %v2187 = vsel %vm2155, 65537, 0
      %v2188 = vsel %vm2156, 65537, 0
      %v2189 = vsel %vm2157, 65537, 0
      %v2190 = vsel %vm2158, 65537, 0
      %v2191 = vsel %vm2159, 65537, 0
      %v2192 = vsel %vm2160, 65537, 0
      %v2193 = vsel %vm2161, 65537, 0
      %v2194 = vsel %vm2162, 65537, 0
      %v2195 = vsel %vm2163, 65537, 0
      %v2196 = vsel %vm2164, 65537, 0
      %v2197 = vsel %vm2165, 65537, 0
      %v2198 = vsel %vm2166, 65537, 0
      %v2199 = vsel %vm2167, 65537, 0
      %v2200 = vsel %vm2168, 65537, 0
      %v2201 = vsel %vm2169, 65537, 0
      %v2202 = vsel %vm2170, 65537, 0
      %v2203 = vsel %vm2171, 65537, 0
      %v2204 = vsel %vm2172, 65537, 0
      %v2205 = vsel %vm2173, 65537, 0
      %v2206 = vsel %vm2174, 65537, 0
      %v2207 = vsel %vm2175, 65537, 0
      %v2208 = vsel %vm2176, 65537, 0
      %vm2209 = vsmask.f32 256
      %vm2210 = vsmask.f32 4368
      %vm2211 = vmor %vm2209, %vm2210
      %v2213 = vshrl.u32 %v2177, 16
      %v2215 = vrot.slane %v2213, 7
      %v2216 = vshll.u32 %v2177, 16
      %v2218 = vor.u32 %v2215, %v2216
      %v2219 = vrot.slane %v2215, 4
      %v2221 = vshrl.u32 %v2178, 16
      %v2223 = vrot.slane %v2221, 7
      %v2224 = vshll.u32 %v2178, 16
      %v2226 = vor.u32 %v2223, %v2224
      %v2227 = vsel %vm2211, %v2219, %v2226
      %v2228 = vrot.slane %v2223, 4
      %v2230 = vshrl.u32 %v2179, 16
      %v2232 = vrot.slane %v2230, 7
      %v2233 = vshll.u32 %v2179, 16
      %v2235 = vor.u32 %v2232, %v2233
      %v2236 = vsel %vm2211, %v2228, %v2235
      %v2237 = vrot.slane %v2232, 4
      %v2239 = vshrl.u32 %v2180, 16
      %v2241 = vrot.slane %v2239, 7
      %v2242 = vshll.u32 %v2180, 16
      %v2244 = vor.u32 %v2241, %v2242
      %v2245 = vsel %vm2211, %v2237, %v2244
      %v2246 = vrot.slane %v2241, 4
      %v2248 = vshrl.u32 %v2181, 16
      %v2250 = vrot.slane %v2248, 7
      %v2251 = vshll.u32 %v2181, 16
      %v2253 = vor.u32 %v2250, %v2251
      %v2254 = vsel %vm2211, %v2246, %v2253
      %v2255 = vrot.slane %v2250, 4
      %v2257 = vshrl.u32 %v2182, 16
      %v2259 = vrot.slane %v2257, 7
      %v2260 = vshll.u32 %v2182, 16
      %v2262 = vor.u32 %v2259, %v2260
      %v2263 = vsel %vm2211, %v2255, %v2262
      %v2264 = vrot.slane %v2259, 4
      %v2266 = vshrl.u32 %v2183, 16
      %v2268 = vrot.slane %v2266, 7
      %v2269 = vshll.u32 %v2183, 16
      %v2271 = vor.u32 %v2268, %v2269
      %v2272 = vsel %vm2211, %v2264, %v2271
      %v2273 = vrot.slane %v2268, 4
      %v2275 = vshrl.u32 %v2184, 16
      %v2277 = vrot.slane %v2275, 7
      %v2278 = vshll.u32 %v2184, 16
      %v2280 = vor.u32 %v2277, %v2278
      %v2281 = vsel %vm2211, %v2273, %v2280
      %v2282 = vrot.slane %v2277, 4
      %v2284 = vshrl.u32 %v2185, 16
      %v2286 = vrot.slane %v2284, 7
      %v2287 = vshll.u32 %v2185, 16
      %v2289 = vor.u32 %v2286, %v2287
      %v2290 = vsel %vm2211, %v2282, %v2289
      %v2291 = vrot.slane %v2286, 4
      %v2293 = vshrl.u32 %v2186, 16
      %v2295 = vrot.slane %v2293, 7
      %v2296 = vshll.u32 %v2186, 16
      %v2298 = vor.u32 %v2295, %v2296
      %v2299 = vsel %vm2211, %v2291, %v2298
      %v2300 = vrot.slane %v2295, 4
      %v2302 = vshrl.u32 %v2187, 16
      %v2304 = vrot.slane %v2302, 7
      %v2305 = vshll.u32 %v2187, 16
      %v2307 = vor.u32 %v2304, %v2305
      %v2308 = vsel %vm2211, %v2300, %v2307
      %v2309 = vrot.slane %v2304, 4
      %v2311 = vshrl.u32 %v2188, 16
      %v2313 = vrot.slane %v2311, 7
      %v2314 = vshll.u32 %v2188, 16
      %v2316 = vor.u32 %v2313, %v2314
      %v2317 = vsel %vm2211, %v2309, %v2316
      %v2318 = vrot.slane %v2313, 4
      %v2320 = vshrl.u32 %v2189, 16
      %v2322 = vrot.slane %v2320, 7
      %v2323 = vshll.u32 %v2189, 16
      %v2325 = vor.u32 %v2322, %v2323
      %v2326 = vsel %vm2211, %v2318, %v2325
      %v2327 = vrot.slane %v2322, 4
      %v2329 = vshrl.u32 %v2190, 16
      %v2331 = vrot.slane %v2329, 7
      %v2332 = vshll.u32 %v2190, 16
      %v2334 = vor.u32 %v2331, %v2332
      %v2335 = vsel %vm2211, %v2327, %v2334
      %v2336 = vrot.slane %v2331, 4
      %v2338 = vshrl.u32 %v2191, 16
      %v2340 = vrot.slane %v2338, 7
      %v2341 = vshll.u32 %v2191, 16
      %v2343 = vor.u32 %v2340, %v2341
      %v2344 = vsel %vm2211, %v2336, %v2343
      %v2345 = vrot.slane %v2340, 4
      %v2347 = vshrl.u32 %v2192, 16
      %v2349 = vrot.slane %v2347, 7
      %v2350 = vshll.u32 %v2192, 16
      %v2352 = vor.u32 %v2349, %v2350
      %v2353 = vsel %vm2211, %v2345, %v2352
      %v2354 = vrot.slane %v2349, 4
      %v2356 = vshrl.u32 %v2193, 16
      %v2358 = vrot.slane %v2356, 7
      %v2359 = vshll.u32 %v2193, 16
      %v2361 = vor.u32 %v2358, %v2359
      %v2362 = vsel %vm2211, %v2354, %v2361
      %v2363 = vrot.slane %v2358, 4
      %v2365 = vshrl.u32 %v2194, 16
      %v2367 = vrot.slane %v2365, 7
      %v2368 = vshll.u32 %v2194, 16
      %v2370 = vor.u32 %v2367, %v2368
      %v2371 = vsel %vm2211, %v2363, %v2370
      %v2372 = vrot.slane %v2367, 4
      %v2374 = vshrl.u32 %v2195, 16
      %v2376 = vrot.slane %v2374, 7
      %v2377 = vshll.u32 %v2195, 16
      %v2379 = vor.u32 %v2376, %v2377
      %v2380 = vsel %vm2211, %v2372, %v2379
      %v2381 = vrot.slane %v2376, 4
      %v2383 = vshrl.u32 %v2196, 16
      %v2385 = vrot.slane %v2383, 7
      %v2386 = vshll.u32 %v2196, 16
      %v2388 = vor.u32 %v2385, %v2386
      %v2389 = vsel %vm2211, %v2381, %v2388
      %v2390 = vrot.slane %v2385, 4
      %v2392 = vshrl.u32 %v2197, 16
      %v2394 = vrot.slane %v2392, 7
      %v2395 = vshll.u32 %v2197, 16
      %v2397 = vor.u32 %v2394, %v2395
      %v2398 = vsel %vm2211, %v2390, %v2397
      %v2399 = vrot.slane %v2394, 4
      %v2401 = vshrl.u32 %v2198, 16
      %v2403 = vrot.slane %v2401, 7
      %v2404 = vshll.u32 %v2198, 16
      %v2406 = vor.u32 %v2403, %v2404
      %v2407 = vsel %vm2211, %v2399, %v2406
      %v2408 = vrot.slane %v2403, 4
      %v2410 = vshrl.u32 %v2199, 16
      %v2412 = vrot.slane %v2410, 7
      %v2413 = vshll.u32 %v2199, 16
      %v2415 = vor.u32 %v2412, %v2413
      %v2416 = vsel %vm2211, %v2408, %v2415
      %v2417 = vrot.slane %v2412, 4
      %v2419 = vshrl.u32 %v2200, 16
      %v2421 = vrot.slane %v2419, 7
      %v2422 = vshll.u32 %v2200, 16
      %v2424 = vor.u32 %v2421, %v2422
      %v2425 = vsel %vm2211, %v2417, %v2424
      %v2426 = vrot.slane %v2421, 4
      %v2428 = vshrl.u32 %v2201, 16
      %v2430 = vrot.slane %v2428, 7
      %v2431 = vshll.u32 %v2201, 16
      %v2433 = vor.u32 %v2430, %v2431
      %v2434 = vsel %vm2211, %v2426, %v2433
      %v2435 = vrot.slane %v2430, 4
      %v2437 = vshrl.u32 %v2202, 16
      %v2439 = vrot.slane %v2437, 7
      %v2440 = vshll.u32 %v2202, 16
      %v2442 = vor.u32 %v2439, %v2440
      %v2443 = vsel %vm2211, %v2435, %v2442
      %v2444 = vrot.slane %v2439, 4
      %v2446 = vshrl.u32 %v2203, 16
      %v2448 = vrot.slane %v2446, 7
      %v2449 = vshll.u32 %v2203, 16
      %v2451 = vor.u32 %v2448, %v2449
      %v2452 = vsel %vm2211, %v2444, %v2451
      %v2453 = vrot.slane %v2448, 4
      %v2455 = vshrl.u32 %v2204, 16
      %v2457 = vrot.slane %v2455, 7
      %v2458 = vshll.u32 %v2204, 16
      %v2460 = vor.u32 %v2457, %v2458
      %v2461 = vsel %vm2211, %v2453, %v2460
      %v2462 = vrot.slane %v2457, 4
      %v2464 = vshrl.u32 %v2205, 16
      %v2466 = vrot.slane %v2464, 7
      %v2467 = vshll.u32 %v2205, 16
      %v2469 = vor.u32 %v2466, %v2467
      %v2470 = vsel %vm2211, %v2462, %v2469
      %v2471 = vrot.slane %v2466, 4
      %v2473 = vshrl.u32 %v2206, 16
      %v2475 = vrot.slane %v2473, 7
      %v2476 = vshll.u32 %v2206, 16
      %v2478 = vor.u32 %v2475, %v2476
      %v2479 = vsel %vm2211, %v2471, %v2478
      %v2480 = vrot.slane %v2475, 4
      %v2482 = vshrl.u32 %v2207, 16
      %v2484 = vrot.slane %v2482, 7
      %v2485 = vshll.u32 %v2207, 16
      %v2487 = vor.u32 %v2484, %v2485
      %v2488 = vsel %vm2211, %v2480, %v2487
      %v2489 = vrot.slane %v2484, 4
      %v2491 = vshrl.u32 %v2208, 16
      %v2493 = vrot.slane %v2491, 7
      %v2494 = vshll.u32 %v2208, 16
      %v2496 = vor.u32 %v2493, %v2494
      %v2497 = vsel %vm2211, %v2489, %v2496
      %v2498 = vrot.slane %v2493, 4
      %v2499 = vunpack.c.l.b16 %v2218
      %v2500 = vunpack.c.h.b16 %v2218
      %v2501 = vunpack.c.l.b16 0
      %v2502 = vunpack.c.h.b16 0
      %vm2503 = vcmp.ne.s32.totalorder %v2499, %v2501
      %vm2504 = vcmp.ne.s32.totalorder %v2500, %v2502
      %vm2505 = vmpackc.low %vm2504, %vm2503
      %v2506 = vunpack.c.l.b16 %v2227
      %v2507 = vunpack.c.h.b16 %v2227
      %v2508 = vunpack.c.l.b16 0
      %v2509 = vunpack.c.h.b16 0
      %vm2510 = vcmp.ne.s32.totalorder %v2506, %v2508
      %vm2511 = vcmp.ne.s32.totalorder %v2507, %v2509
      %vm2512 = vmpackc.low %vm2511, %vm2510
      %v2513 = vunpack.c.l.b16 %v2236
      %v2514 = vunpack.c.h.b16 %v2236
      %v2515 = vunpack.c.l.b16 0
      %v2516 = vunpack.c.h.b16 0
      %vm2517 = vcmp.ne.s32.totalorder %v2513, %v2515
      %vm2518 = vcmp.ne.s32.totalorder %v2514, %v2516
      %vm2519 = vmpackc.low %vm2518, %vm2517
      %v2520 = vunpack.c.l.b16 %v2245
      %v2521 = vunpack.c.h.b16 %v2245
      %v2522 = vunpack.c.l.b16 0
      %v2523 = vunpack.c.h.b16 0
      %vm2524 = vcmp.ne.s32.totalorder %v2520, %v2522
      %vm2525 = vcmp.ne.s32.totalorder %v2521, %v2523
      %vm2526 = vmpackc.low %vm2525, %vm2524
      %v2527 = vunpack.c.l.b16 %v2254
      %v2528 = vunpack.c.h.b16 %v2254
      %v2529 = vunpack.c.l.b16 0
      %v2530 = vunpack.c.h.b16 0
      %vm2531 = vcmp.ne.s32.totalorder %v2527, %v2529
      %vm2532 = vcmp.ne.s32.totalorder %v2528, %v2530
      %vm2533 = vmpackc.low %vm2532, %vm2531
      %v2534 = vunpack.c.l.b16 %v2263
      %v2535 = vunpack.c.h.b16 %v2263
      %v2536 = vunpack.c.l.b16 0
      %v2537 = vunpack.c.h.b16 0
      %vm2538 = vcmp.ne.s32.totalorder %v2534, %v2536
      %vm2539 = vcmp.ne.s32.totalorder %v2535, %v2537
      %vm2540 = vmpackc.low %vm2539, %vm2538
      %v2541 = vunpack.c.l.b16 %v2272
      %v2542 = vunpack.c.h.b16 %v2272
      %v2543 = vunpack.c.l.b16 0
      %v2544 = vunpack.c.h.b16 0
      %vm2545 = vcmp.ne.s32.totalorder %v2541, %v2543
      %vm2546 = vcmp.ne.s32.totalorder %v2542, %v2544
      %vm2547 = vmpackc.low %vm2546, %vm2545
      %v2548 = vunpack.c.l.b16 %v2281
      %v2549 = vunpack.c.h.b16 %v2281
      %v2550 = vunpack.c.l.b16 0
      %v2551 = vunpack.c.h.b16 0
      %vm2552 = vcmp.ne.s32.totalorder %v2548, %v2550
      %vm2553 = vcmp.ne.s32.totalorder %v2549, %v2551
      %vm2554 = vmpackc.low %vm2553, %vm2552
      %v2555 = vunpack.c.l.b16 %v2290
      %v2556 = vunpack.c.h.b16 %v2290
      %v2557 = vunpack.c.l.b16 0
      %v2558 = vunpack.c.h.b16 0
      %vm2559 = vcmp.ne.s32.totalorder %v2555, %v2557
      %vm2560 = vcmp.ne.s32.totalorder %v2556, %v2558
      %vm2561 = vmpackc.low %vm2560, %vm2559
      %v2562 = vunpack.c.l.b16 %v2299
      %v2563 = vunpack.c.h.b16 %v2299
      %v2564 = vunpack.c.l.b16 0
      %v2565 = vunpack.c.h.b16 0
      %vm2566 = vcmp.ne.s32.totalorder %v2562, %v2564
      %vm2567 = vcmp.ne.s32.totalorder %v2563, %v2565
      %vm2568 = vmpackc.low %vm2567, %vm2566
      %v2569 = vunpack.c.l.b16 %v2308
      %v2570 = vunpack.c.h.b16 %v2308
      %v2571 = vunpack.c.l.b16 0
      %v2572 = vunpack.c.h.b16 0
      %vm2573 = vcmp.ne.s32.totalorder %v2569, %v2571
      %vm2574 = vcmp.ne.s32.totalorder %v2570, %v2572
      %vm2575 = vmpackc.low %vm2574, %vm2573
      %v2576 = vunpack.c.l.b16 %v2317
      %v2577 = vunpack.c.h.b16 %v2317
      %v2578 = vunpack.c.l.b16 0
      %v2579 = vunpack.c.h.b16 0
      %vm2580 = vcmp.ne.s32.totalorder %v2576, %v2578
      %vm2581 = vcmp.ne.s32.totalorder %v2577, %v2579
      %vm2582 = vmpackc.low %vm2581, %vm2580
      %v2583 = vunpack.c.l.b16 %v2326
      %v2584 = vunpack.c.h.b16 %v2326
      %v2585 = vunpack.c.l.b16 0
      %v2586 = vunpack.c.h.b16 0
      %vm2587 = vcmp.ne.s32.totalorder %v2583, %v2585
      %vm2588 = vcmp.ne.s32.totalorder %v2584, %v2586
      %vm2589 = vmpackc.low %vm2588, %vm2587
      %v2590 = vunpack.c.l.b16 %v2335
      %v2591 = vunpack.c.h.b16 %v2335
      %v2592 = vunpack.c.l.b16 0
      %v2593 = vunpack.c.h.b16 0
      %vm2594 = vcmp.ne.s32.totalorder %v2590, %v2592
      %vm2595 = vcmp.ne.s32.totalorder %v2591, %v2593
      %vm2596 = vmpackc.low %vm2595, %vm2594
      %v2597 = vunpack.c.l.b16 %v2344
      %v2598 = vunpack.c.h.b16 %v2344
      %v2599 = vunpack.c.l.b16 0
      %v2600 = vunpack.c.h.b16 0
      %vm2601 = vcmp.ne.s32.totalorder %v2597, %v2599
      %vm2602 = vcmp.ne.s32.totalorder %v2598, %v2600
      %vm2603 = vmpackc.low %vm2602, %vm2601
      %v2604 = vunpack.c.l.b16 %v2353
      %v2605 = vunpack.c.h.b16 %v2353
      %v2606 = vunpack.c.l.b16 0
      %v2607 = vunpack.c.h.b16 0
      %vm2608 = vcmp.ne.s32.totalorder %v2604, %v2606
      %vm2609 = vcmp.ne.s32.totalorder %v2605, %v2607
      %vm2610 = vmpackc.low %vm2609, %vm2608
      %v2611 = vunpack.c.l.b16 %v2362
      %v2612 = vunpack.c.h.b16 %v2362
      %v2613 = vunpack.c.l.b16 0
      %v2614 = vunpack.c.h.b16 0
      %vm2615 = vcmp.ne.s32.totalorder %v2611, %v2613
      %vm2616 = vcmp.ne.s32.totalorder %v2612, %v2614
      %vm2617 = vmpackc.low %vm2616, %vm2615
      %v2618 = vunpack.c.l.b16 %v2371
      %v2619 = vunpack.c.h.b16 %v2371
      %v2620 = vunpack.c.l.b16 0
      %v2621 = vunpack.c.h.b16 0
      %vm2622 = vcmp.ne.s32.totalorder %v2618, %v2620
      %vm2623 = vcmp.ne.s32.totalorder %v2619, %v2621
      %vm2624 = vmpackc.low %vm2623, %vm2622
      %v2625 = vunpack.c.l.b16 %v2380
      %v2626 = vunpack.c.h.b16 %v2380
      %v2627 = vunpack.c.l.b16 0
      %v2628 = vunpack.c.h.b16 0
      %vm2629 = vcmp.ne.s32.totalorder %v2625, %v2627
      %vm2630 = vcmp.ne.s32.totalorder %v2626, %v2628
      %vm2631 = vmpackc.low %vm2630, %vm2629
      %v2632 = vunpack.c.l.b16 %v2389
      %v2633 = vunpack.c.h.b16 %v2389
      %v2634 = vunpack.c.l.b16 0
      %v2635 = vunpack.c.h.b16 0
      %vm2636 = vcmp.ne.s32.totalorder %v2632, %v2634
      %vm2637 = vcmp.ne.s32.totalorder %v2633, %v2635
      %vm2638 = vmpackc.low %vm2637, %vm2636
      %v2639 = vunpack.c.l.b16 %v2398
      %v2640 = vunpack.c.h.b16 %v2398
      %v2641 = vunpack.c.l.b16 0
      %v2642 = vunpack.c.h.b16 0
      %vm2643 = vcmp.ne.s32.totalorder %v2639, %v2641
      %vm2644 = vcmp.ne.s32.totalorder %v2640, %v2642
      %vm2645 = vmpackc.low %vm2644, %vm2643
      %v2646 = vunpack.c.l.b16 %v2407
      %v2647 = vunpack.c.h.b16 %v2407
      %v2648 = vunpack.c.l.b16 0
      %v2649 = vunpack.c.h.b16 0
      %vm2650 = vcmp.ne.s32.totalorder %v2646, %v2648
      %vm2651 = vcmp.ne.s32.totalorder %v2647, %v2649
      %vm2652 = vmpackc.low %vm2651, %vm2650
      %v2653 = vunpack.c.l.b16 %v2416
      %v2654 = vunpack.c.h.b16 %v2416
      %v2655 = vunpack.c.l.b16 0
      %v2656 = vunpack.c.h.b16 0
      %vm2657 = vcmp.ne.s32.totalorder %v2653, %v2655
      %vm2658 = vcmp.ne.s32.totalorder %v2654, %v2656
      %vm2659 = vmpackc.low %vm2658, %vm2657
      %v2660 = vunpack.c.l.b16 %v2425
      %v2661 = vunpack.c.h.b16 %v2425
      %v2662 = vunpack.c.l.b16 0
      %v2663 = vunpack.c.h.b16 0
      %vm2664 = vcmp.ne.s32.totalorder %v2660, %v2662
      %vm2665 = vcmp.ne.s32.totalorder %v2661, %v2663
      %vm2666 = vmpackc.low %vm2665, %vm2664
      %v2667 = vunpack.c.l.b16 %v2434
      %v2668 = vunpack.c.h.b16 %v2434
      %v2669 = vunpack.c.l.b16 0
      %v2670 = vunpack.c.h.b16 0
      %vm2671 = vcmp.ne.s32.totalorder %v2667, %v2669
      %vm2672 = vcmp.ne.s32.totalorder %v2668, %v2670
      %vm2673 = vmpackc.low %vm2672, %vm2671
      %v2674 = vunpack.c.l.b16 %v2443
      %v2675 = vunpack.c.h.b16 %v2443
      %v2676 = vunpack.c.l.b16 0
      %v2677 = vunpack.c.h.b16 0
      %vm2678 = vcmp.ne.s32.totalorder %v2674, %v2676
      %vm2679 = vcmp.ne.s32.totalorder %v2675, %v2677
      %vm2680 = vmpackc.low %vm2679, %vm2678
      %v2681 = vunpack.c.l.b16 %v2452
      %v2682 = vunpack.c.h.b16 %v2452
      %v2683 = vunpack.c.l.b16 0
      %v2684 = vunpack.c.h.b16 0
      %vm2685 = vcmp.ne.s32.totalorder %v2681, %v2683
      %vm2686 = vcmp.ne.s32.totalorder %v2682, %v2684
      %vm2687 = vmpackc.low %vm2686, %vm2685
      %v2688 = vunpack.c.l.b16 %v2461
      %v2689 = vunpack.c.h.b16 %v2461
      %v2690 = vunpack.c.l.b16 0
      %v2691 = vunpack.c.h.b16 0
      %vm2692 = vcmp.ne.s32.totalorder %v2688, %v2690
      %vm2693 = vcmp.ne.s32.totalorder %v2689, %v2691
      %vm2694 = vmpackc.low %vm2693, %vm2692
      %v2695 = vunpack.c.l.b16 %v2470
      %v2696 = vunpack.c.h.b16 %v2470
      %v2697 = vunpack.c.l.b16 0
      %v2698 = vunpack.c.h.b16 0
      %vm2699 = vcmp.ne.s32.totalorder %v2695, %v2697
      %vm2700 = vcmp.ne.s32.totalorder %v2696, %v2698
      %vm2701 = vmpackc.low %vm2700, %vm2699
      %v2702 = vunpack.c.l.b16 %v2479
      %v2703 = vunpack.c.h.b16 %v2479
      %v2704 = vunpack.c.l.b16 0
      %v2705 = vunpack.c.h.b16 0
      %vm2706 = vcmp.ne.s32.totalorder %v2702, %v2704
      %vm2707 = vcmp.ne.s32.totalorder %v2703, %v2705
      %vm2708 = vmpackc.low %vm2707, %vm2706
      %v2709 = vunpack.c.l.b16 %v2488
      %v2710 = vunpack.c.h.b16 %v2488
      %v2711 = vunpack.c.l.b16 0
      %v2712 = vunpack.c.h.b16 0
      %vm2713 = vcmp.ne.s32.totalorder %v2709, %v2711
      %vm2714 = vcmp.ne.s32.totalorder %v2710, %v2712
      %vm2715 = vmpackc.low %vm2714, %vm2713
      %v2716 = vunpack.c.l.b16 %v2497
      %v2717 = vunpack.c.h.b16 %v2497
      %v2718 = vunpack.c.l.b16 0
      %v2719 = vunpack.c.h.b16 0
      %vm2720 = vcmp.ne.s32.totalorder %v2716, %v2718
      %vm2721 = vcmp.ne.s32.totalorder %v2717, %v2719
      %vm2722 = vmpackc.low %vm2721, %vm2720
      %v2723 = vunpack.c.l.b16 %v2498
      %v2724 = vunpack.c.h.b16 %v2498
      %v2725 = vunpack.c.l.b16 0
      %v2726 = vunpack.c.h.b16 0
      %vm2727 = vcmp.ne.s32.totalorder %v2723, %v2725
      %vm2728 = vcmp.ne.s32.totalorder %v2724, %v2726
      %vm2729 = vmpackc.low %vm2728, %vm2727
      %v2730 = vsel %vm2505, 0, %v1952
      %v2731 = vsel %vm2512, 0, %v1953
      %v2732 = vsel %vm2519, 0, %v1954
      %v2733 = vsel %vm2526, 0, %v1955
      %v2734 = vsel %vm2533, 0, %v1956
      %v2735 = vsel %vm2540, 0, %v1957
      %v2736 = vsel %vm2547, 0, %v1958
      %v2737 = vsel %vm2554, 0, %v1959
      %v2738 = vsel %vm2561, 0, %v1960
      %v2739 = vsel %vm2568, 0, %v1961
      %v2740 = vsel %vm2575, 0, %v1962
      %v2741 = vsel %vm2582, 0, %v1963
      %v2742 = vsel %vm2589, 0, %v1964
      %v2743 = vsel %vm2596, 0, %v1965
      %v2744 = vsel %vm2603, 0, %v1966
      %v2745 = vsel %vm2610, 0, %v1967
      %v2746 = vsel %vm2617, 0, %v1968
      %v2747 = vsel %vm2624, 0, %v1969
      %v2748 = vsel %vm2631, 0, %v1970
      %v2749 = vsel %vm2638, 0, %v1971
      %v2750 = vsel %vm2645, 0, %v1972
      %v2751 = vsel %vm2652, 0, %v1973
      %v2752 = vsel %vm2659, 0, %v1974
      %v2753 = vsel %vm2666, 0, %v1975
      %v2754 = vsel %vm2673, 0, %v1976
      %v2755 = vsel %vm2680, 0, %v1977
      %v2756 = vsel %vm2687, 0, %v1978
      %v2757 = vsel %vm2694, 0, %v1979
      %v2758 = vsel %vm2701, 0, %v1980
      %v2759 = vsel %vm2708, 0, %v1981
      %v2760 = vsel %vm2715, 0, %v1982
      %v2761 = vsel %vm2722, 0, %v1983
      %v2762 = vsel %vm2729, 0, %v1984
      %s2763 = scalar_lea.vmem %s3, 4
      %v2764 = vld [vmem:[%s2763] sm:$0x3]
      %v2798 = vunpack.c.l.b16 %v2730
      %v2799 = vunpack.c.l.b16 %v2731
      %v2800 = vunpack.c.l.b16 %v2732
      %v2801 = vunpack.c.l.b16 %v2733
      %v2802 = vunpack.c.l.b16 %v2734
      %v2803 = vunpack.c.l.b16 %v2735
      %v2804 = vunpack.c.l.b16 %v2736
      %v2805 = vunpack.c.l.b16 %v2737
      %v2806 = vunpack.c.l.b16 %v2738
      %v2807 = vunpack.c.l.b16 %v2739
      %v2808 = vunpack.c.l.b16 %v2740
      %v2809 = vunpack.c.l.b16 %v2741
      %v2810 = vunpack.c.l.b16 %v2742
      %v2811 = vunpack.c.l.b16 %v2743
      %v2812 = vunpack.c.l.b16 %v2744
      %v2813 = vunpack.c.l.b16 %v2745
      %v2814 = vunpack.c.l.b16 %v2746
      %v2815 = vunpack.c.l.b16 %v2747
      %v2816 = vunpack.c.l.b16 %v2748
      %v2817 = vunpack.c.l.b16 %v2749
      %v2818 = vunpack.c.l.b16 %v2750
      %v2819 = vunpack.c.l.b16 %v2751
      %v2820 = vunpack.c.l.b16 %v2752
      %v2821 = vunpack.c.l.b16 %v2753
      %v2822 = vunpack.c.l.b16 %v2754
      %v2823 = vunpack.c.l.b16 %v2755
      %v2824 = vunpack.c.l.b16 %v2756
      %v2825 = vunpack.c.l.b16 %v2757
      %v2826 = vunpack.c.l.b16 %v2758
      %v2827 = vunpack.c.l.b16 %v2759
      %v2828 = vunpack.c.l.b16 %v2760
      %v2829 = vunpack.c.l.b16 %v2761
      %v2830 = vunpack.c.l.b16 %v2762
      %v2831 = vpack.c.b16 %v2799, %v2798
      %v2832 = vpack.c.b16 %v2801, %v2800
      %v2833 = vpack.c.b16 %v2803, %v2802
      %v2834 = vpack.c.b16 %v2805, %v2804
      %v2835 = vpack.c.b16 %v2807, %v2806
      %v2836 = vpack.c.b16 %v2809, %v2808
      %v2837 = vpack.c.b16 %v2811, %v2810
      %v2838 = vpack.c.b16 %v2813, %v2812
      %v2839 = vpack.c.b16 %v2815, %v2814
      %v2840 = vpack.c.b16 %v2817, %v2816
      %v2841 = vpack.c.b16 %v2819, %v2818
      %v2842 = vpack.c.b16 %v2821, %v2820
      %v2843 = vpack.c.b16 %v2823, %v2822
      %v2844 = vpack.c.b16 %v2825, %v2824
      %v2845 = vpack.c.b16 %v2827, %v2826
      %v2846 = vpack.c.b16 %v2829, %v2828
      %v2847 = vpack.c.b16 %v2830, %v2830
      %vm2848 = vsmask.f32 7424
      %v2850 = vshrl.u32 %v2831, 16
      %v2852 = vshll.u32 %v2831, 16
      %v2854 = vrot.slane %v2852, 1
      %v2855 = vor.u32 %v2850, %v2854
      %v2857 = vshll.u32 %v2832, 16
      %v2859 = vrot.slane %v2857, 1
      %v2860 = vsel %vm2848, %v2855, %v2859
      %v2861 = vshrl.u32 %v2832, 16
      %v2863 = vor.u32 %v2861, %v2859
      %v2865 = vshll.u32 %v2833, 16
      %v2867 = vrot.slane %v2865, 1
      %v2868 = vsel %vm2848, %v2863, %v2867
      %v2869 = vshrl.u32 %v2833, 16
      %v2871 = vor.u32 %v2869, %v2867
      %v2873 = vshll.u32 %v2834, 16
      %v2875 = vrot.slane %v2873, 1
      %v2876 = vsel %vm2848, %v2871, %v2875
      %v2877 = vshrl.u32 %v2834, 16
      %v2879 = vor.u32 %v2877, %v2875
      %v2881 = vshll.u32 %v2835, 16
      %v2883 = vrot.slane %v2881, 1
      %v2884 = vsel %vm2848, %v2879, %v2883
      %v2885 = vshrl.u32 %v2835, 16
      %v2887 = vor.u32 %v2885, %v2883
      %v2889 = vshll.u32 %v2836, 16
      %v2891 = vrot.slane %v2889, 1
      %v2892 = vsel %vm2848, %v2887, %v2891
      %v2893 = vshrl.u32 %v2836, 16
      %v2895 = vor.u32 %v2893, %v2891
      %v2897 = vshll.u32 %v2837, 16
      %v2899 = vrot.slane %v2897, 1
      %v2900 = vsel %vm2848, %v2895, %v2899
      %v2901 = vshrl.u32 %v2837, 16
      %v2903 = vor.u32 %v2901, %v2899
      %v2905 = vshll.u32 %v2838, 16
      %v2907 = vrot.slane %v2905, 1
      %v2908 = vsel %vm2848, %v2903, %v2907
      %v2909 = vshrl.u32 %v2838, 16
      %v2911 = vor.u32 %v2909, %v2907
      %v2913 = vshll.u32 %v2839, 16
      %v2915 = vrot.slane %v2913, 1
      %v2916 = vsel %vm2848, %v2911, %v2915
      %v2917 = vshrl.u32 %v2839, 16
      %v2919 = vor.u32 %v2917, %v2915
      %v2921 = vshll.u32 %v2840, 16
      %v2923 = vrot.slane %v2921, 1
      %v2924 = vsel %vm2848, %v2919, %v2923
      %v2925 = vshrl.u32 %v2840, 16
      %v2927 = vor.u32 %v2925, %v2923
      %v2929 = vshll.u32 %v2841, 16
      %v2931 = vrot.slane %v2929, 1
      %v2932 = vsel %vm2848, %v2927, %v2931
      %v2933 = vshrl.u32 %v2841, 16
      %v2935 = vor.u32 %v2933, %v2931
      %v2937 = vshll.u32 %v2842, 16
      %v2939 = vrot.slane %v2937, 1
      %v2940 = vsel %vm2848, %v2935, %v2939
      %v2941 = vshrl.u32 %v2842, 16
      %v2943 = vor.u32 %v2941, %v2939
      %v2945 = vshll.u32 %v2843, 16
      %v2947 = vrot.slane %v2945, 1
      %v2948 = vsel %vm2848, %v2943, %v2947
      %v2949 = vshrl.u32 %v2843, 16
      %v2951 = vor.u32 %v2949, %v2947
      %v2953 = vshll.u32 %v2844, 16
      %v2955 = vrot.slane %v2953, 1
      %v2956 = vsel %vm2848, %v2951, %v2955
      %v2957 = vshrl.u32 %v2844, 16
      %v2959 = vor.u32 %v2957, %v2955
      %v2961 = vshll.u32 %v2845, 16
      %v2963 = vrot.slane %v2961, 1
      %v2964 = vsel %vm2848, %v2959, %v2963
      %v2965 = vshrl.u32 %v2845, 16
      %v2967 = vor.u32 %v2965, %v2963
      %v2969 = vshll.u32 %v2846, 16
      %v2971 = vrot.slane %v2969, 1
      %v2972 = vsel %vm2848, %v2967, %v2971
      %v2973 = vshrl.u32 %v2846, 16
      %v2975 = vor.u32 %v2973, %v2971
      %v2977 = vshll.u32 %v2847, 16
      %v2979 = vrot.slane %v2977, 1
      %v2980 = vsel %vm2848, %v2975, %v2979
      %v2982 = vsel %vm1434, %v2860, 0
      %v2985 = vsel %vm1434, %v2868, 0
      %v2988 = vsel %vm1434, %v2876, 0
      %v2991 = vsel %vm1434, %v2884, 0
      %v2994 = vsel %vm1434, %v2892, 0
      %v2997 = vsel %vm1434, %v2900, 0
      %v3000 = vsel %vm1434, %v2908, 0
      %v3003 = vsel %vm1434, %v2916, 0
      %v3006 = vsel %vm1434, %v2924, 0
      %v3009 = vsel %vm1434, %v2932, 0
      %v3012 = vsel %vm1434, %v2940, 0
      %v3015 = vsel %vm1434, %v2948, 0
      %v3018 = vsel %vm1434, %v2956, 0
      %v3021 = vsel %vm1434, %v2964, 0
      %v3024 = vsel %vm1434, %v2972, 0
      %v3027 = vsel %vm1434, %v2980, 0
      %v3030 = vsel %vm1483, %v2764, 0
      %3032 = vmatpush.bf16.msra.mxu0 0
      %3033 = vmatpush.bf16.msra.mxu0 0
      %3034 = vmatpush.bf16.msra.mxu0 0
      %3035 = vmatpush.bf16.msra.mxu0 0
      %3036 = vmatpush.bf16.msra.mxu0 0
      %3037 = vmatpush.bf16.msra.mxu0 0
      %3038 = vmatpush.bf16.msra.mxu0 0
      %3039 = vmatpush.bf16.msra.mxu0 %v3030
      %3040 = vmatmul.bf16.gmra.mxu0 %v2982
      %v3041 = vpop.f32.mrf.mxu0
      %v3042 = vadd.f32 0.0, %v3041
      %v3043 = vpop.f32.mrf.mxu0
      %v3044 = vadd.f32 0.0, %v3043
      %3045 = vmatmul.bf16.gmra.mxu0 %v2985
      %v3046 = vpop.f32.mrf.mxu0
      %v3047 = vadd.f32 0.0, %v3046
      %v3048 = vpop.f32.mrf.mxu0
      %v3049 = vadd.f32 0.0, %v3048
      %3050 = vmatmul.bf16.gmra.mxu0 %v2988
      %v3051 = vpop.f32.mrf.mxu0
      %v3052 = vadd.f32 0.0, %v3051
      %v3053 = vpop.f32.mrf.mxu0
      %v3054 = vadd.f32 0.0, %v3053
      %3055 = vmatmul.bf16.gmra.mxu0 %v2991
      %v3056 = vpop.f32.mrf.mxu0
      %v3057 = vadd.f32 0.0, %v3056
      %v3058 = vpop.f32.mrf.mxu0
      %v3059 = vadd.f32 0.0, %v3058
      %3060 = vmatmul.bf16.gmra.mxu0 %v2994
      %v3061 = vpop.f32.mrf.mxu0
      %v3062 = vadd.f32 0.0, %v3061
      %v3063 = vpop.f32.mrf.mxu0
      %v3064 = vadd.f32 0.0, %v3063
      %3065 = vmatmul.bf16.gmra.mxu0 %v2997
      %v3066 = vpop.f32.mrf.mxu0
      %v3067 = vadd.f32 0.0, %v3066
      %v3068 = vpop.f32.mrf.mxu0
      %v3069 = vadd.f32 0.0, %v3068
      %3070 = vmatmul.bf16.gmra.mxu0 %v3000
      %v3071 = vpop.f32.mrf.mxu0
      %v3072 = vadd.f32 0.0, %v3071
      %v3073 = vpop.f32.mrf.mxu0
      %v3074 = vadd.f32 0.0, %v3073
      %3075 = vmatmul.bf16.gmra.mxu0 %v3003
      %v3076 = vpop.f32.mrf.mxu0
      %v3077 = vadd.f32 0.0, %v3076
      %v3078 = vpop.f32.mrf.mxu0
      %v3079 = vadd.f32 0.0, %v3078
      %3080 = vmatmul.bf16.gmra.mxu0 %v3006
      %v3081 = vpop.f32.mrf.mxu0
      %v3082 = vadd.f32 0.0, %v3081
      %v3083 = vpop.f32.mrf.mxu0
      %v3084 = vadd.f32 0.0, %v3083
      %3085 = vmatmul.bf16.gmra.mxu0 %v3009
      %v3086 = vpop.f32.mrf.mxu0
      %v3087 = vadd.f32 0.0, %v3086
      %v3088 = vpop.f32.mrf.mxu0
      %v3089 = vadd.f32 0.0, %v3088
      %3090 = vmatmul.bf16.gmra.mxu0 %v3012
      %v3091 = vpop.f32.mrf.mxu0
      %v3092 = vadd.f32 0.0, %v3091
      %v3093 = vpop.f32.mrf.mxu0
      %v3094 = vadd.f32 0.0, %v3093
      %3095 = vmatmul.bf16.gmra.mxu0 %v3015
      %v3096 = vpop.f32.mrf.mxu0
      %v3097 = vadd.f32 0.0, %v3096
      %v3098 = vpop.f32.mrf.mxu0
      %v3099 = vadd.f32 0.0, %v3098
      %3100 = vmatmul.bf16.gmra.mxu0 %v3018
      %v3101 = vpop.f32.mrf.mxu0
      %v3102 = vadd.f32 0.0, %v3101
      %v3103 = vpop.f32.mrf.mxu0
      %v3104 = vadd.f32 0.0, %v3103
      %3105 = vmatmul.bf16.gmra.mxu0 %v3021
      %v3106 = vpop.f32.mrf.mxu0
      %v3107 = vadd.f32 0.0, %v3106
      %v3108 = vpop.f32.mrf.mxu0
      %v3109 = vadd.f32 0.0, %v3108
      %3110 = vmatmul.bf16.gmra.mxu0 %v3024
      %v3111 = vpop.f32.mrf.mxu0
      %v3112 = vadd.f32 0.0, %v3111
      %v3113 = vpop.f32.mrf.mxu0
      %v3114 = vadd.f32 0.0, %v3113
      %3115 = vmatmul.bf16.gmra.mxu0 %v3027
      %v3116 = vpop.f32.mrf.mxu0
      %v3117 = vadd.f32 0.0, %v3116
      %v3118 = vpop.f32.mrf.mxu0
      %v3119 = vadd.f32 0.0, %v3118
      %3120 = vdwg.mxu0
      %v3121 = vadd.f32 %v1873, %v3042
      %v3122 = vadd.f32 %v1875, %v3044
      %v3123 = vadd.f32 %v1878, %v3047
      %v3124 = vadd.f32 %v1880, %v3049
      %v3125 = vadd.f32 %v1883, %v3052
      %v3126 = vadd.f32 %v1885, %v3054
      %v3127 = vadd.f32 %v1888, %v3057
      %v3128 = vadd.f32 %v1890, %v3059
      %v3129 = vadd.f32 %v1893, %v3062
      %v3130 = vadd.f32 %v1895, %v3064
      %v3131 = vadd.f32 %v1898, %v3067
      %v3132 = vadd.f32 %v1900, %v3069
      %v3133 = vadd.f32 %v1903, %v3072
      %v3134 = vadd.f32 %v1905, %v3074
      %v3135 = vadd.f32 %v1908, %v3077
      %v3136 = vadd.f32 %v1910, %v3079
      %v3137 = vadd.f32 %v1913, %v3082
      %v3138 = vadd.f32 %v1915, %v3084
      %v3139 = vadd.f32 %v1918, %v3087
      %v3140 = vadd.f32 %v1920, %v3089
      %v3141 = vadd.f32 %v1923, %v3092
      %v3142 = vadd.f32 %v1925, %v3094
      %v3143 = vadd.f32 %v1928, %v3097
      %v3144 = vadd.f32 %v1930, %v3099
      %v3145 = vadd.f32 %v1933, %v3102
      %v3146 = vadd.f32 %v1935, %v3104
      %v3147 = vadd.f32 %v1938, %v3107
      %v3148 = vadd.f32 %v1940, %v3109
      %v3149 = vadd.f32 %v1943, %v3112
      %v3150 = vadd.f32 %v1945, %v3114
      %v3151 = vadd.f32 %v1948, %v3117
      %v3152 = vadd.f32 %v1950, %v3119
      %v3153 = vld [vmem:[#allocation2 + $0x8] sm:$0x8]
      %v3154 = vld [vmem:[#allocation2 + $0xc] sm:$0xf]
      %v3155 = vld [vmem:[#allocation2 + $0x10] sm:$0xf]
      %v3156 = vld [vmem:[#allocation2 + $0x14] sm:$0xf]
      %v3157 = vld [vmem:[#allocation2 + $0x18] sm:$0xf]
      %v3158 = vld [vmem:[#allocation2 + $0x1c] sm:$0xf]
      %v3159 = vld [vmem:[#allocation2 + $0x20] sm:$0xf]
      %v3160 = vld [vmem:[#allocation2 + $0x24] sm:$0xf]
      %v3161 = vld [vmem:[#allocation2 + $0x28] sm:$0xf]
      %v3162 = vld [vmem:[#allocation2 + $0x2c] sm:$0xf]
      %v3163 = vld [vmem:[#allocation2 + $0x30] sm:$0xf]
      %v3164 = vld [vmem:[#allocation2 + $0x34] sm:$0xf]
      %v3165 = vld [vmem:[#allocation2 + $0x38] sm:$0xf]
      %v3166 = vld [vmem:[#allocation2 + $0x3c] sm:$0xf]
      %v3167 = vld [vmem:[#allocation2 + $0x40] sm:$0xf]
      %v3168 = vld [vmem:[#allocation2 + $0x44] sm:$0xf]
      %v3169 = vld [vmem:[#allocation2 + $0x48] sm:$0xf]
      %v3170 = vld [vmem:[#allocation2 + $0x4c] sm:$0xf]
      %v3171 = vld [vmem:[#allocation2 + $0x50] sm:$0xf]
      %v3172 = vld [vmem:[#allocation2 + $0x54] sm:$0xf]
      %v3173 = vld [vmem:[#allocation2 + $0x58] sm:$0xf]
      %v3174 = vld [vmem:[#allocation2 + $0x5c] sm:$0xf]
      %v3175 = vld [vmem:[#allocation2 + $0x60] sm:$0xf]
      %v3176 = vld [vmem:[#allocation2 + $0x64] sm:$0xf]
      %v3177 = vld [vmem:[#allocation2 + $0x68] sm:$0xf]
      %v3178 = vld [vmem:[#allocation2 + $0x6c] sm:$0xf]
      %v3179 = vld [vmem:[#allocation2 + $0x70] sm:$0xf]
      %v3180 = vld [vmem:[#allocation2 + $0x74] sm:$0xf]
      %v3181 = vld [vmem:[#allocation2 + $0x78] sm:$0xf]
      %v3182 = vld [vmem:[#allocation2 + $0x7c] sm:$0xf]
      %v3183 = vld [vmem:[#allocation2 + $0x80] sm:$0xf]
      %v3184 = vld [vmem:[#allocation2 + $0x84] sm:$0xf]
      %v3185 = vld [vmem:[#allocation2 + $0x88] sm:$0xf]
      %v3186 = vsel %vm1093, 0, %v3153
      %v3187 = vsel %vm1100, 0, %v3154
      %v3188 = vsel %vm1107, 0, %v3155
      %v3189 = vsel %vm1114, 0, %v3156
      %v3190 = vsel %vm1121, 0, %v3157
      %v3191 = vsel %vm1128, 0, %v3158
      %v3192 = vsel %vm1135, 0, %v3159
      %v3193 = vsel %vm1142, 0, %v3160
      %v3194 = vsel %vm1149, 0, %v3161
      %v3195 = vsel %vm1156, 0, %v3162
      %v3196 = vsel %vm1163, 0, %v3163
      %v3197 = vsel %vm1170, 0, %v3164
      %v3198 = vsel %vm1177, 0, %v3165
      %v3199 = vsel %vm1184, 0, %v3166
      %v3200 = vsel %vm1191, 0, %v3167
      %v3201 = vsel %vm1198, 0, %v3168
      %v3202 = vsel %vm1205, 0, %v3169
      %v3203 = vsel %vm1212, 0, %v3170
      %v3204 = vsel %vm1219, 0, %v3171
      %v3205 = vsel %vm1226, 0, %v3172
      %v3206 = vsel %vm1233, 0, %v3173
      %v3207 = vsel %vm1240, 0, %v3174
      %v3208 = vsel %vm1247, 0, %v3175
      %v3209 = vsel %vm1254, 0, %v3176
      %v3210 = vsel %vm1261, 0, %v3177
      %v3211 = vsel %vm1268, 0, %v3178
      %v3212 = vsel %vm1275, 0, %v3179
      %v3213 = vsel %vm1282, 0, %v3180
      %v3214 = vsel %vm1289, 0, %v3181
      %v3215 = vsel %vm1296, 0, %v3182
      %v3216 = vsel %vm1303, 0, %v3183
      %v3217 = vsel %vm1310, 0, %v3184
      %v3218 = vsel %vm1317, 0, %v3185
      %s3219 = scalar_lea.vmem %s3, 6
      %v3220 = vld [vmem:[%s3219] sm:$0x3]
      %v3254 = vunpack.c.l.b16 %v3186
      %v3255 = vunpack.c.l.b16 %v3187
      %v3256 = vunpack.c.l.b16 %v3188
      %v3257 = vunpack.c.l.b16 %v3189
      %v3258 = vunpack.c.l.b16 %v3190
      %v3259 = vunpack.c.l.b16 %v3191
      %v3260 = vunpack.c.l.b16 %v3192
      %v3261 = vunpack.c.l.b16 %v3193
      %v3262 = vunpack.c.l.b16 %v3194
      %v3263 = vunpack.c.l.b16 %v3195
      %v3264 = vunpack.c.l.b16 %v3196
      %v3265 = vunpack.c.l.b16 %v3197
      %v3266 = vunpack.c.l.b16 %v3198
      %v3267 = vunpack.c.l.b16 %v3199
      %v3268 = vunpack.c.l.b16 %v3200
      %v3269 = vunpack.c.l.b16 %v3201
      %v3270 = vunpack.c.l.b16 %v3202
      %v3271 = vunpack.c.l.b16 %v3203
      %v3272 = vunpack.c.l.b16 %v3204
      %v3273 = vunpack.c.l.b16 %v3205
      %v3274 = vunpack.c.l.b16 %v3206
      %v3275 = vunpack.c.l.b16 %v3207
      %v3276 = vunpack.c.l.b16 %v3208
      %v3277 = vunpack.c.l.b16 %v3209
      %v3278 = vunpack.c.l.b16 %v3210
      %v3279 = vunpack.c.l.b16 %v3211
      %v3280 = vunpack.c.l.b16 %v3212
      %v3281 = vunpack.c.l.b16 %v3213
      %v3282 = vunpack.c.l.b16 %v3214
      %v3283 = vunpack.c.l.b16 %v3215
      %v3284 = vunpack.c.l.b16 %v3216
      %v3285 = vunpack.c.l.b16 %v3217
      %v3286 = vunpack.c.l.b16 %v3218
      %v3287 = vpack.c.b16 %v3255, %v3254
      %v3288 = vpack.c.b16 %v3257, %v3256
      %v3289 = vpack.c.b16 %v3259, %v3258
      %v3290 = vpack.c.b16 %v3261, %v3260
      %v3291 = vpack.c.b16 %v3263, %v3262
      %v3292 = vpack.c.b16 %v3265, %v3264
      %v3293 = vpack.c.b16 %v3267, %v3266
      %v3294 = vpack.c.b16 %v3269, %v3268
      %v3295 = vpack.c.b16 %v3271, %v3270
      %v3296 = vpack.c.b16 %v3273, %v3272
      %v3297 = vpack.c.b16 %v3275, %v3274
      %v3298 = vpack.c.b16 %v3277, %v3276
      %v3299 = vpack.c.b16 %v3279, %v3278
      %v3300 = vpack.c.b16 %v3281, %v3280
      %v3301 = vpack.c.b16 %v3283, %v3282
      %v3302 = vpack.c.b16 %v3285, %v3284
      %v3303 = vpack.c.b16 %v3286, %v3286
      %v3305 = vshrl.u32 %v3287, 16
      %v3307 = vrot.slane %v3305, 3
      %v3308 = vshll.u32 %v3287, 16
      %v3310 = vrot.slane %v3308, 4
      %v3311 = vor.u32 %v3307, %v3310
      %v3313 = vshrl.u32 %v3288, 16
      %v3315 = vrot.slane %v3313, 3
      %v3316 = vshll.u32 %v3288, 16
      %v3318 = vrot.slane %v3316, 4
      %v3319 = vor.u32 %v3315, %v3318
      %v3320 = vsel %vm1659, %v3311, %v3319
      %v3322 = vshrl.u32 %v3289, 16
      %v3324 = vrot.slane %v3322, 3
      %v3325 = vshll.u32 %v3289, 16
      %v3327 = vrot.slane %v3325, 4
      %v3328 = vor.u32 %v3324, %v3327
      %v3329 = vsel %vm1659, %v3319, %v3328
      %v3331 = vshrl.u32 %v3290, 16
      %v3333 = vrot.slane %v3331, 3
      %v3334 = vshll.u32 %v3290, 16
      %v3336 = vrot.slane %v3334, 4
      %v3337 = vor.u32 %v3333, %v3336
      %v3338 = vsel %vm1659, %v3328, %v3337
      %v3340 = vshrl.u32 %v3291, 16
      %v3342 = vrot.slane %v3340, 3
      %v3343 = vshll.u32 %v3291, 16
      %v3345 = vrot.slane %v3343, 4
      %v3346 = vor.u32 %v3342, %v3345
      %v3347 = vsel %vm1659, %v3337, %v3346
      %v3349 = vshrl.u32 %v3292, 16
      %v3351 = vrot.slane %v3349, 3
      %v3352 = vshll.u32 %v3292, 16
      %v3354 = vrot.slane %v3352, 4
      %v3355 = vor.u32 %v3351, %v3354
      %v3356 = vsel %vm1659, %v3346, %v3355
      %v3358 = vshrl.u32 %v3293, 16
      %v3360 = vrot.slane %v3358, 3
      %v3361 = vshll.u32 %v3293, 16
      %v3363 = vrot.slane %v3361, 4
      %v3364 = vor.u32 %v3360, %v3363
      %v3365 = vsel %vm1659, %v3355, %v3364
      %v3367 = vshrl.u32 %v3294, 16
      %v3369 = vrot.slane %v3367, 3
      %v3370 = vshll.u32 %v3294, 16
      %v3372 = vrot.slane %v3370, 4
      %v3373 = vor.u32 %v3369, %v3372
      %v3374 = vsel %vm1659, %v3364, %v3373
      %v3376 = vshrl.u32 %v3295, 16
      %v3378 = vrot.slane %v3376, 3
      %v3379 = vshll.u32 %v3295, 16
      %v3381 = vrot.slane %v3379, 4
      %v3382 = vor.u32 %v3378, %v3381
      %v3383 = vsel %vm1659, %v3373, %v3382
      %v3385 = vshrl.u32 %v3296, 16
      %v3387 = vrot.slane %v3385, 3
      %v3388 = vshll.u32 %v3296, 16
      %v3390 = vrot.slane %v3388, 4
      %v3391 = vor.u32 %v3387, %v3390
      %v3392 = vsel %vm1659, %v3382, %v3391
      %v3394 = vshrl.u32 %v3297, 16
      %v3396 = vrot.slane %v3394, 3
      %v3397 = vshll.u32 %v3297, 16
      %v3399 = vrot.slane %v3397, 4
      %v3400 = vor.u32 %v3396, %v3399
      %v3401 = vsel %vm1659, %v3391, %v3400
      %v3403 = vshrl.u32 %v3298, 16
      %v3405 = vrot.slane %v3403, 3
      %v3406 = vshll.u32 %v3298, 16
      %v3408 = vrot.slane %v3406, 4
      %v3409 = vor.u32 %v3405, %v3408
      %v3410 = vsel %vm1659, %v3400, %v3409
      %v3412 = vshrl.u32 %v3299, 16
      %v3414 = vrot.slane %v3412, 3
      %v3415 = vshll.u32 %v3299, 16
      %v3417 = vrot.slane %v3415, 4
      %v3418 = vor.u32 %v3414, %v3417
      %v3419 = vsel %vm1659, %v3409, %v3418
      %v3421 = vshrl.u32 %v3300, 16
      %v3423 = vrot.slane %v3421, 3
      %v3424 = vshll.u32 %v3300, 16
      %v3426 = vrot.slane %v3424, 4
      %v3427 = vor.u32 %v3423, %v3426
      %v3428 = vsel %vm1659, %v3418, %v3427
      %v3430 = vshrl.u32 %v3301, 16
      %v3432 = vrot.slane %v3430, 3
      %v3433 = vshll.u32 %v3301, 16
      %v3435 = vrot.slane %v3433, 4
      %v3436 = vor.u32 %v3432, %v3435
      %v3437 = vsel %vm1659, %v3427, %v3436
      %v3439 = vshrl.u32 %v3302, 16
      %v3441 = vrot.slane %v3439, 3
      %v3442 = vshll.u32 %v3302, 16
      %v3444 = vrot.slane %v3442, 4
      %v3445 = vor.u32 %v3441, %v3444
      %v3446 = vsel %vm1659, %v3436, %v3445
      %v3448 = vshrl.u32 %v3303, 16
      %v3450 = vrot.slane %v3448, 3
      %v3451 = vshll.u32 %v3303, 16
      %v3453 = vrot.slane %v3451, 4
      %v3454 = vor.u32 %v3450, %v3453
      %v3455 = vsel %vm1659, %v3445, %v3454
      %v3457 = vsel %vm1434, %v3320, 0
      %v3460 = vsel %vm1434, %v3329, 0
      %v3463 = vsel %vm1434, %v3338, 0
      %v3466 = vsel %vm1434, %v3347, 0
      %v3469 = vsel %vm1434, %v3356, 0
      %v3472 = vsel %vm1434, %v3365, 0
      %v3475 = vsel %vm1434, %v3374, 0
      %v3478 = vsel %vm1434, %v3383, 0
      %v3481 = vsel %vm1434, %v3392, 0
      %v3484 = vsel %vm1434, %v3401, 0
      %v3487 = vsel %vm1434, %v3410, 0
      %v3490 = vsel %vm1434, %v3419, 0
      %v3493 = vsel %vm1434, %v3428, 0
      %v3496 = vsel %vm1434, %v3437, 0
      %v3499 = vsel %vm1434, %v3446, 0
      %v3502 = vsel %vm1434, %v3455, 0
      %v3505 = vsel %vm1483, %v3220, 0
      %3507 = vmatpush.bf16.msra.mxu0 0
      %3508 = vmatpush.bf16.msra.mxu0 0
      %3509 = vmatpush.bf16.msra.mxu0 0
      %3510 = vmatpush.bf16.msra.mxu0 0
      %3511 = vmatpush.bf16.msra.mxu0 0
      %3512 = vmatpush.bf16.msra.mxu0 0
      %3513 = vmatpush.bf16.msra.mxu0 0
      %3514 = vmatpush.bf16.msra.mxu0 %v3505
      %3515 = vmatmul.bf16.gmra.mxu0 %v3457
      %v3516 = vpop.f32.mrf.mxu0
      %v3517 = vadd.f32 0.0, %v3516
      %v3518 = vpop.f32.mrf.mxu0
      %v3519 = vadd.f32 0.0, %v3518
      %3520 = vmatmul.bf16.gmra.mxu0 %v3460
      %v3521 = vpop.f32.mrf.mxu0
      %v3522 = vadd.f32 0.0, %v3521
      %v3523 = vpop.f32.mrf.mxu0
      %v3524 = vadd.f32 0.0, %v3523
      %3525 = vmatmul.bf16.gmra.mxu0 %v3463
      %v3526 = vpop.f32.mrf.mxu0
      %v3527 = vadd.f32 0.0, %v3526
      %v3528 = vpop.f32.mrf.mxu0
      %v3529 = vadd.f32 0.0, %v3528
      %3530 = vmatmul.bf16.gmra.mxu0 %v3466
      %v3531 = vpop.f32.mrf.mxu0
      %v3532 = vadd.f32 0.0, %v3531
      %v3533 = vpop.f32.mrf.mxu0
      %v3534 = vadd.f32 0.0, %v3533
      %3535 = vmatmul.bf16.gmra.mxu0 %v3469
      %v3536 = vpop.f32.mrf.mxu0
      %v3537 = vadd.f32 0.0, %v3536
      %v3538 = vpop.f32.mrf.mxu0
      %v3539 = vadd.f32 0.0, %v3538
      %3540 = vmatmul.bf16.gmra.mxu0 %v3472
      %v3541 = vpop.f32.mrf.mxu0
      %v3542 = vadd.f32 0.0, %v3541
      %v3543 = vpop.f32.mrf.mxu0
      %v3544 = vadd.f32 0.0, %v3543
      %3545 = vmatmul.bf16.gmra.mxu0 %v3475
      %v3546 = vpop.f32.mrf.mxu0
      %v3547 = vadd.f32 0.0, %v3546
      %v3548 = vpop.f32.mrf.mxu0
      %v3549 = vadd.f32 0.0, %v3548
      %3550 = vmatmul.bf16.gmra.mxu0 %v3478
      %v3551 = vpop.f32.mrf.mxu0
      %v3552 = vadd.f32 0.0, %v3551
      %v3553 = vpop.f32.mrf.mxu0
      %v3554 = vadd.f32 0.0, %v3553
      %3555 = vmatmul.bf16.gmra.mxu0 %v3481
      %v3556 = vpop.f32.mrf.mxu0
      %v3557 = vadd.f32 0.0, %v3556
      %v3558 = vpop.f32.mrf.mxu0
      %v3559 = vadd.f32 0.0, %v3558
      %3560 = vmatmul.bf16.gmra.mxu0 %v3484
      %v3561 = vpop.f32.mrf.mxu0
      %v3562 = vadd.f32 0.0, %v3561
      %v3563 = vpop.f32.mrf.mxu0
      %v3564 = vadd.f32 0.0, %v3563
      %3565 = vmatmul.bf16.gmra.mxu0 %v3487
      %v3566 = vpop.f32.mrf.mxu0
      %v3567 = vadd.f32 0.0, %v3566
      %v3568 = vpop.f32.mrf.mxu0
      %v3569 = vadd.f32 0.0, %v3568
      %3570 = vmatmul.bf16.gmra.mxu0 %v3490
      %v3571 = vpop.f32.mrf.mxu0
      %v3572 = vadd.f32 0.0, %v3571
      %v3573 = vpop.f32.mrf.mxu0
      %v3574 = vadd.f32 0.0, %v3573
      %3575 = vmatmul.bf16.gmra.mxu0 %v3493
      %v3576 = vpop.f32.mrf.mxu0
      %v3577 = vadd.f32 0.0, %v3576
      %v3578 = vpop.f32.mrf.mxu0
      %v3579 = vadd.f32 0.0, %v3578
      %3580 = vmatmul.bf16.gmra.mxu0 %v3496
      %v3581 = vpop.f32.mrf.mxu0
      %v3582 = vadd.f32 0.0, %v3581
      %v3583 = vpop.f32.mrf.mxu0
      %v3584 = vadd.f32 0.0, %v3583
      %3585 = vmatmul.bf16.gmra.mxu0 %v3499
      %v3586 = vpop.f32.mrf.mxu0
      %v3587 = vadd.f32 0.0, %v3586
      %v3588 = vpop.f32.mrf.mxu0
      %v3589 = vadd.f32 0.0, %v3588
      %3590 = vmatmul.bf16.gmra.mxu0 %v3502
      %v3591 = vpop.f32.mrf.mxu0
      %v3592 = vadd.f32 0.0, %v3591
      %v3593 = vpop.f32.mrf.mxu0
      %v3594 = vadd.f32 0.0, %v3593
      %3595 = vdwg.mxu0
      %v3596 = vadd.f32 %v3121, %v3517
      %v3597 = vadd.f32 %v3122, %v3519
      %v3598 = vadd.f32 %v3123, %v3522
      %v3599 = vadd.f32 %v3124, %v3524
      %v3600 = vadd.f32 %v3125, %v3527
      %v3601 = vadd.f32 %v3126, %v3529
      %v3602 = vadd.f32 %v3127, %v3532
      %v3603 = vadd.f32 %v3128, %v3534
      %v3604 = vadd.f32 %v3129, %v3537
      %v3605 = vadd.f32 %v3130, %v3539
      %v3606 = vadd.f32 %v3131, %v3542
      %v3607 = vadd.f32 %v3132, %v3544
      %v3608 = vadd.f32 %v3133, %v3547
      %v3609 = vadd.f32 %v3134, %v3549
      %v3610 = vadd.f32 %v3135, %v3552
      %v3611 = vadd.f32 %v3136, %v3554
      %v3612 = vadd.f32 %v3137, %v3557
      %v3613 = vadd.f32 %v3138, %v3559
      %v3614 = vadd.f32 %v3139, %v3562
      %v3615 = vadd.f32 %v3140, %v3564
      %v3616 = vadd.f32 %v3141, %v3567
      %v3617 = vadd.f32 %v3142, %v3569
      %v3618 = vadd.f32 %v3143, %v3572
      %v3619 = vadd.f32 %v3144, %v3574
      %v3620 = vadd.f32 %v3145, %v3577
      %v3621 = vadd.f32 %v3146, %v3579
      %v3622 = vadd.f32 %v3147, %v3582
      %v3623 = vadd.f32 %v3148, %v3584
      %v3624 = vadd.f32 %v3149, %v3587
      %v3625 = vadd.f32 %v3150, %v3589
      %v3626 = vadd.f32 %v3151, %v3592
      %v3627 = vadd.f32 %v3152, %v3594
      %s3628 = scalar_lea.vmem %s3, 8
      %v3629 = vld [vmem:[%s3628] sm:$0x3]
      %v3662 = vunpack.c.l.b16 %v3154
      %v3663 = vunpack.c.l.b16 %v3155
      %v3664 = vunpack.c.l.b16 %v3156
      %v3665 = vunpack.c.l.b16 %v3157
      %v3666 = vunpack.c.l.b16 %v3158
      %v3667 = vunpack.c.l.b16 %v3159
      %v3668 = vunpack.c.l.b16 %v3160
      %v3669 = vunpack.c.l.b16 %v3161
      %v3670 = vunpack.c.l.b16 %v3162
      %v3671 = vunpack.c.l.b16 %v3163
      %v3672 = vunpack.c.l.b16 %v3164
      %v3673 = vunpack.c.l.b16 %v3165
      %v3674 = vunpack.c.l.b16 %v3166
      %v3675 = vunpack.c.l.b16 %v3167
      %v3676 = vunpack.c.l.b16 %v3168
      %v3677 = vunpack.c.l.b16 %v3169
      %v3678 = vunpack.c.l.b16 %v3170
      %v3679 = vunpack.c.l.b16 %v3171
      %v3680 = vunpack.c.l.b16 %v3172
      %v3681 = vunpack.c.l.b16 %v3173
      %v3682 = vunpack.c.l.b16 %v3174
      %v3683 = vunpack.c.l.b16 %v3175
      %v3684 = vunpack.c.l.b16 %v3176
      %v3685 = vunpack.c.l.b16 %v3177
      %v3686 = vunpack.c.l.b16 %v3178
      %v3687 = vunpack.c.l.b16 %v3179
      %v3688 = vunpack.c.l.b16 %v3180
      %v3689 = vunpack.c.l.b16 %v3181
      %v3690 = vunpack.c.l.b16 %v3182
      %v3691 = vunpack.c.l.b16 %v3183
      %v3692 = vunpack.c.l.b16 %v3184
      %v3693 = vunpack.c.l.b16 %v3185
      %v3694 = vpack.c.b16 %v3663, %v3662
      %v3695 = vpack.c.b16 %v3665, %v3664
      %v3696 = vpack.c.b16 %v3667, %v3666
      %v3697 = vpack.c.b16 %v3669, %v3668
      %v3698 = vpack.c.b16 %v3671, %v3670
      %v3699 = vpack.c.b16 %v3673, %v3672
      %v3700 = vpack.c.b16 %v3675, %v3674
      %v3701 = vpack.c.b16 %v3677, %v3676
      %v3702 = vpack.c.b16 %v3679, %v3678
      %v3703 = vpack.c.b16 %v3681, %v3680
      %v3704 = vpack.c.b16 %v3683, %v3682
      %v3705 = vpack.c.b16 %v3685, %v3684
      %v3706 = vpack.c.b16 %v3687, %v3686
      %v3707 = vpack.c.b16 %v3689, %v3688
      %v3708 = vpack.c.b16 %v3691, %v3690
      %v3709 = vpack.c.b16 %v3693, %v3692
      %v3711 = vsel %vm1434, %v3694, 0
      %v3714 = vsel %vm1434, %v3695, 0
      %v3717 = vsel %vm1434, %v3696, 0
      %v3720 = vsel %vm1434, %v3697, 0
      %v3723 = vsel %vm1434, %v3698, 0
      %v3726 = vsel %vm1434, %v3699, 0
      %v3729 = vsel %vm1434, %v3700, 0
      %v3732 = vsel %vm1434, %v3701, 0
      %v3735 = vsel %vm1434, %v3702, 0
      %v3738 = vsel %vm1434, %v3703, 0
      %v3741 = vsel %vm1434, %v3704, 0
      %v3744 = vsel %vm1434, %v3705, 0
      %v3747 = vsel %vm1434, %v3706, 0
      %v3750 = vsel %vm1434, %v3707, 0
      %v3753 = vsel %vm1434, %v3708, 0
      %v3756 = vsel %vm1434, %v3709, 0
      %v3759 = vsel %vm1483, %v3629, 0
      %3761 = vmatpush.bf16.msra.mxu0 0
      %3762 = vmatpush.bf16.msra.mxu0 0
      %3763 = vmatpush.bf16.msra.mxu0 0
      %3764 = vmatpush.bf16.msra.mxu0 0
      %3765 = vmatpush.bf16.msra.mxu0 0
      %3766 = vmatpush.bf16.msra.mxu0 0
      %3767 = vmatpush.bf16.msra.mxu0 0
      %3768 = vmatpush.bf16.msra.mxu0 %v3759
      %3769 = vmatmul.bf16.gmra.mxu0 %v3711
      %v3770 = vpop.f32.mrf.mxu0
      %v3771 = vadd.f32 0.0, %v3770
      %v3772 = vpop.f32.mrf.mxu0
      %v3773 = vadd.f32 0.0, %v3772
      %3774 = vmatmul.bf16.gmra.mxu0 %v3714
      %v3775 = vpop.f32.mrf.mxu0
      %v3776 = vadd.f32 0.0, %v3775
      %v3777 = vpop.f32.mrf.mxu0
      %v3778 = vadd.f32 0.0, %v3777
      %3779 = vmatmul.bf16.gmra.mxu0 %v3717
      %v3780 = vpop.f32.mrf.mxu0
      %v3781 = vadd.f32 0.0, %v3780
      %v3782 = vpop.f32.mrf.mxu0
      %v3783 = vadd.f32 0.0, %v3782
      %3784 = vmatmul.bf16.gmra.mxu0 %v3720
      %v3785 = vpop.f32.mrf.mxu0
      %v3786 = vadd.f32 0.0, %v3785
      %v3787 = vpop.f32.mrf.mxu0
      %v3788 = vadd.f32 0.0, %v3787
      %3789 = vmatmul.bf16.gmra.mxu0 %v3723
      %v3790 = vpop.f32.mrf.mxu0
      %v3791 = vadd.f32 0.0, %v3790
      %v3792 = vpop.f32.mrf.mxu0
      %v3793 = vadd.f32 0.0, %v3792
      %3794 = vmatmul.bf16.gmra.mxu0 %v3726
      %v3795 = vpop.f32.mrf.mxu0
      %v3796 = vadd.f32 0.0, %v3795
      %v3797 = vpop.f32.mrf.mxu0
      %v3798 = vadd.f32 0.0, %v3797
      %3799 = vmatmul.bf16.gmra.mxu0 %v3729
      %v3800 = vpop.f32.mrf.mxu0
      %v3801 = vadd.f32 0.0, %v3800
      %v3802 = vpop.f32.mrf.mxu0
      %v3803 = vadd.f32 0.0, %v3802
      %3804 = vmatmul.bf16.gmra.mxu0 %v3732
      %v3805 = vpop.f32.mrf.mxu0
      %v3806 = vadd.f32 0.0, %v3805
      %v3807 = vpop.f32.mrf.mxu0
      %v3808 = vadd.f32 0.0, %v3807
      %3809 = vmatmul.bf16.gmra.mxu0 %v3735
      %v3810 = vpop.f32.mrf.mxu0
      %v3811 = vadd.f32 0.0, %v3810
      %v3812 = vpop.f32.mrf.mxu0
      %v3813 = vadd.f32 0.0, %v3812
      %3814 = vmatmul.bf16.gmra.mxu0 %v3738
      %v3815 = vpop.f32.mrf.mxu0
      %v3816 = vadd.f32 0.0, %v3815
      %v3817 = vpop.f32.mrf.mxu0
      %v3818 = vadd.f32 0.0, %v3817
      %3819 = vmatmul.bf16.gmra.mxu0 %v3741
      %v3820 = vpop.f32.mrf.mxu0
      %v3821 = vadd.f32 0.0, %v3820
      %v3822 = vpop.f32.mrf.mxu0
      %v3823 = vadd.f32 0.0, %v3822
      %3824 = vmatmul.bf16.gmra.mxu0 %v3744
      %v3825 = vpop.f32.mrf.mxu0
      %v3826 = vadd.f32 0.0, %v3825
      %v3827 = vpop.f32.mrf.mxu0
      %v3828 = vadd.f32 0.0, %v3827
      %3829 = vmatmul.bf16.gmra.mxu0 %v3747
      %v3830 = vpop.f32.mrf.mxu0
      %v3831 = vadd.f32 0.0, %v3830
      %v3832 = vpop.f32.mrf.mxu0
      %v3833 = vadd.f32 0.0, %v3832
      %3834 = vmatmul.bf16.gmra.mxu0 %v3750
      %v3835 = vpop.f32.mrf.mxu0
      %v3836 = vadd.f32 0.0, %v3835
      %v3837 = vpop.f32.mrf.mxu0
      %v3838 = vadd.f32 0.0, %v3837
      %3839 = vmatmul.bf16.gmra.mxu0 %v3753
      %v3840 = vpop.f32.mrf.mxu0
      %v3841 = vadd.f32 0.0, %v3840
      %v3842 = vpop.f32.mrf.mxu0
      %v3843 = vadd.f32 0.0, %v3842
      %3844 = vmatmul.bf16.gmra.mxu0 %v3756
      %v3845 = vpop.f32.mrf.mxu0
      %v3846 = vadd.f32 0.0, %v3845
      %v3847 = vpop.f32.mrf.mxu0
      %v3848 = vadd.f32 0.0, %v3847
      %3849 = vdwg.mxu0
      %v3850 = vadd.f32 %v3596, %v3771
      %v3851 = vadd.f32 %v3597, %v3773
      %v3852 = vadd.f32 %v3598, %v3776
      %v3853 = vadd.f32 %v3599, %v3778
      %v3854 = vadd.f32 %v3600, %v3781
      %v3855 = vadd.f32 %v3601, %v3783
      %v3856 = vadd.f32 %v3602, %v3786
      %v3857 = vadd.f32 %v3603, %v3788
      %v3858 = vadd.f32 %v3604, %v3791
      %v3859 = vadd.f32 %v3605, %v3793
      %v3860 = vadd.f32 %v3606, %v3796
      %v3861 = vadd.f32 %v3607, %v3798
      %v3862 = vadd.f32 %v3608, %v3801
      %v3863 = vadd.f32 %v3609, %v3803
      %v3864 = vadd.f32 %v3610, %v3806
      %v3865 = vadd.f32 %v3611, %v3808
      %v3866 = vadd.f32 %v3612, %v3811
      %v3867 = vadd.f32 %v3613, %v3813
      %v3868 = vadd.f32 %v3614, %v3816
      %v3869 = vadd.f32 %v3615, %v3818
      %v3870 = vadd.f32 %v3616, %v3821
      %v3871 = vadd.f32 %v3617, %v3823
      %v3872 = vadd.f32 %v3618, %v3826
      %v3873 = vadd.f32 %v3619, %v3828
      %v3874 = vadd.f32 %v3620, %v3831
      %v3875 = vadd.f32 %v3621, %v3833
      %v3876 = vadd.f32 %v3622, %v3836
      %v3877 = vadd.f32 %v3623, %v3838
      %v3878 = vadd.f32 %v3624, %v3841
      %v3879 = vadd.f32 %v3625, %v3843
      %v3880 = vadd.f32 %v3626, %v3846
      %v3881 = vadd.f32 %v3627, %v3848
      %v3882 = vld [vmem:[#allocation2 + $0xc] sm:$0xf]
      %v3883 = vld [vmem:[#allocation2 + $0x10] sm:$0xf]
      %v3884 = vld [vmem:[#allocation2 + $0x14] sm:$0xf]
      %v3885 = vld [vmem:[#allocation2 + $0x18] sm:$0xf]
      %v3886 = vld [vmem:[#allocation2 + $0x1c] sm:$0xf]
      %v3887 = vld [vmem:[#allocation2 + $0x20] sm:$0xf]
      %v3888 = vld [vmem:[#allocation2 + $0x24] sm:$0xf]
      %v3889 = vld [vmem:[#allocation2 + $0x28] sm:$0xf]
      %v3890 = vld [vmem:[#allocation2 + $0x2c] sm:$0xf]
      %v3891 = vld [vmem:[#allocation2 + $0x30] sm:$0xf]
      %v3892 = vld [vmem:[#allocation2 + $0x34] sm:$0xf]
      %v3893 = vld [vmem:[#allocation2 + $0x38] sm:$0xf]
      %v3894 = vld [vmem:[#allocation2 + $0x3c] sm:$0xf]
      %v3895 = vld [vmem:[#allocation2 + $0x40] sm:$0xf]
      %v3896 = vld [vmem:[#allocation2 + $0x44] sm:$0xf]
      %v3897 = vld [vmem:[#allocation2 + $0x48] sm:$0xf]
      %v3898 = vld [vmem:[#allocation2 + $0x4c] sm:$0xf]
      %v3899 = vld [vmem:[#allocation2 + $0x50] sm:$0xf]
      %v3900 = vld [vmem:[#allocation2 + $0x54] sm:$0xf]
      %v3901 = vld [vmem:[#allocation2 + $0x58] sm:$0xf]
      %v3902 = vld [vmem:[#allocation2 + $0x5c] sm:$0xf]
      %v3903 = vld [vmem:[#allocation2 + $0x60] sm:$0xf]
      %v3904 = vld [vmem:[#allocation2 + $0x64] sm:$0xf]
      %v3905 = vld [vmem:[#allocation2 + $0x68] sm:$0xf]
      %v3906 = vld [vmem:[#allocation2 + $0x6c] sm:$0xf]
      %v3907 = vld [vmem:[#allocation2 + $0x70] sm:$0xf]
      %v3908 = vld [vmem:[#allocation2 + $0x74] sm:$0xf]
      %v3909 = vld [vmem:[#allocation2 + $0x78] sm:$0xf]
      %v3910 = vld [vmem:[#allocation2 + $0x7c] sm:$0xf]
      %v3911 = vld [vmem:[#allocation2 + $0x80] sm:$0xf]
      %v3912 = vld [vmem:[#allocation2 + $0x84] sm:$0xf]
      %v3913 = vld [vmem:[#allocation2 + $0x88] sm:$0xf]
      %v3914 = vld [vmem:[#allocation2 + $0x8c] sm:$0x1]
      %v3915 = vsel %vm2505, 0, %v3882
      %v3916 = vsel %vm2512, 0, %v3883
      %v3917 = vsel %vm2519, 0, %v3884
      %v3918 = vsel %vm2526, 0, %v3885
      %v3919 = vsel %vm2533, 0, %v3886
      %v3920 = vsel %vm2540, 0, %v3887
      %v3921 = vsel %vm2547, 0, %v3888
      %v3922 = vsel %vm2554, 0, %v3889
      %v3923 = vsel %vm2561, 0, %v3890
      %v3924 = vsel %vm2568, 0, %v3891
      %v3925 = vsel %vm2575, 0, %v3892
      %v3926 = vsel %vm2582, 0, %v3893
      %v3927 = vsel %vm2589, 0, %v3894
      %v3928 = vsel %vm2596, 0, %v3895
      %v3929 = vsel %vm2603, 0, %v3896
      %v3930 = vsel %vm2610, 0, %v3897
      %v3931 = vsel %vm2617, 0, %v3898
      %v3932 = vsel %vm2624, 0, %v3899
      %v3933 = vsel %vm2631, 0, %v3900
      %v3934 = vsel %vm2638, 0, %v3901
      %v3935 = vsel %vm2645, 0, %v3902
      %v3936 = vsel %vm2652, 0, %v3903
      %v3937 = vsel %vm2659, 0, %v3904
      %v3938 = vsel %vm2666, 0, %v3905
      %v3939 = vsel %vm2673, 0, %v3906
      %v3940 = vsel %vm2680, 0, %v3907
      %v3941 = vsel %vm2687, 0, %v3908
      %v3942 = vsel %vm2694, 0, %v3909
      %v3943 = vsel %vm2701, 0, %v3910
      %v3944 = vsel %vm2708, 0, %v3911
      %v3945 = vsel %vm2715, 0, %v3912
      %v3946 = vsel %vm2722, 0, %v3913
      %v3947 = vsel %vm2729, 0, %v3914
      %s3948 = scalar_lea.vmem %s3, 10
      %v3949 = vld [vmem:[%s3948] sm:$0x3]
      %v3983 = vunpack.c.l.b16 %v3915
      %v3984 = vunpack.c.l.b16 %v3916
      %v3985 = vunpack.c.l.b16 %v3917
      %v3986 = vunpack.c.l.b16 %v3918
      %v3987 = vunpack.c.l.b16 %v3919
      %v3988 = vunpack.c.l.b16 %v3920
      %v3989 = vunpack.c.l.b16 %v3921
      %v3990 = vunpack.c.l.b16 %v3922
      %v3991 = vunpack.c.l.b16 %v3923
      %v3992 = vunpack.c.l.b16 %v3924
      %v3993 = vunpack.c.l.b16 %v3925
      %v3994 = vunpack.c.l.b16 %v3926
      %v3995 = vunpack.c.l.b16 %v3927
      %v3996 = vunpack.c.l.b16 %v3928
      %v3997 = vunpack.c.l.b16 %v3929
      %v3998 = vunpack.c.l.b16 %v3930
      %v3999 = vunpack.c.l.b16 %v3931
      %v4000 = vunpack.c.l.b16 %v3932
      %v4001 = vunpack.c.l.b16 %v3933
      %v4002 = vunpack.c.l.b16 %v3934
      %v4003 = vunpack.c.l.b16 %v3935
      %v4004 = vunpack.c.l.b16 %v3936
      %v4005 = vunpack.c.l.b16 %v3937
      %v4006 = vunpack.c.l.b16 %v3938
      %v4007 = vunpack.c.l.b16 %v3939
      %v4008 = vunpack.c.l.b16 %v3940
      %v4009 = vunpack.c.l.b16 %v3941
      %v4010 = vunpack.c.l.b16 %v3942
      %v4011 = vunpack.c.l.b16 %v3943
      %v4012 = vunpack.c.l.b16 %v3944
      %v4013 = vunpack.c.l.b16 %v3945
      %v4014 = vunpack.c.l.b16 %v3946
      %v4015 = vunpack.c.l.b16 %v3947
      %v4016 = vpack.c.b16 %v3984, %v3983
      %v4017 = vpack.c.b16 %v3986, %v3985
      %v4018 = vpack.c.b16 %v3988, %v3987
      %v4019 = vpack.c.b16 %v3990, %v3989
      %v4020 = vpack.c.b16 %v3992, %v3991
      %v4021 = vpack.c.b16 %v3994, %v3993
      %v4022 = vpack.c.b16 %v3996, %v3995
      %v4023 = vpack.c.b16 %v3998, %v3997
      %v4024 = vpack.c.b16 %v4000, %v3999
      %v4025 = vpack.c.b16 %v4002, %v4001
      %v4026 = vpack.c.b16 %v4004, %v4003
      %v4027 = vpack.c.b16 %v4006, %v4005
      %v4028 = vpack.c.b16 %v4008, %v4007
      %v4029 = vpack.c.b16 %v4010, %v4009
      %v4030 = vpack.c.b16 %v4012, %v4011
      %v4031 = vpack.c.b16 %v4014, %v4013
      %v4032 = vpack.c.b16 %v4015, %v4015
      %v4034 = vshrl.u32 %v4016, 16
      %v4036 = vshll.u32 %v4016, 16
      %v4038 = vrot.slane %v4036, 1
      %v4039 = vor.u32 %v4034, %v4038
      %v4041 = vshll.u32 %v4017, 16
      %v4043 = vrot.slane %v4041, 1
      %v4044 = vsel %vm2848, %v4039, %v4043
      %v4045 = vshrl.u32 %v4017, 16
      %v4047 = vor.u32 %v4045, %v4043
      %v4049 = vshll.u32 %v4018, 16
      %v4051 = vrot.slane %v4049, 1
      %v4052 = vsel %vm2848, %v4047, %v4051
      %v4053 = vshrl.u32 %v4018, 16
      %v4055 = vor.u32 %v4053, %v4051
      %v4057 = vshll.u32 %v4019, 16
      %v4059 = vrot.slane %v4057, 1
      %v4060 = vsel %vm2848, %v4055, %v4059
      %v4061 = vshrl.u32 %v4019, 16
      %v4063 = vor.u32 %v4061, %v4059
      %v4065 = vshll.u32 %v4020, 16
      %v4067 = vrot.slane %v4065, 1
      %v4068 = vsel %vm2848, %v4063, %v4067
      %v4069 = vshrl.u32 %v4020, 16
      %v4071 = vor.u32 %v4069, %v4067
      %v4073 = vshll.u32 %v4021, 16
      %v4075 = vrot.slane %v4073, 1
      %v4076 = vsel %vm2848, %v4071, %v4075
      %v4077 = vshrl.u32 %v4021, 16
      %v4079 = vor.u32 %v4077, %v4075
      %v4081 = vshll.u32 %v4022, 16
      %v4083 = vrot.slane %v4081, 1
      %v4084 = vsel %vm2848, %v4079, %v4083
      %v4085 = vshrl.u32 %v4022, 16
      %v4087 = vor.u32 %v4085, %v4083
      %v4089 = vshll.u32 %v4023, 16
      %v4091 = vrot.slane %v4089, 1
      %v4092 = vsel %vm2848, %v4087, %v4091
      %v4093 = vshrl.u32 %v4023, 16
      %v4095 = vor.u32 %v4093, %v4091
      %v4097 = vshll.u32 %v4024, 16
      %v4099 = vrot.slane %v4097, 1
      %v4100 = vsel %vm2848, %v4095, %v4099
      %v4101 = vshrl.u32 %v4024, 16
      %v4103 = vor.u32 %v4101, %v4099
      %v4105 = vshll.u32 %v4025, 16
      %v4107 = vrot.slane %v4105, 1
      %v4108 = vsel %vm2848, %v4103, %v4107
      %v4109 = vshrl.u32 %v4025, 16
      %v4111 = vor.u32 %v4109, %v4107
      %v4113 = vshll.u32 %v4026, 16
      %v4115 = vrot.slane %v4113, 1
      %v4116 = vsel %vm2848, %v4111, %v4115
      %v4117 = vshrl.u32 %v4026, 16
      %v4119 = vor.u32 %v4117, %v4115
      %v4121 = vshll.u32 %v4027, 16
      %v4123 = vrot.slane %v4121, 1
      %v4124 = vsel %vm2848, %v4119, %v4123
      %v4125 = vshrl.u32 %v4027, 16
      %v4127 = vor.u32 %v4125, %v4123
      %v4129 = vshll.u32 %v4028, 16
      %v4131 = vrot.slane %v4129, 1
      %v4132 = vsel %vm2848, %v4127, %v4131
      %v4133 = vshrl.u32 %v4028, 16
      %v4135 = vor.u32 %v4133, %v4131
      %v4137 = vshll.u32 %v4029, 16
      %v4139 = vrot.slane %v4137, 1
      %v4140 = vsel %vm2848, %v4135, %v4139
      %v4141 = vshrl.u32 %v4029, 16
      %v4143 = vor.u32 %v4141, %v4139
      %v4145 = vshll.u32 %v4030, 16
      %v4147 = vrot.slane %v4145, 1
      %v4148 = vsel %vm2848, %v4143, %v4147
      %v4149 = vshrl.u32 %v4030, 16
      %v4151 = vor.u32 %v4149, %v4147
      %v4153 = vshll.u32 %v4031, 16
      %v4155 = vrot.slane %v4153, 1
      %v4156 = vsel %vm2848, %v4151, %v4155
      %v4157 = vshrl.u32 %v4031, 16
      %v4159 = vor.u32 %v4157, %v4155
      %v4161 = vshll.u32 %v4032, 16
      %v4163 = vrot.slane %v4161, 1
      %v4164 = vsel %vm2848, %v4159, %v4163
      %v4166 = vsel %vm1434, %v4044, 0
      %v4169 = vsel %vm1434, %v4052, 0
      %v4172 = vsel %vm1434, %v4060, 0
      %v4175 = vsel %vm1434, %v4068, 0
      %v4178 = vsel %vm1434, %v4076, 0
      %v4181 = vsel %vm1434, %v4084, 0
      %v4184 = vsel %vm1434, %v4092, 0
      %v4187 = vsel %vm1434, %v4100, 0
      %v4190 = vsel %vm1434, %v4108, 0
      %v4193 = vsel %vm1434, %v4116, 0
      %v4196 = vsel %vm1434, %v4124, 0
      %v4199 = vsel %vm1434, %v4132, 0
      %v4202 = vsel %vm1434, %v4140, 0
      %v4205 = vsel %vm1434, %v4148, 0
      %v4208 = vsel %vm1434, %v4156, 0
      %v4211 = vsel %vm1434, %v4164, 0
      %v4214 = vsel %vm1483, %v3949, 0
      %4216 = vmatpush.bf16.msra.mxu0 0
      %4217 = vmatpush.bf16.msra.mxu0 0
      %4218 = vmatpush.bf16.msra.mxu0 0
      %4219 = vmatpush.bf16.msra.mxu0 0
      %4220 = vmatpush.bf16.msra.mxu0 0
      %4221 = vmatpush.bf16.msra.mxu0 0
      %4222 = vmatpush.bf16.msra.mxu0 0
      %4223 = vmatpush.bf16.msra.mxu0 %v4214
      %4224 = vmatmul.bf16.gmra.mxu0 %v4166
      %v4225 = vpop.f32.mrf.mxu0
      %v4226 = vadd.f32 0.0, %v4225
      %v4227 = vpop.f32.mrf.mxu0
      %v4228 = vadd.f32 0.0, %v4227
      %4229 = vmatmul.bf16.gmra.mxu0 %v4169
      %v4230 = vpop.f32.mrf.mxu0
      %v4231 = vadd.f32 0.0, %v4230
      %v4232 = vpop.f32.mrf.mxu0
      %v4233 = vadd.f32 0.0, %v4232
      %4234 = vmatmul.bf16.gmra.mxu0 %v4172
      %v4235 = vpop.f32.mrf.mxu0
      %v4236 = vadd.f32 0.0, %v4235
      %v4237 = vpop.f32.mrf.mxu0
      %v4238 = vadd.f32 0.0, %v4237
      %4239 = vmatmul.bf16.gmra.mxu0 %v4175
      %v4240 = vpop.f32.mrf.mxu0
      %v4241 = vadd.f32 0.0, %v4240
      %v4242 = vpop.f32.mrf.mxu0
      %v4243 = vadd.f32 0.0, %v4242
      %4244 = vmatmul.bf16.gmra.mxu0 %v4178
      %v4245 = vpop.f32.mrf.mxu0
      %v4246 = vadd.f32 0.0, %v4245
      %v4247 = vpop.f32.mrf.mxu0
      %v4248 = vadd.f32 0.0, %v4247
      %4249 = vmatmul.bf16.gmra.mxu0 %v4181
      %v4250 = vpop.f32.mrf.mxu0
      %v4251 = vadd.f32 0.0, %v4250
      %v4252 = vpop.f32.mrf.mxu0
      %v4253 = vadd.f32 0.0, %v4252
      %4254 = vmatmul.bf16.gmra.mxu0 %v4184
      %v4255 = vpop.f32.mrf.mxu0
      %v4256 = vadd.f32 0.0, %v4255
      %v4257 = vpop.f32.mrf.mxu0
      %v4258 = vadd.f32 0.0, %v4257
      %4259 = vmatmul.bf16.gmra.mxu0 %v4187
      %v4260 = vpop.f32.mrf.mxu0
      %v4261 = vadd.f32 0.0, %v4260
      %v4262 = vpop.f32.mrf.mxu0
      %v4263 = vadd.f32 0.0, %v4262
      %4264 = vmatmul.bf16.gmra.mxu0 %v4190
      %v4265 = vpop.f32.mrf.mxu0
      %v4266 = vadd.f32 0.0, %v4265
      %v4267 = vpop.f32.mrf.mxu0
      %v4268 = vadd.f32 0.0, %v4267
      %4269 = vmatmul.bf16.gmra.mxu0 %v4193
      %v4270 = vpop.f32.mrf.mxu0
      %v4271 = vadd.f32 0.0, %v4270
      %v4272 = vpop.f32.mrf.mxu0
      %v4273 = vadd.f32 0.0, %v4272
      %4274 = vmatmul.bf16.gmra.mxu0 %v4196
      %v4275 = vpop.f32.mrf.mxu0
      %v4276 = vadd.f32 0.0, %v4275
      %v4277 = vpop.f32.mrf.mxu0
      %v4278 = vadd.f32 0.0, %v4277
      %4279 = vmatmul.bf16.gmra.mxu0 %v4199
      %v4280 = vpop.f32.mrf.mxu0
      %v4281 = vadd.f32 0.0, %v4280
      %v4282 = vpop.f32.mrf.mxu0
      %v4283 = vadd.f32 0.0, %v4282
      %4284 = vmatmul.bf16.gmra.mxu0 %v4202
      %v4285 = vpop.f32.mrf.mxu0
      %v4286 = vadd.f32 0.0, %v4285
      %v4287 = vpop.f32.mrf.mxu0
      %v4288 = vadd.f32 0.0, %v4287
      %4289 = vmatmul.bf16.gmra.mxu0 %v4205
      %v4290 = vpop.f32.mrf.mxu0
      %v4291 = vadd.f32 0.0, %v4290
      %v4292 = vpop.f32.mrf.mxu0
      %v4293 = vadd.f32 0.0, %v4292
      %4294 = vmatmul.bf16.gmra.mxu0 %v4208
      %v4295 = vpop.f32.mrf.mxu0
      %v4296 = vadd.f32 0.0, %v4295
      %v4297 = vpop.f32.mrf.mxu0
      %v4298 = vadd.f32 0.0, %v4297
      %4299 = vmatmul.bf16.gmra.mxu0 %v4211
      %v4300 = vpop.f32.mrf.mxu0
      %v4301 = vadd.f32 0.0, %v4300
      %v4302 = vpop.f32.mrf.mxu0
      %v4303 = vadd.f32 0.0, %v4302
      %4304 = vdwg.mxu0
      %v4305 = vadd.f32 %v3850, %v4226
      %v4306 = vadd.f32 %v3851, %v4228
      %v4307 = vadd.f32 %v3852, %v4231
      %v4308 = vadd.f32 %v3853, %v4233
      %v4309 = vadd.f32 %v3854, %v4236
      %v4310 = vadd.f32 %v3855, %v4238
      %v4311 = vadd.f32 %v3856, %v4241
      %v4312 = vadd.f32 %v3857, %v4243
      %v4313 = vadd.f32 %v3858, %v4246
      %v4314 = vadd.f32 %v3859, %v4248
      %v4315 = vadd.f32 %v3860, %v4251
      %v4316 = vadd.f32 %v3861, %v4253
      %v4317 = vadd.f32 %v3862, %v4256
      %v4318 = vadd.f32 %v3863, %v4258
      %v4319 = vadd.f32 %v3864, %v4261
      %v4320 = vadd.f32 %v3865, %v4263
      %v4321 = vadd.f32 %v3866, %v4266
      %v4322 = vadd.f32 %v3867, %v4268
      %v4323 = vadd.f32 %v3868, %v4271
      %v4324 = vadd.f32 %v3869, %v4273
      %v4325 = vadd.f32 %v3870, %v4276
      %v4326 = vadd.f32 %v3871, %v4278
      %v4327 = vadd.f32 %v3872, %v4281
      %v4328 = vadd.f32 %v3873, %v4283
      %v4329 = vadd.f32 %v3874, %v4286
      %v4330 = vadd.f32 %v3875, %v4288
      %v4331 = vadd.f32 %v3876, %v4291
      %v4332 = vadd.f32 %v3877, %v4293
      %v4333 = vadd.f32 %v3878, %v4296
      %v4334 = vadd.f32 %v3879, %v4298
      %v4335 = vadd.f32 %v3880, %v4301
      %v4336 = vadd.f32 %v3881, %v4303
      %v4337 = vld [vmem:[#allocation2 + $0x10] sm:$0x8]
      %v4338 = vld [vmem:[#allocation2 + $0x14] sm:$0xf]
      %v4339 = vld [vmem:[#allocation2 + $0x18] sm:$0xf]
      %v4340 = vld [vmem:[#allocation2 + $0x1c] sm:$0xf]
      %v4341 = vld [vmem:[#allocation2 + $0x20] sm:$0xf]
      %v4342 = vld [vmem:[#allocation2 + $0x24] sm:$0xf]
      %v4343 = vld [vmem:[#allocation2 + $0x28] sm:$0xf]
      %v4344 = vld [vmem:[#allocation2 + $0x2c] sm:$0xf]
      %v4345 = vld [vmem:[#allocation2 + $0x30] sm:$0xf]
      %v4346 = vld [vmem:[#allocation2 + $0x34] sm:$0xf]
      %v4347 = vld [vmem:[#allocation2 + $0x38] sm:$0xf]
      %v4348 = vld [vmem:[#allocation2 + $0x3c] sm:$0xf]
      %v4349 = vld [vmem:[#allocation2 + $0x40] sm:$0xf]
      %v4350 = vld [vmem:[#allocation2 + $0x44] sm:$0xf]
      %v4351 = vld [vmem:[#allocation2 + $0x48] sm:$0xf]
      %v4352 = vld [vmem:[#allocation2 + $0x4c] sm:$0xf]
      %v4353 = vld [vmem:[#allocation2 + $0x50] sm:$0xf]
      %v4354 = vld [vmem:[#allocation2 + $0x54] sm:$0xf]
      %v4355 = vld [vmem:[#allocation2 + $0x58] sm:$0xf]
      %v4356 = vld [vmem:[#allocation2 + $0x5c] sm:$0xf]
      %v4357 = vld [vmem:[#allocation2 + $0x60] sm:$0xf]
      %v4358 = vld [vmem:[#allocation2 + $0x64] sm:$0xf]
      %v4359 = vld [vmem:[#allocation2 + $0x68] sm:$0xf]
      %v4360 = vld [vmem:[#allocation2 + $0x6c] sm:$0xf]
      %v4361 = vld [vmem:[#allocation2 + $0x70] sm:$0xf]
      %v4362 = vld [vmem:[#allocation2 + $0x74] sm:$0xf]
      %v4363 = vld [vmem:[#allocation2 + $0x78] sm:$0xf]
      %v4364 = vld [vmem:[#allocation2 + $0x7c] sm:$0xf]
      %v4365 = vld [vmem:[#allocation2 + $0x80] sm:$0xf]
      %v4366 = vld [vmem:[#allocation2 + $0x84] sm:$0xf]
      %v4367 = vld [vmem:[#allocation2 + $0x88] sm:$0xf]
      %v4368 = vld [vmem:[#allocation2 + $0x8c] sm:$0xf]
      %v4369 = vld [vmem:[#allocation2 + $0x90] sm:$0xf]
      %v4370 = vsel %vm1093, 0, %v4337
      %v4371 = vsel %vm1100, 0, %v4338
      %v4372 = vsel %vm1107, 0, %v4339
      %v4373 = vsel %vm1114, 0, %v4340
      %v4374 = vsel %vm1121, 0, %v4341
      %v4375 = vsel %vm1128, 0, %v4342
      %v4376 = vsel %vm1135, 0, %v4343
      %v4377 = vsel %vm1142, 0, %v4344
      %v4378 = vsel %vm1149, 0, %v4345
      %v4379 = vsel %vm1156, 0, %v4346
      %v4380 = vsel %vm1163, 0, %v4347
      %v4381 = vsel %vm1170, 0, %v4348
      %v4382 = vsel %vm1177, 0, %v4349
      %v4383 = vsel %vm1184, 0, %v4350
      %v4384 = vsel %vm1191, 0, %v4351
      %v4385 = vsel %vm1198, 0, %v4352
      %v4386 = vsel %vm1205, 0, %v4353
      %v4387 = vsel %vm1212, 0, %v4354
      %v4388 = vsel %vm1219, 0, %v4355
      %v4389 = vsel %vm1226, 0, %v4356
      %v4390 = vsel %vm1233, 0, %v4357
      %v4391 = vsel %vm1240, 0, %v4358
      %v4392 = vsel %vm1247, 0, %v4359
      %v4393 = vsel %vm1254, 0, %v4360
      %v4394 = vsel %vm1261, 0, %v4361
      %v4395 = vsel %vm1268, 0, %v4362
      %v4396 = vsel %vm1275, 0, %v4363
      %v4397 = vsel %vm1282, 0, %v4364
      %v4398 = vsel %vm1289, 0, %v4365
      %v4399 = vsel %vm1296, 0, %v4366
      %v4400 = vsel %vm1303, 0, %v4367
      %v4401 = vsel %vm1310, 0, %v4368
      %v4402 = vsel %vm1317, 0, %v4369
      %s4403 = scalar_lea.vmem %s3, 12
      %v4404 = vld [vmem:[%s4403] sm:$0x3]
      %v4438 = vunpack.c.l.b16 %v4370
      %v4439 = vunpack.c.l.b16 %v4371
      %v4440 = vunpack.c.l.b16 %v4372
      %v4441 = vunpack.c.l.b16 %v4373
      %v4442 = vunpack.c.l.b16 %v4374
      %v4443 = vunpack.c.l.b16 %v4375
      %v4444 = vunpack.c.l.b16 %v4376
      %v4445 = vunpack.c.l.b16 %v4377
      %v4446 = vunpack.c.l.b16 %v4378
      %v4447 = vunpack.c.l.b16 %v4379
      %v4448 = vunpack.c.l.b16 %v4380
      %v4449 = vunpack.c.l.b16 %v4381
      %v4450 = vunpack.c.l.b16 %v4382
      %v4451 = vunpack.c.l.b16 %v4383
      %v4452 = vunpack.c.l.b16 %v4384
      %v4453 = vunpack.c.l.b16 %v4385
      %v4454 = vunpack.c.l.b16 %v4386
      %v4455 = vunpack.c.l.b16 %v4387
      %v4456 = vunpack.c.l.b16 %v4388
      %v4457 = vunpack.c.l.b16 %v4389
      %v4458 = vunpack.c.l.b16 %v4390
      %v4459 = vunpack.c.l.b16 %v4391
      %v4460 = vunpack.c.l.b16 %v4392
      %v4461 = vunpack.c.l.b16 %v4393
      %v4462 = vunpack.c.l.b16 %v4394
      %v4463 = vunpack.c.l.b16 %v4395
      %v4464 = vunpack.c.l.b16 %v4396
      %v4465 = vunpack.c.l.b16 %v4397
      %v4466 = vunpack.c.l.b16 %v4398
      %v4467 = vunpack.c.l.b16 %v4399
      %v4468 = vunpack.c.l.b16 %v4400
      %v4469 = vunpack.c.l.b16 %v4401
      %v4470 = vunpack.c.l.b16 %v4402
      %v4471 = vpack.c.b16 %v4439, %v4438
      %v4472 = vpack.c.b16 %v4441, %v4440
      %v4473 = vpack.c.b16 %v4443, %v4442
      %v4474 = vpack.c.b16 %v4445, %v4444
      %v4475 = vpack.c.b16 %v4447, %v4446
      %v4476 = vpack.c.b16 %v4449, %v4448
      %v4477 = vpack.c.b16 %v4451, %v4450
      %v4478 = vpack.c.b16 %v4453, %v4452
      %v4479 = vpack.c.b16 %v4455, %v4454
      %v4480 = vpack.c.b16 %v4457, %v4456
      %v4481 = vpack.c.b16 %v4459, %v4458
      %v4482 = vpack.c.b16 %v4461, %v4460
      %v4483 = vpack.c.b16 %v4463, %v4462
      %v4484 = vpack.c.b16 %v4465, %v4464
      %v4485 = vpack.c.b16 %v4467, %v4466
      %v4486 = vpack.c.b16 %v4469, %v4468
      %v4487 = vpack.c.b16 %v4470, %v4470
      %v4489 = vshrl.u32 %v4471, 16
      %v4491 = vrot.slane %v4489, 3
      %v4492 = vshll.u32 %v4471, 16
      %v4494 = vrot.slane %v4492, 4
      %v4495 = vor.u32 %v4491, %v4494
      %v4497 = vshrl.u32 %v4472, 16
      %v4499 = vrot.slane %v4497, 3
      %v4500 = vshll.u32 %v4472, 16
      %v4502 = vrot.slane %v4500, 4
      %v4503 = vor.u32 %v4499, %v4502
      %v4504 = vsel %vm1659, %v4495, %v4503
      %v4506 = vshrl.u32 %v4473, 16
      %v4508 = vrot.slane %v4506, 3
      %v4509 = vshll.u32 %v4473, 16
      %v4511 = vrot.slane %v4509, 4
      %v4512 = vor.u32 %v4508, %v4511
      %v4513 = vsel %vm1659, %v4503, %v4512
      %v4515 = vshrl.u32 %v4474, 16
      %v4517 = vrot.slane %v4515, 3
      %v4518 = vshll.u32 %v4474, 16
      %v4520 = vrot.slane %v4518, 4
      %v4521 = vor.u32 %v4517, %v4520
      %v4522 = vsel %vm1659, %v4512, %v4521
      %v4524 = vshrl.u32 %v4475, 16
      %v4526 = vrot.slane %v4524, 3
      %v4527 = vshll.u32 %v4475, 16
      %v4529 = vrot.slane %v4527, 4
      %v4530 = vor.u32 %v4526, %v4529
      %v4531 = vsel %vm1659, %v4521, %v4530
      %v4533 = vshrl.u32 %v4476, 16
      %v4535 = vrot.slane %v4533, 3
      %v4536 = vshll.u32 %v4476, 16
      %v4538 = vrot.slane %v4536, 4
      %v4539 = vor.u32 %v4535, %v4538
      %v4540 = vsel %vm1659, %v4530, %v4539
      %v4542 = vshrl.u32 %v4477, 16
      %v4544 = vrot.slane %v4542, 3
      %v4545 = vshll.u32 %v4477, 16
      %v4547 = vrot.slane %v4545, 4
      %v4548 = vor.u32 %v4544, %v4547
      %v4549 = vsel %vm1659, %v4539, %v4548
      %v4551 = vshrl.u32 %v4478, 16
      %v4553 = vrot.slane %v4551, 3
      %v4554 = vshll.u32 %v4478, 16
      %v4556 = vrot.slane %v4554, 4
      %v4557 = vor.u32 %v4553, %v4556
      %v4558 = vsel %vm1659, %v4548, %v4557
      %v4560 = vshrl.u32 %v4479, 16
      %v4562 = vrot.slane %v4560, 3
      %v4563 = vshll.u32 %v4479, 16
      %v4565 = vrot.slane %v4563, 4
      %v4566 = vor.u32 %v4562, %v4565
      %v4567 = vsel %vm1659, %v4557, %v4566
      %v4569 = vshrl.u32 %v4480, 16
      %v4571 = vrot.slane %v4569, 3
      %v4572 = vshll.u32 %v4480, 16
      %v4574 = vrot.slane %v4572, 4
      %v4575 = vor.u32 %v4571, %v4574
      %v4576 = vsel %vm1659, %v4566, %v4575
      %v4578 = vshrl.u32 %v4481, 16
      %v4580 = vrot.slane %v4578, 3
      %v4581 = vshll.u32 %v4481, 16
      %v4583 = vrot.slane %v4581, 4
      %v4584 = vor.u32 %v4580, %v4583
      %v4585 = vsel %vm1659, %v4575, %v4584
      %v4587 = vshrl.u32 %v4482, 16
      %v4589 = vrot.slane %v4587, 3
      %v4590 = vshll.u32 %v4482, 16
      %v4592 = vrot.slane %v4590, 4
      %v4593 = vor.u32 %v4589, %v4592
      %v4594 = vsel %vm1659, %v4584, %v4593
      %v4596 = vshrl.u32 %v4483, 16
      %v4598 = vrot.slane %v4596, 3
      %v4599 = vshll.u32 %v4483, 16
      %v4601 = vrot.slane %v4599, 4
      %v4602 = vor.u32 %v4598, %v4601
      %v4603 = vsel %vm1659, %v4593, %v4602
      %v4605 = vshrl.u32 %v4484, 16
      %v4607 = vrot.slane %v4605, 3
      %v4608 = vshll.u32 %v4484, 16
      %v4610 = vrot.slane %v4608, 4
      %v4611 = vor.u32 %v4607, %v4610
      %v4612 = vsel %vm1659, %v4602, %v4611
      %v4614 = vshrl.u32 %v4485, 16
      %v4616 = vrot.slane %v4614, 3
      %v4617 = vshll.u32 %v4485, 16
      %v4619 = vrot.slane %v4617, 4
      %v4620 = vor.u32 %v4616, %v4619
      %v4621 = vsel %vm1659, %v4611, %v4620
      %v4623 = vshrl.u32 %v4486, 16
      %v4625 = vrot.slane %v4623, 3
      %v4626 = vshll.u32 %v4486, 16
      %v4628 = vrot.slane %v4626, 4
      %v4629 = vor.u32 %v4625, %v4628
      %v4630 = vsel %vm1659, %v4620, %v4629
      %v4632 = vshrl.u32 %v4487, 16
      %v4634 = vrot.slane %v4632, 3
      %v4635 = vshll.u32 %v4487, 16
      %v4637 = vrot.slane %v4635, 4
      %v4638 = vor.u32 %v4634, %v4637
      %v4639 = vsel %vm1659, %v4629, %v4638
      %v4641 = vsel %vm1434, %v4504, 0
      %v4644 = vsel %vm1434, %v4513, 0
      %v4647 = vsel %vm1434, %v4522, 0
      %v4650 = vsel %vm1434, %v4531, 0
      %v4653 = vsel %vm1434, %v4540, 0
      %v4656 = vsel %vm1434, %v4549, 0
      %v4659 = vsel %vm1434, %v4558, 0
      %v4662 = vsel %vm1434, %v4567, 0
      %v4665 = vsel %vm1434, %v4576, 0
      %v4668 = vsel %vm1434, %v4585, 0
      %v4671 = vsel %vm1434, %v4594, 0
      %v4674 = vsel %vm1434, %v4603, 0
      %v4677 = vsel %vm1434, %v4612, 0
      %v4680 = vsel %vm1434, %v4621, 0
      %v4683 = vsel %vm1434, %v4630, 0
      %v4686 = vsel %vm1434, %v4639, 0
      %v4689 = vsel %vm1483, %v4404, 0
      %4691 = vmatpush.bf16.msra.mxu0 0
      %4692 = vmatpush.bf16.msra.mxu0 0
      %4693 = vmatpush.bf16.msra.mxu0 0
      %4694 = vmatpush.bf16.msra.mxu0 0
      %4695 = vmatpush.bf16.msra.mxu0 0
      %4696 = vmatpush.bf16.msra.mxu0 0
      %4697 = vmatpush.bf16.msra.mxu0 0
      %4698 = vmatpush.bf16.msra.mxu0 %v4689
      %4699 = vmatmul.bf16.gmra.mxu0 %v4641
      %v4700 = vpop.f32.mrf.mxu0
      %v4701 = vadd.f32 0.0, %v4700
      %v4702 = vpop.f32.mrf.mxu0
      %v4703 = vadd.f32 0.0, %v4702
      %4704 = vmatmul.bf16.gmra.mxu0 %v4644
      %v4705 = vpop.f32.mrf.mxu0
      %v4706 = vadd.f32 0.0, %v4705
      %v4707 = vpop.f32.mrf.mxu0
      %v4708 = vadd.f32 0.0, %v4707
      %4709 = vmatmul.bf16.gmra.mxu0 %v4647
      %v4710 = vpop.f32.mrf.mxu0
      %v4711 = vadd.f32 0.0, %v4710
      %v4712 = vpop.f32.mrf.mxu0
      %v4713 = vadd.f32 0.0, %v4712
      %4714 = vmatmul.bf16.gmra.mxu0 %v4650
      %v4715 = vpop.f32.mrf.mxu0
      %v4716 = vadd.f32 0.0, %v4715
      %v4717 = vpop.f32.mrf.mxu0
      %v4718 = vadd.f32 0.0, %v4717
      %4719 = vmatmul.bf16.gmra.mxu0 %v4653
      %v4720 = vpop.f32.mrf.mxu0
      %v4721 = vadd.f32 0.0, %v4720
      %v4722 = vpop.f32.mrf.mxu0
      %v4723 = vadd.f32 0.0, %v4722
      %4724 = vmatmul.bf16.gmra.mxu0 %v4656
      %v4725 = vpop.f32.mrf.mxu0
      %v4726 = vadd.f32 0.0, %v4725
      %v4727 = vpop.f32.mrf.mxu0
      %v4728 = vadd.f32 0.0, %v4727
      %4729 = vmatmul.bf16.gmra.mxu0 %v4659
      %v4730 = vpop.f32.mrf.mxu0
      %v4731 = vadd.f32 0.0, %v4730
      %v4732 = vpop.f32.mrf.mxu0
      %v4733 = vadd.f32 0.0, %v4732
      %4734 = vmatmul.bf16.gmra.mxu0 %v4662
      %v4735 = vpop.f32.mrf.mxu0
      %v4736 = vadd.f32 0.0, %v4735
      %v4737 = vpop.f32.mrf.mxu0
      %v4738 = vadd.f32 0.0, %v4737
      %4739 = vmatmul.bf16.gmra.mxu0 %v4665
      %v4740 = vpop.f32.mrf.mxu0
      %v4741 = vadd.f32 0.0, %v4740
      %v4742 = vpop.f32.mrf.mxu0
      %v4743 = vadd.f32 0.0, %v4742
      %4744 = vmatmul.bf16.gmra.mxu0 %v4668
      %v4745 = vpop.f32.mrf.mxu0
      %v4746 = vadd.f32 0.0, %v4745
      %v4747 = vpop.f32.mrf.mxu0
      %v4748 = vadd.f32 0.0, %v4747
      %4749 = vmatmul.bf16.gmra.mxu0 %v4671
      %v4750 = vpop.f32.mrf.mxu0
      %v4751 = vadd.f32 0.0, %v4750
      %v4752 = vpop.f32.mrf.mxu0
      %v4753 = vadd.f32 0.0, %v4752
      %4754 = vmatmul.bf16.gmra.mxu0 %v4674
      %v4755 = vpop.f32.mrf.mxu0
      %v4756 = vadd.f32 0.0, %v4755
      %v4757 = vpop.f32.mrf.mxu0
      %v4758 = vadd.f32 0.0, %v4757
      %4759 = vmatmul.bf16.gmra.mxu0 %v4677
      %v4760 = vpop.f32.mrf.mxu0
      %v4761 = vadd.f32 0.0, %v4760
      %v4762 = vpop.f32.mrf.mxu0
      %v4763 = vadd.f32 0.0, %v4762
      %4764 = vmatmul.bf16.gmra.mxu0 %v4680
      %v4765 = vpop.f32.mrf.mxu0
      %v4766 = vadd.f32 0.0, %v4765
      %v4767 = vpop.f32.mrf.mxu0
      %v4768 = vadd.f32 0.0, %v4767
      %4769 = vmatmul.bf16.gmra.mxu0 %v4683
      %v4770 = vpop.f32.mrf.mxu0
      %v4771 = vadd.f32 0.0, %v4770
      %v4772 = vpop.f32.mrf.mxu0
      %v4773 = vadd.f32 0.0, %v4772
      %4774 = vmatmul.bf16.gmra.mxu0 %v4686
      %v4775 = vpop.f32.mrf.mxu0
      %v4776 = vadd.f32 0.0, %v4775
      %v4777 = vpop.f32.mrf.mxu0
      %v4778 = vadd.f32 0.0, %v4777
      %4779 = vdwg.mxu0
      %v4780 = vadd.f32 %v4305, %v4701
      %v4781 = vadd.f32 %v4306, %v4703
      %v4782 = vadd.f32 %v4307, %v4706
      %v4783 = vadd.f32 %v4308, %v4708
      %v4784 = vadd.f32 %v4309, %v4711
      %v4785 = vadd.f32 %v4310, %v4713
      %v4786 = vadd.f32 %v4311, %v4716
      %v4787 = vadd.f32 %v4312, %v4718
      %v4788 = vadd.f32 %v4313, %v4721
      %v4789 = vadd.f32 %v4314, %v4723
      %v4790 = vadd.f32 %v4315, %v4726
      %v4791 = vadd.f32 %v4316, %v4728
      %v4792 = vadd.f32 %v4317, %v4731
      %v4793 = vadd.f32 %v4318, %v4733
      %v4794 = vadd.f32 %v4319, %v4736
      %v4795 = vadd.f32 %v4320, %v4738
      %v4796 = vadd.f32 %v4321, %v4741
      %v4797 = vadd.f32 %v4322, %v4743
      %v4798 = vadd.f32 %v4323, %v4746
      %v4799 = vadd.f32 %v4324, %v4748
      %v4800 = vadd.f32 %v4325, %v4751
      %v4801 = vadd.f32 %v4326, %v4753
      %v4802 = vadd.f32 %v4327, %v4756
      %v4803 = vadd.f32 %v4328, %v4758
      %v4804 = vadd.f32 %v4329, %v4761
      %v4805 = vadd.f32 %v4330, %v4763
      %v4806 = vadd.f32 %v4331, %v4766
      %v4807 = vadd.f32 %v4332, %v4768
      %v4808 = vadd.f32 %v4333, %v4771
      %v4809 = vadd.f32 %v4334, %v4773
      %v4810 = vadd.f32 %v4335, %v4776
      %v4811 = vadd.f32 %v4336, %v4778
      %s4812 = scalar_lea.vmem %s3, 14
      %v4813 = vld [vmem:[%s4812] sm:$0x3]
      %v4846 = vunpack.c.l.b16 %v4338
      %v4847 = vunpack.c.l.b16 %v4339
      %v4848 = vunpack.c.l.b16 %v4340
      %v4849 = vunpack.c.l.b16 %v4341
      %v4850 = vunpack.c.l.b16 %v4342
      %v4851 = vunpack.c.l.b16 %v4343
      %v4852 = vunpack.c.l.b16 %v4344
      %v4853 = vunpack.c.l.b16 %v4345
      %v4854 = vunpack.c.l.b16 %v4346
      %v4855 = vunpack.c.l.b16 %v4347
      %v4856 = vunpack.c.l.b16 %v4348
      %v4857 = vunpack.c.l.b16 %v4349
      %v4858 = vunpack.c.l.b16 %v4350
      %v4859 = vunpack.c.l.b16 %v4351
      %v4860 = vunpack.c.l.b16 %v4352
      %v4861 = vunpack.c.l.b16 %v4353
      %v4862 = vunpack.c.l.b16 %v4354
      %v4863 = vunpack.c.l.b16 %v4355
      %v4864 = vunpack.c.l.b16 %v4356
      %v4865 = vunpack.c.l.b16 %v4357
      %v4866 = vunpack.c.l.b16 %v4358
      %v4867 = vunpack.c.l.b16 %v4359
      %v4868 = vunpack.c.l.b16 %v4360
      %v4869 = vunpack.c.l.b16 %v4361
      %v4870 = vunpack.c.l.b16 %v4362
      %v4871 = vunpack.c.l.b16 %v4363
      %v4872 = vunpack.c.l.b16 %v4364
      %v4873 = vunpack.c.l.b16 %v4365
      %v4874 = vunpack.c.l.b16 %v4366
      %v4875 = vunpack.c.l.b16 %v4367
      %v4876 = vunpack.c.l.b16 %v4368
      %v4877 = vunpack.c.l.b16 %v4369
      %v4878 = vpack.c.b16 %v4847, %v4846
      %v4879 = vpack.c.b16 %v4849, %v4848
      %v4880 = vpack.c.b16 %v4851, %v4850
      %v4881 = vpack.c.b16 %v4853, %v4852
      %v4882 = vpack.c.b16 %v4855, %v4854
      %v4883 = vpack.c.b16 %v4857, %v4856
      %v4884 = vpack.c.b16 %v4859, %v4858
      %v4885 = vpack.c.b16 %v4861, %v4860
      %v4886 = vpack.c.b16 %v4863, %v4862
      %v4887 = vpack.c.b16 %v4865, %v4864
      %v4888 = vpack.c.b16 %v4867, %v4866
      %v4889 = vpack.c.b16 %v4869, %v4868
      %v4890 = vpack.c.b16 %v4871, %v4870
      %v4891 = vpack.c.b16 %v4873, %v4872
      %v4892 = vpack.c.b16 %v4875, %v4874
      %v4893 = vpack.c.b16 %v4877, %v4876
      %v4895 = vsel %vm1434, %v4878, 0
      %v4898 = vsel %vm1434, %v4879, 0
      %v4901 = vsel %vm1434, %v4880, 0
      %v4904 = vsel %vm1434, %v4881, 0
      %v4907 = vsel %vm1434, %v4882, 0
      %v4910 = vsel %vm1434, %v4883, 0
      %v4913 = vsel %vm1434, %v4884, 0
      %v4916 = vsel %vm1434, %v4885, 0
      %v4919 = vsel %vm1434, %v4886, 0
      %v4922 = vsel %vm1434, %v4887, 0
      %v4925 = vsel %vm1434, %v4888, 0
      %v4928 = vsel %vm1434, %v4889, 0
      %v4931 = vsel %vm1434, %v4890, 0
      %v4934 = vsel %vm1434, %v4891, 0
      %v4937 = vsel %vm1434, %v4892, 0
      %v4940 = vsel %vm1434, %v4893, 0
      %v4943 = vsel %vm1483, %v4813, 0
      %4945 = vmatpush.bf16.msra.mxu0 0
      %4946 = vmatpush.bf16.msra.mxu0 0
      %4947 = vmatpush.bf16.msra.mxu0 0
      %4948 = vmatpush.bf16.msra.mxu0 0
      %4949 = vmatpush.bf16.msra.mxu0 0
      %4950 = vmatpush.bf16.msra.mxu0 0
      %4951 = vmatpush.bf16.msra.mxu0 0
      %4952 = vmatpush.bf16.msra.mxu0 %v4943
      %4953 = vmatmul.bf16.gmra.mxu0 %v4895
      %v4954 = vpop.f32.mrf.mxu0
      %v4955 = vadd.f32 0.0, %v4954
      %v4956 = vpop.f32.mrf.mxu0
      %v4957 = vadd.f32 0.0, %v4956
      %4958 = vmatmul.bf16.gmra.mxu0 %v4898
      %v4959 = vpop.f32.mrf.mxu0
      %v4960 = vadd.f32 0.0, %v4959
      %v4961 = vpop.f32.mrf.mxu0
      %v4962 = vadd.f32 0.0, %v4961
      %4963 = vmatmul.bf16.gmra.mxu0 %v4901
      %v4964 = vpop.f32.mrf.mxu0
      %v4965 = vadd.f32 0.0, %v4964
      %v4966 = vpop.f32.mrf.mxu0
      %v4967 = vadd.f32 0.0, %v4966
      %4968 = vmatmul.bf16.gmra.mxu0 %v4904
      %v4969 = vpop.f32.mrf.mxu0
      %v4970 = vadd.f32 0.0, %v4969
      %v4971 = vpop.f32.mrf.mxu0
      %v4972 = vadd.f32 0.0, %v4971
      %4973 = vmatmul.bf16.gmra.mxu0 %v4907
      %v4974 = vpop.f32.mrf.mxu0
      %v4975 = vadd.f32 0.0, %v4974
      %v4976 = vpop.f32.mrf.mxu0
      %v4977 = vadd.f32 0.0, %v4976
      %4978 = vmatmul.bf16.gmra.mxu0 %v4910
      %v4979 = vpop.f32.mrf.mxu0
      %v4980 = vadd.f32 0.0, %v4979
      %v4981 = vpop.f32.mrf.mxu0
      %v4982 = vadd.f32 0.0, %v4981
      %4983 = vmatmul.bf16.gmra.mxu0 %v4913
      %v4984 = vpop.f32.mrf.mxu0
      %v4985 = vadd.f32 0.0, %v4984
      %v4986 = vpop.f32.mrf.mxu0
      %v4987 = vadd.f32 0.0, %v4986
      %4988 = vmatmul.bf16.gmra.mxu0 %v4916
      %v4989 = vpop.f32.mrf.mxu0
      %v4990 = vadd.f32 0.0, %v4989
      %v4991 = vpop.f32.mrf.mxu0
      %v4992 = vadd.f32 0.0, %v4991
      %4993 = vmatmul.bf16.gmra.mxu0 %v4919
      %v4994 = vpop.f32.mrf.mxu0
      %v4995 = vadd.f32 0.0, %v4994
      %v4996 = vpop.f32.mrf.mxu0
      %v4997 = vadd.f32 0.0, %v4996
      %4998 = vmatmul.bf16.gmra.mxu0 %v4922
      %v4999 = vpop.f32.mrf.mxu0
      %v5000 = vadd.f32 0.0, %v4999
      %v5001 = vpop.f32.mrf.mxu0
      %v5002 = vadd.f32 0.0, %v5001
      %5003 = vmatmul.bf16.gmra.mxu0 %v4925
      %v5004 = vpop.f32.mrf.mxu0
      %v5005 = vadd.f32 0.0, %v5004
      %v5006 = vpop.f32.mrf.mxu0
      %v5007 = vadd.f32 0.0, %v5006
      %5008 = vmatmul.bf16.gmra.mxu0 %v4928
      %v5009 = vpop.f32.mrf.mxu0
      %v5010 = vadd.f32 0.0, %v5009
      %v5011 = vpop.f32.mrf.mxu0
      %v5012 = vadd.f32 0.0, %v5011
      %5013 = vmatmul.bf16.gmra.mxu0 %v4931
      %v5014 = vpop.f32.mrf.mxu0
      %v5015 = vadd.f32 0.0, %v5014
      %v5016 = vpop.f32.mrf.mxu0
      %v5017 = vadd.f32 0.0, %v5016
      %5018 = vmatmul.bf16.gmra.mxu0 %v4934
      %v5019 = vpop.f32.mrf.mxu0
      %v5020 = vadd.f32 0.0, %v5019
      %v5021 = vpop.f32.mrf.mxu0
      %v5022 = vadd.f32 0.0, %v5021
      %5023 = vmatmul.bf16.gmra.mxu0 %v4937
      %v5024 = vpop.f32.mrf.mxu0
      %v5025 = vadd.f32 0.0, %v5024
      %v5026 = vpop.f32.mrf.mxu0
      %v5027 = vadd.f32 0.0, %v5026
      %5028 = vmatmul.bf16.gmra.mxu0 %v4940
      %v5029 = vpop.f32.mrf.mxu0
      %v5030 = vadd.f32 0.0, %v5029
      %v5031 = vpop.f32.mrf.mxu0
      %v5032 = vadd.f32 0.0, %v5031
      %5033 = vdwg.mxu0
      %v5034 = vadd.f32 %v4780, %v4955
      %v5035 = vadd.f32 %v4781, %v4957
      %v5036 = vadd.f32 %v4782, %v4960
      %v5037 = vadd.f32 %v4783, %v4962
      %v5038 = vadd.f32 %v4784, %v4965
      %v5039 = vadd.f32 %v4785, %v4967
      %v5040 = vadd.f32 %v4786, %v4970
      %v5041 = vadd.f32 %v4787, %v4972
      %v5042 = vadd.f32 %v4788, %v4975
      %v5043 = vadd.f32 %v4789, %v4977
      %v5044 = vadd.f32 %v4790, %v4980
      %v5045 = vadd.f32 %v4791, %v4982
      %v5046 = vadd.f32 %v4792, %v4985
      %v5047 = vadd.f32 %v4793, %v4987
      %v5048 = vadd.f32 %v4794, %v4990
      %v5049 = vadd.f32 %v4795, %v4992
      %v5050 = vadd.f32 %v4796, %v4995
      %v5051 = vadd.f32 %v4797, %v4997
      %v5052 = vadd.f32 %v4798, %v5000
      %v5053 = vadd.f32 %v4799, %v5002
      %v5054 = vadd.f32 %v4800, %v5005
      %v5055 = vadd.f32 %v4801, %v5007
      %v5056 = vadd.f32 %v4802, %v5010
      %v5057 = vadd.f32 %v4803, %v5012
      %v5058 = vadd.f32 %v4804, %v5015
      %v5059 = vadd.f32 %v4805, %v5017
      %v5060 = vadd.f32 %v4806, %v5020
      %v5061 = vadd.f32 %v4807, %v5022
      %v5062 = vadd.f32 %v4808, %v5025
      %v5063 = vadd.f32 %v4809, %v5027
      %v5064 = vadd.f32 %v4810, %v5030
      %v5065 = vadd.f32 %v4811, %v5032
      %v5066 = vld [vmem:[#allocation2 + $0x14] sm:$0xf]
      %v5067 = vld [vmem:[#allocation2 + $0x18] sm:$0xf]
      %v5068 = vld [vmem:[#allocation2 + $0x1c] sm:$0xf]
      %v5069 = vld [vmem:[#allocation2 + $0x20] sm:$0xf]
      %v5070 = vld [vmem:[#allocation2 + $0x24] sm:$0xf]
      %v5071 = vld [vmem:[#allocation2 + $0x28] sm:$0xf]
      %v5072 = vld [vmem:[#allocation2 + $0x2c] sm:$0xf]
      %v5073 = vld [vmem:[#allocation2 + $0x30] sm:$0xf]
      %v5074 = vld [vmem:[#allocation2 + $0x34] sm:$0xf]
      %v5075 = vld [vmem:[#allocation2 + $0x38] sm:$0xf]
      %v5076 = vld [vmem:[#allocation2 + $0x3c] sm:$0xf]
      %v5077 = vld [vmem:[#allocation2 + $0x40] sm:$0xf]
      %v5078 = vld [vmem:[#allocation2 + $0x44] sm:$0xf]
      %v5079 = vld [vmem:[#allocation2 + $0x48] sm:$0xf]
      %v5080 = vld [vmem:[#allocation2 + $0x4c] sm:$0xf]
      %v5081 = vld [vmem:[#allocation2 + $0x50] sm:$0xf]
      %v5082 = vld [vmem:[#allocation2 + $0x54] sm:$0xf]
      %v5083 = vld [vmem:[#allocation2 + $0x58] sm:$0xf]
      %v5084 = vld [vmem:[#allocation2 + $0x5c] sm:$0xf]
      %v5085 = vld [vmem:[#allocation2 + $0x60] sm:$0xf]
      %v5086 = vld [vmem:[#allocation2 + $0x64] sm:$0xf]
      %v5087 = vld [vmem:[#allocation2 + $0x68] sm:$0xf]
      %v5088 = vld [vmem:[#allocation2 + $0x6c] sm:$0xf]
      %v5089 = vld [vmem:[#allocation2 + $0x70] sm:$0xf]
      %v5090 = vld [vmem:[#allocation2 + $0x74] sm:$0xf]
      %v5091 = vld [vmem:[#allocation2 + $0x78] sm:$0xf]
      %v5092 = vld [vmem:[#allocation2 + $0x7c] sm:$0xf]
      %v5093 = vld [vmem:[#allocation2 + $0x80] sm:$0xf]
      %v5094 = vld [vmem:[#allocation2 + $0x84] sm:$0xf]
      %v5095 = vld [vmem:[#allocation2 + $0x88] sm:$0xf]
      %v5096 = vld [vmem:[#allocation2 + $0x8c] sm:$0xf]
      %v5097 = vld [vmem:[#allocation2 + $0x90] sm:$0xf]
      %v5098 = vld [vmem:[#allocation2 + $0x94] sm:$0x1]
      %v5099 = vsel %vm2505, 0, %v5066
      %v5100 = vsel %vm2512, 0, %v5067
      %v5101 = vsel %vm2519, 0, %v5068
      %v5102 = vsel %vm2526, 0, %v5069
      %v5103 = vsel %vm2533, 0, %v5070
      %v5104 = vsel %vm2540, 0, %v5071
      %v5105 = vsel %vm2547, 0, %v5072
      %v5106 = vsel %vm2554, 0, %v5073
      %v5107 = vsel %vm2561, 0, %v5074
      %v5108 = vsel %vm2568, 0, %v5075
      %v5109 = vsel %vm2575, 0, %v5076
      %v5110 = vsel %vm2582, 0, %v5077
      %v5111 = vsel %vm2589, 0, %v5078
      %v5112 = vsel %vm2596, 0, %v5079
      %v5113 = vsel %vm2603, 0, %v5080
      %v5114 = vsel %vm2610, 0, %v5081
      %v5115 = vsel %vm2617, 0, %v5082
      %v5116 = vsel %vm2624, 0, %v5083
      %v5117 = vsel %vm2631, 0, %v5084
      %v5118 = vsel %vm2638, 0, %v5085
      %v5119 = vsel %vm2645, 0, %v5086
      %v5120 = vsel %vm2652, 0, %v5087
      %v5121 = vsel %vm2659, 0, %v5088
      %v5122 = vsel %vm2666, 0, %v5089
      %v5123 = vsel %vm2673, 0, %v5090
      %v5124 = vsel %vm2680, 0, %v5091
      %v5125 = vsel %vm2687, 0, %v5092
      %v5126 = vsel %vm2694, 0, %v5093
      %v5127 = vsel %vm2701, 0, %v5094
      %v5128 = vsel %vm2708, 0, %v5095
      %v5129 = vsel %vm2715, 0, %v5096
      %v5130 = vsel %vm2722, 0, %v5097
      %v5131 = vsel %vm2729, 0, %v5098
      %s5132 = scalar_lea.vmem %s3, 16
      %v5133 = vld [vmem:[%s5132] sm:$0x3]
      %v5167 = vunpack.c.l.b16 %v5099
      %v5168 = vunpack.c.l.b16 %v5100
      %v5169 = vunpack.c.l.b16 %v5101
      %v5170 = vunpack.c.l.b16 %v5102
      %v5171 = vunpack.c.l.b16 %v5103
      %v5172 = vunpack.c.l.b16 %v5104
      %v5173 = vunpack.c.l.b16 %v5105
      %v5174 = vunpack.c.l.b16 %v5106
      %v5175 = vunpack.c.l.b16 %v5107
      %v5176 = vunpack.c.l.b16 %v5108
      %v5177 = vunpack.c.l.b16 %v5109
      %v5178 = vunpack.c.l.b16 %v5110
      %v5179 = vunpack.c.l.b16 %v5111
      %v5180 = vunpack.c.l.b16 %v5112
      %v5181 = vunpack.c.l.b16 %v5113
      %v5182 = vunpack.c.l.b16 %v5114
      %v5183 = vunpack.c.l.b16 %v5115
      %v5184 = vunpack.c.l.b16 %v5116
      %v5185 = vunpack.c.l.b16 %v5117
      %v5186 = vunpack.c.l.b16 %v5118
      %v5187 = vunpack.c.l.b16 %v5119
      %v5188 = vunpack.c.l.b16 %v5120
      %v5189 = vunpack.c.l.b16 %v5121
      %v5190 = vunpack.c.l.b16 %v5122
      %v5191 = vunpack.c.l.b16 %v5123
      %v5192 = vunpack.c.l.b16 %v5124
      %v5193 = vunpack.c.l.b16 %v5125
      %v5194 = vunpack.c.l.b16 %v5126
      %v5195 = vunpack.c.l.b16 %v5127
      %v5196 = vunpack.c.l.b16 %v5128
      %v5197 = vunpack.c.l.b16 %v5129
      %v5198 = vunpack.c.l.b16 %v5130
      %v5199 = vunpack.c.l.b16 %v5131
      %v5200 = vpack.c.b16 %v5168, %v5167
      %v5201 = vpack.c.b16 %v5170, %v5169
      %v5202 = vpack.c.b16 %v5172, %v5171
      %v5203 = vpack.c.b16 %v5174, %v5173
      %v5204 = vpack.c.b16 %v5176, %v5175
      %v5205 = vpack.c.b16 %v5178, %v5177
      %v5206 = vpack.c.b16 %v5180, %v5179
      %v5207 = vpack.c.b16 %v5182, %v5181
      %v5208 = vpack.c.b16 %v5184, %v5183
      %v5209 = vpack.c.b16 %v5186, %v5185
      %v5210 = vpack.c.b16 %v5188, %v5187
      %v5211 = vpack.c.b16 %v5190, %v5189
      %v5212 = vpack.c.b16 %v5192, %v5191
      %v5213 = vpack.c.b16 %v5194, %v5193
      %v5214 = vpack.c.b16 %v5196, %v5195
      %v5215 = vpack.c.b16 %v5198, %v5197
      %v5216 = vpack.c.b16 %v5199, %v5199
      %v5218 = vshrl.u32 %v5200, 16
      %v5220 = vshll.u32 %v5200, 16
      %v5222 = vrot.slane %v5220, 1
      %v5223 = vor.u32 %v5218, %v5222
      %v5225 = vshll.u32 %v5201, 16
      %v5227 = vrot.slane %v5225, 1
      %v5228 = vsel %vm2848, %v5223, %v5227
      %v5229 = vshrl.u32 %v5201, 16
      %v5231 = vor.u32 %v5229, %v5227
      %v5233 = vshll.u32 %v5202, 16
      %v5235 = vrot.slane %v5233, 1
      %v5236 = vsel %vm2848, %v5231, %v5235
      %v5237 = vshrl.u32 %v5202, 16
      %v5239 = vor.u32 %v5237, %v5235
      %v5241 = vshll.u32 %v5203, 16
      %v5243 = vrot.slane %v5241, 1
      %v5244 = vsel %vm2848, %v5239, %v5243
      %v5245 = vshrl.u32 %v5203, 16
      %v5247 = vor.u32 %v5245, %v5243
      %v5249 = vshll.u32 %v5204, 16
      %v5251 = vrot.slane %v5249, 1
      %v5252 = vsel %vm2848, %v5247, %v5251
      %v5253 = vshrl.u32 %v5204, 16
      %v5255 = vor.u32 %v5253, %v5251
      %v5257 = vshll.u32 %v5205, 16
      %v5259 = vrot.slane %v5257, 1
      %v5260 = vsel %vm2848, %v5255, %v5259
      %v5261 = vshrl.u32 %v5205, 16
      %v5263 = vor.u32 %v5261, %v5259
      %v5265 = vshll.u32 %v5206, 16
      %v5267 = vrot.slane %v5265, 1
      %v5268 = vsel %vm2848, %v5263, %v5267
      %v5269 = vshrl.u32 %v5206, 16
      %v5271 = vor.u32 %v5269, %v5267
      %v5273 = vshll.u32 %v5207, 16
      %v5275 = vrot.slane %v5273, 1
      %v5276 = vsel %vm2848, %v5271, %v5275
      %v5277 = vshrl.u32 %v5207, 16
      %v5279 = vor.u32 %v5277, %v5275
      %v5281 = vshll.u32 %v5208, 16
      %v5283 = vrot.slane %v5281, 1
      %v5284 = vsel %vm2848, %v5279, %v5283
      %v5285 = vshrl.u32 %v5208, 16
      %v5287 = vor.u32 %v5285, %v5283
      %v5289 = vshll.u32 %v5209, 16
      %v5291 = vrot.slane %v5289, 1
      %v5292 = vsel %vm2848, %v5287, %v5291
      %v5293 = vshrl.u32 %v5209, 16
      %v5295 = vor.u32 %v5293, %v5291
      %v5297 = vshll.u32 %v5210, 16
      %v5299 = vrot.slane %v5297, 1
      %v5300 = vsel %vm2848, %v5295, %v5299
      %v5301 = vshrl.u32 %v5210, 16
      %v5303 = vor.u32 %v5301, %v5299
      %v5305 = vshll.u32 %v5211, 16
      %v5307 = vrot.slane %v5305, 1
      %v5308 = vsel %vm2848, %v5303, %v5307
      %v5309 = vshrl.u32 %v5211, 16
      %v5311 = vor.u32 %v5309, %v5307
      %v5313 = vshll.u32 %v5212, 16
      %v5315 = vrot.slane %v5313, 1
      %v5316 = vsel %vm2848, %v5311, %v5315
      %v5317 = vshrl.u32 %v5212, 16
      %v5319 = vor.u32 %v5317, %v5315
      %v5321 = vshll.u32 %v5213, 16
      %v5323 = vrot.slane %v5321, 1
      %v5324 = vsel %vm2848, %v5319, %v5323
      %v5325 = vshrl.u32 %v5213, 16
      %v5327 = vor.u32 %v5325, %v5323
      %v5329 = vshll.u32 %v5214, 16
      %v5331 = vrot.slane %v5329, 1
      %v5332 = vsel %vm2848, %v5327, %v5331
      %v5333 = vshrl.u32 %v5214, 16
      %v5335 = vor.u32 %v5333, %v5331
      %v5337 = vshll.u32 %v5215, 16
      %v5339 = vrot.slane %v5337, 1
      %v5340 = vsel %vm2848, %v5335, %v5339
      %v5341 = vshrl.u32 %v5215, 16
      %v5343 = vor.u32 %v5341, %v5339
      %v5345 = vshll.u32 %v5216, 16
      %v5347 = vrot.slane %v5345, 1
      %v5348 = vsel %vm2848, %v5343, %v5347
      %v5350 = vsel %vm1434, %v5228, 0
      %v5353 = vsel %vm1434, %v5236, 0
      %v5356 = vsel %vm1434, %v5244, 0
      %v5359 = vsel %vm1434, %v5252, 0
      %v5362 = vsel %vm1434, %v5260, 0
      %v5365 = vsel %vm1434, %v5268, 0
      %v5368 = vsel %vm1434, %v5276, 0
      %v5371 = vsel %vm1434, %v5284, 0
      %v5374 = vsel %vm1434, %v5292, 0
      %v5377 = vsel %vm1434, %v5300, 0
      %v5380 = vsel %vm1434, %v5308, 0
      %v5383 = vsel %vm1434, %v5316, 0
      %v5386 = vsel %vm1434, %v5324, 0
      %v5389 = vsel %vm1434, %v5332, 0
      %v5392 = vsel %vm1434, %v5340, 0
      %v5395 = vsel %vm1434, %v5348, 0
      %v5398 = vsel %vm1483, %v5133, 0
      %5400 = vmatpush.bf16.msra.mxu0 0
      %5401 = vmatpush.bf16.msra.mxu0 0
      %5402 = vmatpush.bf16.msra.mxu0 0
      %5403 = vmatpush.bf16.msra.mxu0 0
      %5404 = vmatpush.bf16.msra.mxu0 0
      %5405 = vmatpush.bf16.msra.mxu0 0
      %5406 = vmatpush.bf16.msra.mxu0 0
      %5407 = vmatpush.bf16.msra.mxu0 %v5398
      %5408 = vmatmul.bf16.gmra.mxu0 %v5350
      %v5409 = vpop.f32.mrf.mxu0
      %v5410 = vadd.f32 0.0, %v5409
      %v5411 = vpop.f32.mrf.mxu0
      %v5412 = vadd.f32 0.0, %v5411
      %5413 = vmatmul.bf16.gmra.mxu0 %v5353
      %v5414 = vpop.f32.mrf.mxu0
      %v5415 = vadd.f32 0.0, %v5414
      %v5416 = vpop.f32.mrf.mxu0
      %v5417 = vadd.f32 0.0, %v5416
      %5418 = vmatmul.bf16.gmra.mxu0 %v5356
      %v5419 = vpop.f32.mrf.mxu0
      %v5420 = vadd.f32 0.0, %v5419
      %v5421 = vpop.f32.mrf.mxu0
      %v5422 = vadd.f32 0.0, %v5421
      %5423 = vmatmul.bf16.gmra.mxu0 %v5359
      %v5424 = vpop.f32.mrf.mxu0
      %v5425 = vadd.f32 0.0, %v5424
      %v5426 = vpop.f32.mrf.mxu0
      %v5427 = vadd.f32 0.0, %v5426
      %5428 = vmatmul.bf16.gmra.mxu0 %v5362
      %v5429 = vpop.f32.mrf.mxu0
      %v5430 = vadd.f32 0.0, %v5429
      %v5431 = vpop.f32.mrf.mxu0
      %v5432 = vadd.f32 0.0, %v5431
      %5433 = vmatmul.bf16.gmra.mxu0 %v5365
      %v5434 = vpop.f32.mrf.mxu0
      %v5435 = vadd.f32 0.0, %v5434
      %v5436 = vpop.f32.mrf.mxu0
      %v5437 = vadd.f32 0.0, %v5436
      %5438 = vmatmul.bf16.gmra.mxu0 %v5368
      %v5439 = vpop.f32.mrf.mxu0
      %v5440 = vadd.f32 0.0, %v5439
      %v5441 = vpop.f32.mrf.mxu0
      %v5442 = vadd.f32 0.0, %v5441
      %5443 = vmatmul.bf16.gmra.mxu0 %v5371
      %v5444 = vpop.f32.mrf.mxu0
      %v5445 = vadd.f32 0.0, %v5444
      %v5446 = vpop.f32.mrf.mxu0
      %v5447 = vadd.f32 0.0, %v5446
      %5448 = vmatmul.bf16.gmra.mxu0 %v5374
      %v5449 = vpop.f32.mrf.mxu0
      %v5450 = vadd.f32 0.0, %v5449
      %v5451 = vpop.f32.mrf.mxu0
      %v5452 = vadd.f32 0.0, %v5451
      %5453 = vmatmul.bf16.gmra.mxu0 %v5377
      %v5454 = vpop.f32.mrf.mxu0
      %v5455 = vadd.f32 0.0, %v5454
      %v5456 = vpop.f32.mrf.mxu0
      %v5457 = vadd.f32 0.0, %v5456
      %5458 = vmatmul.bf16.gmra.mxu0 %v5380
      %v5459 = vpop.f32.mrf.mxu0
      %v5460 = vadd.f32 0.0, %v5459
      %v5461 = vpop.f32.mrf.mxu0
      %v5462 = vadd.f32 0.0, %v5461
      %5463 = vmatmul.bf16.gmra.mxu0 %v5383
      %v5464 = vpop.f32.mrf.mxu0
      %v5465 = vadd.f32 0.0, %v5464
      %v5466 = vpop.f32.mrf.mxu0
      %v5467 = vadd.f32 0.0, %v5466
      %5468 = vmatmul.bf16.gmra.mxu0 %v5386
      %v5469 = vpop.f32.mrf.mxu0
      %v5470 = vadd.f32 0.0, %v5469
      %v5471 = vpop.f32.mrf.mxu0
      %v5472 = vadd.f32 0.0, %v5471
      %5473 = vmatmul.bf16.gmra.mxu0 %v5389
      %v5474 = vpop.f32.mrf.mxu0
      %v5475 = vadd.f32 0.0, %v5474
      %v5476 = vpop.f32.mrf.mxu0
      %v5477 = vadd.f32 0.0, %v5476
      %5478 = vmatmul.bf16.gmra.mxu0 %v5392
      %v5479 = vpop.f32.mrf.mxu0
      %v5480 = vadd.f32 0.0, %v5479
      %v5481 = vpop.f32.mrf.mxu0
      %v5482 = vadd.f32 0.0, %v5481
      %5483 = vmatmul.bf16.gmra.mxu0 %v5395
      %v5484 = vpop.f32.mrf.mxu0
      %v5485 = vadd.f32 0.0, %v5484
      %v5486 = vpop.f32.mrf.mxu0
      %v5487 = vadd.f32 0.0, %v5486
      %5488 = vdwg.mxu0
      %v5489 = vadd.f32 %v5034, %v5410
      %v5490 = vadd.f32 %v5035, %v5412
      %v5491 = vadd.f32 %v5036, %v5415
      %v5492 = vadd.f32 %v5037, %v5417
      %v5493 = vadd.f32 %v5038, %v5420
      %v5494 = vadd.f32 %v5039, %v5422
      %v5495 = vadd.f32 %v5040, %v5425
      %v5496 = vadd.f32 %v5041, %v5427
      %v5497 = vadd.f32 %v5042, %v5430
      %v5498 = vadd.f32 %v5043, %v5432
      %v5499 = vadd.f32 %v5044, %v5435
      %v5500 = vadd.f32 %v5045, %v5437
      %v5501 = vadd.f32 %v5046, %v5440
      %v5502 = vadd.f32 %v5047, %v5442
      %v5503 = vadd.f32 %v5048, %v5445
      %v5504 = vadd.f32 %v5049, %v5447
      %v5505 = vadd.f32 %v5050, %v5450
      %v5506 = vadd.f32 %v5051, %v5452
      %v5507 = vadd.f32 %v5052, %v5455
      %v5508 = vadd.f32 %v5053, %v5457
      %v5509 = vadd.f32 %v5054, %v5460
      %v5510 = vadd.f32 %v5055, %v5462
      %v5511 = vadd.f32 %v5056, %v5465
      %v5512 = vadd.f32 %v5057, %v5467
      %v5513 = vadd.f32 %v5058, %v5470
      %v5514 = vadd.f32 %v5059, %v5472
      %v5515 = vadd.f32 %v5060, %v5475
      %v5516 = vadd.f32 %v5061, %v5477
      %v5517 = vadd.f32 %v5062, %v5480
      %v5518 = vadd.f32 %v5063, %v5482
      %v5519 = vadd.f32 %v5064, %v5485
      %v5520 = vadd.f32 %v5065, %v5487
      %v5521 = vld [vmem:[%s4] sm:$0x1]
      %v5523 = vperm.slane %v5521, 0
      %v5525 = vadd.f32 %v5489, %v5523
      %v5526 = vadd.f32 %v5490, %v5523
      %v5527 = vadd.f32 %v5491, %v5523
      %v5528 = vadd.f32 %v5492, %v5523
      %v5529 = vadd.f32 %v5493, %v5523
      %v5530 = vadd.f32 %v5494, %v5523
      %v5531 = vadd.f32 %v5495, %v5523
      %v5532 = vadd.f32 %v5496, %v5523
      %v5533 = vadd.f32 %v5497, %v5523
      %v5534 = vadd.f32 %v5498, %v5523
      %v5535 = vadd.f32 %v5499, %v5523
      %v5536 = vadd.f32 %v5500, %v5523
      %v5537 = vadd.f32 %v5501, %v5523
      %v5538 = vadd.f32 %v5502, %v5523
      %v5539 = vadd.f32 %v5503, %v5523
      %v5540 = vadd.f32 %v5504, %v5523
      %v5541 = vadd.f32 %v5505, %v5523
      %v5542 = vadd.f32 %v5506, %v5523
      %v5543 = vadd.f32 %v5507, %v5523
      %v5544 = vadd.f32 %v5508, %v5523
      %v5545 = vadd.f32 %v5509, %v5523
      %v5546 = vadd.f32 %v5510, %v5523
      %v5547 = vadd.f32 %v5511, %v5523
      %v5548 = vadd.f32 %v5512, %v5523
      %v5549 = vadd.f32 %v5513, %v5523
      %v5550 = vadd.f32 %v5514, %v5523
      %v5551 = vadd.f32 %v5515, %v5523
      %v5552 = vadd.f32 %v5516, %v5523
      %v5553 = vadd.f32 %v5517, %v5523
      %v5554 = vadd.f32 %v5518, %v5523
      %v5555 = vadd.f32 %v5519, %v5523
      %v5556 = vadd.f32 %v5520, %v5523
      %vm5557 = vcmp.ge.f32.partialorder %v5525, 0.0
      %vm5558 = vcmp.ge.f32.partialorder %v5526, 0.0
      %vm5559 = vcmp.ge.f32.partialorder %v5527, 0.0
      %vm5560 = vcmp.ge.f32.partialorder %v5528, 0.0
      %vm5561 = vcmp.ge.f32.partialorder %v5529, 0.0
      %vm5562 = vcmp.ge.f32.partialorder %v5530, 0.0
      %vm5563 = vcmp.ge.f32.partialorder %v5531, 0.0
      %vm5564 = vcmp.ge.f32.partialorder %v5532, 0.0
      %vm5565 = vcmp.ge.f32.partialorder %v5533, 0.0
      %vm5566 = vcmp.ge.f32.partialorder %v5534, 0.0
      %vm5567 = vcmp.ge.f32.partialorder %v5535, 0.0
      %vm5568 = vcmp.ge.f32.partialorder %v5536, 0.0
      %vm5569 = vcmp.ge.f32.partialorder %v5537, 0.0
      %vm5570 = vcmp.ge.f32.partialorder %v5538, 0.0
      %vm5571 = vcmp.ge.f32.partialorder %v5539, 0.0
      %vm5572 = vcmp.ge.f32.partialorder %v5540, 0.0
      %vm5573 = vcmp.ge.f32.partialorder %v5541, 0.0
      %vm5574 = vcmp.ge.f32.partialorder %v5542, 0.0
      %vm5575 = vcmp.ge.f32.partialorder %v5543, 0.0
      %vm5576 = vcmp.ge.f32.partialorder %v5544, 0.0
      %vm5577 = vcmp.ge.f32.partialorder %v5545, 0.0
      %vm5578 = vcmp.ge.f32.partialorder %v5546, 0.0
      %vm5579 = vcmp.ge.f32.partialorder %v5547, 0.0
      %vm5580 = vcmp.ge.f32.partialorder %v5548, 0.0
      %vm5581 = vcmp.ge.f32.partialorder %v5549, 0.0
      %vm5582 = vcmp.ge.f32.partialorder %v5550, 0.0
      %vm5583 = vcmp.ge.f32.partialorder %v5551, 0.0
      %vm5584 = vcmp.ge.f32.partialorder %v5552, 0.0
      %vm5585 = vcmp.ge.f32.partialorder %v5553, 0.0
      %vm5586 = vcmp.ge.f32.partialorder %v5554, 0.0
      %vm5587 = vcmp.ge.f32.partialorder %v5555, 0.0
      %vm5588 = vcmp.ge.f32.partialorder %v5556, 0.0
      %v5589 = vmul.f32 %v5525, 0.2
      %v5590 = vmul.f32 %v5526, 0.2
      %v5591 = vmul.f32 %v5527, 0.2
      %v5592 = vmul.f32 %v5528, 0.2
      %v5593 = vmul.f32 %v5529, 0.2
      %v5594 = vmul.f32 %v5530, 0.2
      %v5595 = vmul.f32 %v5531, 0.2
      %v5596 = vmul.f32 %v5532, 0.2
      %v5597 = vmul.f32 %v5533, 0.2
      %v5598 = vmul.f32 %v5534, 0.2
      %v5599 = vmul.f32 %v5535, 0.2
      %v5600 = vmul.f32 %v5536, 0.2
      %v5601 = vmul.f32 %v5537, 0.2
      %v5602 = vmul.f32 %v5538, 0.2
      %v5603 = vmul.f32 %v5539, 0.2
      %v5604 = vmul.f32 %v5540, 0.2
      %v5605 = vmul.f32 %v5541, 0.2
      %v5606 = vmul.f32 %v5542, 0.2
      %v5607 = vmul.f32 %v5543, 0.2
      %v5608 = vmul.f32 %v5544, 0.2
      %v5609 = vmul.f32 %v5545, 0.2
      %v5610 = vmul.f32 %v5546, 0.2
      %v5611 = vmul.f32 %v5547, 0.2
      %v5612 = vmul.f32 %v5548, 0.2
      %v5613 = vmul.f32 %v5549, 0.2
      %v5614 = vmul.f32 %v5550, 0.2
      %v5615 = vmul.f32 %v5551, 0.2
      %v5616 = vmul.f32 %v5552, 0.2
      %v5617 = vmul.f32 %v5553, 0.2
      %v5618 = vmul.f32 %v5554, 0.2
      %v5619 = vmul.f32 %v5555, 0.2
      %v5620 = vmul.f32 %v5556, 0.2
      %v5621 = vsel %vm5557, %v5525, %v5589
      %v5622 = vsel %vm5558, %v5526, %v5590
      %v5623 = vsel %vm5559, %v5527, %v5591
      %v5624 = vsel %vm5560, %v5528, %v5592
      %v5625 = vsel %vm5561, %v5529, %v5593
      %v5626 = vsel %vm5562, %v5530, %v5594
      %v5627 = vsel %vm5563, %v5531, %v5595
      %v5628 = vsel %vm5564, %v5532, %v5596
      %v5629 = vsel %vm5565, %v5533, %v5597
      %v5630 = vsel %vm5566, %v5534, %v5598
      %v5631 = vsel %vm5567, %v5535, %v5599
      %v5632 = vsel %vm5568, %v5536, %v5600
      %v5633 = vsel %vm5569, %v5537, %v5601
      %v5634 = vsel %vm5570, %v5538, %v5602
      %v5635 = vsel %vm5571, %v5539, %v5603
      %v5636 = vsel %vm5572, %v5540, %v5604
      %v5637 = vsel %vm5573, %v5541, %v5605
      %v5638 = vsel %vm5574, %v5542, %v5606
      %v5639 = vsel %vm5575, %v5543, %v5607
      %v5640 = vsel %vm5576, %v5544, %v5608
      %v5641 = vsel %vm5577, %v5545, %v5609
      %v5642 = vsel %vm5578, %v5546, %v5610
      %v5643 = vsel %vm5579, %v5547, %v5611
      %v5644 = vsel %vm5580, %v5548, %v5612
      %v5645 = vsel %vm5581, %v5549, %v5613
      %v5646 = vsel %vm5582, %v5550, %v5614
      %v5647 = vsel %vm5583, %v5551, %v5615
      %v5648 = vsel %vm5584, %v5552, %v5616
      %v5649 = vsel %vm5585, %v5553, %v5617
      %v5650 = vsel %vm5586, %v5554, %v5618
      %v5651 = vsel %vm5587, %v5555, %v5619
      %v5652 = vsel %vm5588, %v5556, %v5620
      %v5653 = vmul.f32 %v5621, %v5621
      %v5654 = vmul.f32 %v5622, %v5622
      %v5655 = vmul.f32 %v5623, %v5623
      %v5656 = vmul.f32 %v5624, %v5624
      %v5657 = vmul.f32 %v5625, %v5625
      %v5658 = vmul.f32 %v5626, %v5626
      %v5659 = vmul.f32 %v5627, %v5627
      %v5660 = vmul.f32 %v5628, %v5628
      %v5661 = vmul.f32 %v5629, %v5629
      %v5662 = vmul.f32 %v5630, %v5630
      %v5663 = vmul.f32 %v5631, %v5631
      %v5664 = vmul.f32 %v5632, %v5632
      %v5665 = vmul.f32 %v5633, %v5633
      %v5666 = vmul.f32 %v5634, %v5634
      %v5667 = vmul.f32 %v5635, %v5635
      %v5668 = vmul.f32 %v5636, %v5636
      %v5669 = vmul.f32 %v5637, %v5637
      %v5670 = vmul.f32 %v5638, %v5638
      %v5671 = vmul.f32 %v5639, %v5639
      %v5672 = vmul.f32 %v5640, %v5640
      %v5673 = vmul.f32 %v5641, %v5641
      %v5674 = vmul.f32 %v5642, %v5642
      %v5675 = vmul.f32 %v5643, %v5643
      %v5676 = vmul.f32 %v5644, %v5644
      %v5677 = vmul.f32 %v5645, %v5645
      %v5678 = vmul.f32 %v5646, %v5646
      %v5679 = vmul.f32 %v5647, %v5647
      %v5680 = vmul.f32 %v5648, %v5648
      %v5681 = vmul.f32 %v5649, %v5649
      %v5682 = vmul.f32 %v5650, %v5650
      %v5683 = vmul.f32 %v5651, %v5651
      %v5684 = vmul.f32 %v5652, %v5652
      %vm5685 = vcmask 64512
      %v5686 = vsel %vm5685, %v5653, 0.0
      %5687 = vadd.xlane.f32.xlu0 %v5686
      %v5688 = vpop.xlane.xlu0 %5687
      %v5689 = vsel %vm5685, %v5654, 0.0
      %5690 = vadd.xlane.f32.xlu0 %v5689
      %v5691 = vpop.xlane.xlu0 %5690
      %v5692 = vsel %vm5685, %v5655, 0.0
      %5693 = vadd.xlane.f32.xlu0 %v5692
      %v5694 = vpop.xlane.xlu0 %5693
      %v5695 = vsel %vm5685, %v5656, 0.0
      %5696 = vadd.xlane.f32.xlu0 %v5695
      %v5697 = vpop.xlane.xlu0 %5696
      %v5698 = vsel %vm5685, %v5657, 0.0
      %5699 = vadd.xlane.f32.xlu0 %v5698
      %v5700 = vpop.xlane.xlu0 %5699
      %v5701 = vsel %vm5685, %v5658, 0.0
      %5702 = vadd.xlane.f32.xlu0 %v5701
      %v5703 = vpop.xlane.xlu0 %5702
      %v5704 = vsel %vm5685, %v5659, 0.0
      %5705 = vadd.xlane.f32.xlu0 %v5704
      %v5706 = vpop.xlane.xlu0 %5705
      %v5707 = vsel %vm5685, %v5660, 0.0
      %5708 = vadd.xlane.f32.xlu0 %v5707
      %v5709 = vpop.xlane.xlu0 %5708
      %v5710 = vsel %vm5685, %v5661, 0.0
      %5711 = vadd.xlane.f32.xlu0 %v5710
      %v5712 = vpop.xlane.xlu0 %5711
      %v5713 = vsel %vm5685, %v5662, 0.0
      %5714 = vadd.xlane.f32.xlu0 %v5713
      %v5715 = vpop.xlane.xlu0 %5714
      %v5716 = vsel %vm5685, %v5663, 0.0
      %5717 = vadd.xlane.f32.xlu0 %v5716
      %v5718 = vpop.xlane.xlu0 %5717
      %v5719 = vsel %vm5685, %v5664, 0.0
      %5720 = vadd.xlane.f32.xlu0 %v5719
      %v5721 = vpop.xlane.xlu0 %5720
      %v5722 = vsel %vm5685, %v5665, 0.0
      %5723 = vadd.xlane.f32.xlu0 %v5722
      %v5724 = vpop.xlane.xlu0 %5723
      %v5725 = vsel %vm5685, %v5666, 0.0
      %5726 = vadd.xlane.f32.xlu0 %v5725
      %v5727 = vpop.xlane.xlu0 %5726
      %v5728 = vsel %vm5685, %v5667, 0.0
      %5729 = vadd.xlane.f32.xlu0 %v5728
      %v5730 = vpop.xlane.xlu0 %5729
      %v5731 = vsel %vm5685, %v5668, 0.0
      %5732 = vadd.xlane.f32.xlu0 %v5731
      %v5733 = vpop.xlane.xlu0 %5732
      %v5734 = vsel %vm5685, %v5669, 0.0
      %5735 = vadd.xlane.f32.xlu0 %v5734
      %v5736 = vpop.xlane.xlu0 %5735
      %v5737 = vsel %vm5685, %v5670, 0.0
      %5738 = vadd.xlane.f32.xlu0 %v5737
      %v5739 = vpop.xlane.xlu0 %5738
      %v5740 = vsel %vm5685, %v5671, 0.0
      %5741 = vadd.xlane.f32.xlu0 %v5740
      %v5742 = vpop.xlane.xlu0 %5741
      %v5743 = vsel %vm5685, %v5672, 0.0
      %5744 = vadd.xlane.f32.xlu0 %v5743
      %v5745 = vpop.xlane.xlu0 %5744
      %v5746 = vsel %vm5685, %v5673, 0.0
      %5747 = vadd.xlane.f32.xlu0 %v5746
      %v5748 = vpop.xlane.xlu0 %5747
      %v5749 = vsel %vm5685, %v5674, 0.0
      %5750 = vadd.xlane.f32.xlu0 %v5749
      %v5751 = vpop.xlane.xlu0 %5750
      %v5752 = vsel %vm5685, %v5675, 0.0
      %5753 = vadd.xlane.f32.xlu0 %v5752
      %v5754 = vpop.xlane.xlu0 %5753
      %v5755 = vsel %vm5685, %v5676, 0.0
      %5756 = vadd.xlane.f32.xlu0 %v5755
      %v5757 = vpop.xlane.xlu0 %5756
      %v5758 = vsel %vm5685, %v5677, 0.0
      %5759 = vadd.xlane.f32.xlu0 %v5758
      %v5760 = vpop.xlane.xlu0 %5759
      %v5761 = vsel %vm5685, %v5678, 0.0
      %5762 = vadd.xlane.f32.xlu0 %v5761
      %v5763 = vpop.xlane.xlu0 %5762
      %v5764 = vsel %vm5685, %v5679, 0.0
      %5765 = vadd.xlane.f32.xlu0 %v5764
      %v5766 = vpop.xlane.xlu0 %5765
      %v5767 = vsel %vm5685, %v5680, 0.0
      %5768 = vadd.xlane.f32.xlu0 %v5767
      %v5769 = vpop.xlane.xlu0 %5768
      %v5770 = vsel %vm5685, %v5681, 0.0
      %5771 = vadd.xlane.f32.xlu0 %v5770
      %v5772 = vpop.xlane.xlu0 %5771
      %v5773 = vsel %vm5685, %v5682, 0.0
      %5774 = vadd.xlane.f32.xlu0 %v5773
      %v5775 = vpop.xlane.xlu0 %5774
      %v5776 = vsel %vm5685, %v5683, 0.0
      %5777 = vadd.xlane.f32.xlu0 %v5776
      %v5778 = vpop.xlane.xlu0 %5777
      %v5779 = vsel %vm5685, %v5684, 0.0
      %5780 = vadd.xlane.f32.xlu0 %v5779
      %v5781 = vpop.xlane.xlu0 %5780
      %v5782 = vrcp.pop 8.0
      %v5783 = vmul.f32 8.0, %v5782
      %v5784 = vsub.f32 1.0, %v5783
      %v5785 = vmul.f32 %v5782, %v5784
      %v5786 = vadd.f32 %v5782, %v5785
      %vm5787 = vweird.f32 %v5782
      %v5788 = vsel %vm5787, %v5782, %v5786
      %v5789 = vmul.f32 %v5688, %v5788
      %v5790 = vmul.f32 %v5691, %v5788
      %v5791 = vmul.f32 %v5694, %v5788
      %v5792 = vmul.f32 %v5697, %v5788
      %v5793 = vmul.f32 %v5700, %v5788
      %v5794 = vmul.f32 %v5703, %v5788
      %v5795 = vmul.f32 %v5706, %v5788
      %v5796 = vmul.f32 %v5709, %v5788
      %v5797 = vmul.f32 %v5712, %v5788
      %v5798 = vmul.f32 %v5715, %v5788
      %v5799 = vmul.f32 %v5718, %v5788
      %v5800 = vmul.f32 %v5721, %v5788
      %v5801 = vmul.f32 %v5724, %v5788
      %v5802 = vmul.f32 %v5727, %v5788
      %v5803 = vmul.f32 %v5730, %v5788
      %v5804 = vmul.f32 %v5733, %v5788
      %v5805 = vmul.f32 %v5736, %v5788
      %v5806 = vmul.f32 %v5739, %v5788
      %v5807 = vmul.f32 %v5742, %v5788
      %v5808 = vmul.f32 %v5745, %v5788
      %v5809 = vmul.f32 %v5748, %v5788
      %v5810 = vmul.f32 %v5751, %v5788
      %v5811 = vmul.f32 %v5754, %v5788
      %v5812 = vmul.f32 %v5757, %v5788
      %v5813 = vmul.f32 %v5760, %v5788
      %v5814 = vmul.f32 %v5763, %v5788
      %v5815 = vmul.f32 %v5766, %v5788
      %v5816 = vmul.f32 %v5769, %v5788
      %v5817 = vmul.f32 %v5772, %v5788
      %v5818 = vmul.f32 %v5775, %v5788
      %v5819 = vmul.f32 %v5778, %v5788
      %v5820 = vmul.f32 %v5781, %v5788
      %v5821 = vadd.f32 %v5789, 1e-08
      %v5822 = vadd.f32 %v5790, 1e-08
      %v5823 = vadd.f32 %v5791, 1e-08
      %v5824 = vadd.f32 %v5792, 1e-08
      %v5825 = vadd.f32 %v5793, 1e-08
      %v5826 = vadd.f32 %v5794, 1e-08
      %v5827 = vadd.f32 %v5795, 1e-08
      %v5828 = vadd.f32 %v5796, 1e-08
      %v5829 = vadd.f32 %v5797, 1e-08
      %v5830 = vadd.f32 %v5798, 1e-08
      %v5831 = vadd.f32 %v5799, 1e-08
      %v5832 = vadd.f32 %v5800, 1e-08
      %v5833 = vadd.f32 %v5801, 1e-08
      %v5834 = vadd.f32 %v5802, 1e-08
      %v5835 = vadd.f32 %v5803, 1e-08
      %v5836 = vadd.f32 %v5804, 1e-08
      %v5837 = vadd.f32 %v5805, 1e-08
      %v5838 = vadd.f32 %v5806, 1e-08
      %v5839 = vadd.f32 %v5807, 1e-08
      %v5840 = vadd.f32 %v5808, 1e-08
      %v5841 = vadd.f32 %v5809, 1e-08
      %v5842 = vadd.f32 %v5810, 1e-08
      %v5843 = vadd.f32 %v5811, 1e-08
      %v5844 = vadd.f32 %v5812, 1e-08
      %v5845 = vadd.f32 %v5813, 1e-08
      %v5846 = vadd.f32 %v5814, 1e-08
      %v5847 = vadd.f32 %v5815, 1e-08
      %v5848 = vadd.f32 %v5816, 1e-08
      %v5849 = vadd.f32 %v5817, 1e-08
      %v5850 = vadd.f32 %v5818, 1e-08
      %v5851 = vadd.f32 %v5819, 1e-08
      %v5852 = vadd.f32 %v5820, 1e-08
      %v5853 = vrsqrt.pop %v5821
      %v5854 = vmul.f32 %v5853, %v5821
      %v5855 = vmul.f32 %v5854, %v5853
      %v5856 = vmul.f32 0.5, %v5855
      %v5857 = vsub.f32 1.5, %v5856
      %v5858 = vmul.f32 %v5853, %v5857
      %vm5859 = vweird.f32 %v5821
      %vm5860 = vweird.f32 %v5853
      %vm5861 = vmor %vm5859, %vm5860
      %v5862 = vsel %vm5861, %v5853, %v5858
      %v5863 = vrsqrt.pop %v5822
      %v5864 = vmul.f32 %v5863, %v5822
      %v5865 = vmul.f32 %v5864, %v5863
      %v5866 = vmul.f32 0.5, %v5865
      %v5867 = vsub.f32 1.5, %v5866
      %v5868 = vmul.f32 %v5863, %v5867
      %vm5869 = vweird.f32 %v5822
      %vm5870 = vweird.f32 %v5863
      %vm5871 = vmor %vm5869, %vm5870
      %v5872 = vsel %vm5871, %v5863, %v5868
      %v5873 = vrsqrt.pop %v5823
      %v5874 = vmul.f32 %v5873, %v5823
      %v5875 = vmul.f32 %v5874, %v5873
      %v5876 = vmul.f32 0.5, %v5875
      %v5877 = vsub.f32 1.5, %v5876
      %v5878 = vmul.f32 %v5873, %v5877
      %vm5879 = vweird.f32 %v5823
      %vm5880 = vweird.f32 %v5873
      %vm5881 = vmor %vm5879, %vm5880
      %v5882 = vsel %vm5881, %v5873, %v5878
      %v5883 = vrsqrt.pop %v5824
      %v5884 = vmul.f32 %v5883, %v5824
      %v5885 = vmul.f32 %v5884, %v5883
      %v5886 = vmul.f32 0.5, %v5885
      %v5887 = vsub.f32 1.5, %v5886
      %v5888 = vmul.f32 %v5883, %v5887
      %vm5889 = vweird.f32 %v5824
      %vm5890 = vweird.f32 %v5883
      %vm5891 = vmor %vm5889, %vm5890
      %v5892 = vsel %vm5891, %v5883, %v5888
      %v5893 = vrsqrt.pop %v5825
      %v5894 = vmul.f32 %v5893, %v5825
      %v5895 = vmul.f32 %v5894, %v5893
      %v5896 = vmul.f32 0.5, %v5895
      %v5897 = vsub.f32 1.5, %v5896
      %v5898 = vmul.f32 %v5893, %v5897
      %vm5899 = vweird.f32 %v5825
      %vm5900 = vweird.f32 %v5893
      %vm5901 = vmor %vm5899, %vm5900
      %v5902 = vsel %vm5901, %v5893, %v5898
      %v5903 = vrsqrt.pop %v5826
      %v5904 = vmul.f32 %v5903, %v5826
      %v5905 = vmul.f32 %v5904, %v5903
      %v5906 = vmul.f32 0.5, %v5905
      %v5907 = vsub.f32 1.5, %v5906
      %v5908 = vmul.f32 %v5903, %v5907
      %vm5909 = vweird.f32 %v5826
      %vm5910 = vweird.f32 %v5903
      %vm5911 = vmor %vm5909, %vm5910
      %v5912 = vsel %vm5911, %v5903, %v5908
      %v5913 = vrsqrt.pop %v5827
      %v5914 = vmul.f32 %v5913, %v5827
      %v5915 = vmul.f32 %v5914, %v5913
      %v5916 = vmul.f32 0.5, %v5915
      %v5917 = vsub.f32 1.5, %v5916
      %v5918 = vmul.f32 %v5913, %v5917
      %vm5919 = vweird.f32 %v5827
      %vm5920 = vweird.f32 %v5913
      %vm5921 = vmor %vm5919, %vm5920
      %v5922 = vsel %vm5921, %v5913, %v5918
      %v5923 = vrsqrt.pop %v5828
      %v5924 = vmul.f32 %v5923, %v5828
      %v5925 = vmul.f32 %v5924, %v5923
      %v5926 = vmul.f32 0.5, %v5925
      %v5927 = vsub.f32 1.5, %v5926
      %v5928 = vmul.f32 %v5923, %v5927
      %vm5929 = vweird.f32 %v5828
      %vm5930 = vweird.f32 %v5923
      %vm5931 = vmor %vm5929, %vm5930
      %v5932 = vsel %vm5931, %v5923, %v5928
      %v5933 = vrsqrt.pop %v5829
      %v5934 = vmul.f32 %v5933, %v5829
      %v5935 = vmul.f32 %v5934, %v5933
      %v5936 = vmul.f32 0.5, %v5935
      %v5937 = vsub.f32 1.5, %v5936
      %v5938 = vmul.f32 %v5933, %v5937
      %vm5939 = vweird.f32 %v5829
      %vm5940 = vweird.f32 %v5933
      %vm5941 = vmor %vm5939, %vm5940
      %v5942 = vsel %vm5941, %v5933, %v5938
      %v5943 = vrsqrt.pop %v5830
      %v5944 = vmul.f32 %v5943, %v5830
      %v5945 = vmul.f32 %v5944, %v5943
      %v5946 = vmul.f32 0.5, %v5945
      %v5947 = vsub.f32 1.5, %v5946
      %v5948 = vmul.f32 %v5943, %v5947
      %vm5949 = vweird.f32 %v5830
      %vm5950 = vweird.f32 %v5943
      %vm5951 = vmor %vm5949, %vm5950
      %v5952 = vsel %vm5951, %v5943, %v5948
      %v5953 = vrsqrt.pop %v5831
      %v5954 = vmul.f32 %v5953, %v5831
      %v5955 = vmul.f32 %v5954, %v5953
      %v5956 = vmul.f32 0.5, %v5955
      %v5957 = vsub.f32 1.5, %v5956
      %v5958 = vmul.f32 %v5953, %v5957
      %vm5959 = vweird.f32 %v5831
      %vm5960 = vweird.f32 %v5953
      %vm5961 = vmor %vm5959, %vm5960
      %v5962 = vsel %vm5961, %v5953, %v5958
      %v5963 = vrsqrt.pop %v5832
      %v5964 = vmul.f32 %v5963, %v5832
      %v5965 = vmul.f32 %v5964, %v5963
      %v5966 = vmul.f32 0.5, %v5965
      %v5967 = vsub.f32 1.5, %v5966
      %v5968 = vmul.f32 %v5963, %v5967
      %vm5969 = vweird.f32 %v5832
      %vm5970 = vweird.f32 %v5963
      %vm5971 = vmor %vm5969, %vm5970
      %v5972 = vsel %vm5971, %v5963, %v5968
      %v5973 = vrsqrt.pop %v5833
      %v5974 = vmul.f32 %v5973, %v5833
      %v5975 = vmul.f32 %v5974, %v5973
      %v5976 = vmul.f32 0.5, %v5975
      %v5977 = vsub.f32 1.5, %v5976
      %v5978 = vmul.f32 %v5973, %v5977
      %vm5979 = vweird.f32 %v5833
      %vm5980 = vweird.f32 %v5973
      %vm5981 = vmor %vm5979, %vm5980
      %v5982 = vsel %vm5981, %v5973, %v5978
      %v5983 = vrsqrt.pop %v5834
      %v5984 = vmul.f32 %v5983, %v5834
      %v5985 = vmul.f32 %v5984, %v5983
      %v5986 = vmul.f32 0.5, %v5985
      %v5987 = vsub.f32 1.5, %v5986
      %v5988 = vmul.f32 %v5983, %v5987
      %vm5989 = vweird.f32 %v5834
      %vm5990 = vweird.f32 %v5983
      %vm5991 = vmor %vm5989, %vm5990
      %v5992 = vsel %vm5991, %v5983, %v5988
      %v5993 = vrsqrt.pop %v5835
      %v5994 = vmul.f32 %v5993, %v5835
      %v5995 = vmul.f32 %v5994, %v5993
      %v5996 = vmul.f32 0.5, %v5995
      %v5997 = vsub.f32 1.5, %v5996
      %v5998 = vmul.f32 %v5993, %v5997
      %vm5999 = vweird.f32 %v5835
      %vm6000 = vweird.f32 %v5993
      %vm6001 = vmor %vm5999, %vm6000
      %v6002 = vsel %vm6001, %v5993, %v5998
      %v6003 = vrsqrt.pop %v5836
      %v6004 = vmul.f32 %v6003, %v5836
      %v6005 = vmul.f32 %v6004, %v6003
      %v6006 = vmul.f32 0.5, %v6005
      %v6007 = vsub.f32 1.5, %v6006
      %v6008 = vmul.f32 %v6003, %v6007
      %vm6009 = vweird.f32 %v5836
      %vm6010 = vweird.f32 %v6003
      %vm6011 = vmor %vm6009, %vm6010
      %v6012 = vsel %vm6011, %v6003, %v6008
      %v6013 = vrsqrt.pop %v5837
      %v6014 = vmul.f32 %v6013, %v5837
      %v6015 = vmul.f32 %v6014, %v6013
      %v6016 = vmul.f32 0.5, %v6015
      %v6017 = vsub.f32 1.5, %v6016
      %v6018 = vmul.f32 %v6013, %v6017
      %vm6019 = vweird.f32 %v5837
      %vm6020 = vweird.f32 %v6013
      %vm6021 = vmor %vm6019, %vm6020
      %v6022 = vsel %vm6021, %v6013, %v6018
      %v6023 = vrsqrt.pop %v5838
      %v6024 = vmul.f32 %v6023, %v5838
      %v6025 = vmul.f32 %v6024, %v6023
      %v6026 = vmul.f32 0.5, %v6025
      %v6027 = vsub.f32 1.5, %v6026
      %v6028 = vmul.f32 %v6023, %v6027
      %vm6029 = vweird.f32 %v5838
      %vm6030 = vweird.f32 %v6023
      %vm6031 = vmor %vm6029, %vm6030
      %v6032 = vsel %vm6031, %v6023, %v6028
      %v6033 = vrsqrt.pop %v5839
      %v6034 = vmul.f32 %v6033, %v5839
      %v6035 = vmul.f32 %v6034, %v6033
      %v6036 = vmul.f32 0.5, %v6035
      %v6037 = vsub.f32 1.5, %v6036
      %v6038 = vmul.f32 %v6033, %v6037
      %vm6039 = vweird.f32 %v5839
      %vm6040 = vweird.f32 %v6033
      %vm6041 = vmor %vm6039, %vm6040
      %v6042 = vsel %vm6041, %v6033, %v6038
      %v6043 = vrsqrt.pop %v5840
      %v6044 = vmul.f32 %v6043, %v5840
      %v6045 = vmul.f32 %v6044, %v6043
      %v6046 = vmul.f32 0.5, %v6045
      %v6047 = vsub.f32 1.5, %v6046
      %v6048 = vmul.f32 %v6043, %v6047
      %vm6049 = vweird.f32 %v5840
      %vm6050 = vweird.f32 %v6043
      %vm6051 = vmor %vm6049, %vm6050
      %v6052 = vsel %vm6051, %v6043, %v6048
      %v6053 = vrsqrt.pop %v5841
      %v6054 = vmul.f32 %v6053, %v5841
      %v6055 = vmul.f32 %v6054, %v6053
      %v6056 = vmul.f32 0.5, %v6055
      %v6057 = vsub.f32 1.5, %v6056
      %v6058 = vmul.f32 %v6053, %v6057
      %vm6059 = vweird.f32 %v5841
      %vm6060 = vweird.f32 %v6053
      %vm6061 = vmor %vm6059, %vm6060
      %v6062 = vsel %vm6061, %v6053, %v6058
      %v6063 = vrsqrt.pop %v5842
      %v6064 = vmul.f32 %v6063, %v5842
      %v6065 = vmul.f32 %v6064, %v6063
      %v6066 = vmul.f32 0.5, %v6065
      %v6067 = vsub.f32 1.5, %v6066
      %v6068 = vmul.f32 %v6063, %v6067
      %vm6069 = vweird.f32 %v5842
      %vm6070 = vweird.f32 %v6063
      %vm6071 = vmor %vm6069, %vm6070
      %v6072 = vsel %vm6071, %v6063, %v6068
      %v6073 = vrsqrt.pop %v5843
      %v6074 = vmul.f32 %v6073, %v5843
      %v6075 = vmul.f32 %v6074, %v6073
      %v6076 = vmul.f32 0.5, %v6075
      %v6077 = vsub.f32 1.5, %v6076
      %v6078 = vmul.f32 %v6073, %v6077
      %vm6079 = vweird.f32 %v5843
      %vm6080 = vweird.f32 %v6073
      %vm6081 = vmor %vm6079, %vm6080
      %v6082 = vsel %vm6081, %v6073, %v6078
      %v6083 = vrsqrt.pop %v5844
      %v6084 = vmul.f32 %v6083, %v5844
      %v6085 = vmul.f32 %v6084, %v6083
      %v6086 = vmul.f32 0.5, %v6085
      %v6087 = vsub.f32 1.5, %v6086
      %v6088 = vmul.f32 %v6083, %v6087
      %vm6089 = vweird.f32 %v5844
      %vm6090 = vweird.f32 %v6083
      %vm6091 = vmor %vm6089, %vm6090
      %v6092 = vsel %vm6091, %v6083, %v6088
      %v6093 = vrsqrt.pop %v5845
      %v6094 = vmul.f32 %v6093, %v5845
      %v6095 = vmul.f32 %v6094, %v6093
      %v6096 = vmul.f32 0.5, %v6095
      %v6097 = vsub.f32 1.5, %v6096
      %v6098 = vmul.f32 %v6093, %v6097
      %vm6099 = vweird.f32 %v5845
      %vm6100 = vweird.f32 %v6093
      %vm6101 = vmor %vm6099, %vm6100
      %v6102 = vsel %vm6101, %v6093, %v6098
      %v6103 = vrsqrt.pop %v5846
      %v6104 = vmul.f32 %v6103, %v5846
      %v6105 = vmul.f32 %v6104, %v6103
      %v6106 = vmul.f32 0.5, %v6105
      %v6107 = vsub.f32 1.5, %v6106
      %v6108 = vmul.f32 %v6103, %v6107
      %vm6109 = vweird.f32 %v5846
      %vm6110 = vweird.f32 %v6103
      %vm6111 = vmor %vm6109, %vm6110
      %v6112 = vsel %vm6111, %v6103, %v6108
      %v6113 = vrsqrt.pop %v5847
      %v6114 = vmul.f32 %v6113, %v5847
      %v6115 = vmul.f32 %v6114, %v6113
      %v6116 = vmul.f32 0.5, %v6115
      %v6117 = vsub.f32 1.5, %v6116
      %v6118 = vmul.f32 %v6113, %v6117
      %vm6119 = vweird.f32 %v5847
      %vm6120 = vweird.f32 %v6113
      %vm6121 = vmor %vm6119, %vm6120
      %v6122 = vsel %vm6121, %v6113, %v6118
      %v6123 = vrsqrt.pop %v5848
      %v6124 = vmul.f32 %v6123, %v5848
      %v6125 = vmul.f32 %v6124, %v6123
      %v6126 = vmul.f32 0.5, %v6125
      %v6127 = vsub.f32 1.5, %v6126
      %v6128 = vmul.f32 %v6123, %v6127
      %vm6129 = vweird.f32 %v5848
      %vm6130 = vweird.f32 %v6123
      %vm6131 = vmor %vm6129, %vm6130
      %v6132 = vsel %vm6131, %v6123, %v6128
      %v6133 = vrsqrt.pop %v5849
      %v6134 = vmul.f32 %v6133, %v5849
      %v6135 = vmul.f32 %v6134, %v6133
      %v6136 = vmul.f32 0.5, %v6135
      %v6137 = vsub.f32 1.5, %v6136
      %v6138 = vmul.f32 %v6133, %v6137
      %vm6139 = vweird.f32 %v5849
      %vm6140 = vweird.f32 %v6133
      %vm6141 = vmor %vm6139, %vm6140
      %v6142 = vsel %vm6141, %v6133, %v6138
      %v6143 = vrsqrt.pop %v5850
      %v6144 = vmul.f32 %v6143, %v5850
      %v6145 = vmul.f32 %v6144, %v6143
      %v6146 = vmul.f32 0.5, %v6145
      %v6147 = vsub.f32 1.5, %v6146
      %v6148 = vmul.f32 %v6143, %v6147
      %vm6149 = vweird.f32 %v5850
      %vm6150 = vweird.f32 %v6143
      %vm6151 = vmor %vm6149, %vm6150
      %v6152 = vsel %vm6151, %v6143, %v6148
      %v6153 = vrsqrt.pop %v5851
      %v6154 = vmul.f32 %v6153, %v5851
      %v6155 = vmul.f32 %v6154, %v6153
      %v6156 = vmul.f32 0.5, %v6155
      %v6157 = vsub.f32 1.5, %v6156
      %v6158 = vmul.f32 %v6153, %v6157
      %vm6159 = vweird.f32 %v5851
      %vm6160 = vweird.f32 %v6153
      %vm6161 = vmor %vm6159, %vm6160
      %v6162 = vsel %vm6161, %v6153, %v6158
      %v6163 = vrsqrt.pop %v5852
      %v6164 = vmul.f32 %v6163, %v5852
      %v6165 = vmul.f32 %v6164, %v6163
      %v6166 = vmul.f32 0.5, %v6165
      %v6167 = vsub.f32 1.5, %v6166
      %v6168 = vmul.f32 %v6163, %v6167
      %vm6169 = vweird.f32 %v5852
      %vm6170 = vweird.f32 %v6163
      %vm6171 = vmor %vm6169, %vm6170
      %v6172 = vsel %vm6171, %v6163, %v6168
      %v6173 = vmul.f32 %v5621, %v5862
      %v6174 = vmul.f32 %v5622, %v5872
      %v6175 = vmul.f32 %v5623, %v5882
      %v6176 = vmul.f32 %v5624, %v5892
      %v6177 = vmul.f32 %v5625, %v5902
      %v6178 = vmul.f32 %v5626, %v5912
      %v6179 = vmul.f32 %v5627, %v5922
      %v6180 = vmul.f32 %v5628, %v5932
      %v6181 = vmul.f32 %v5629, %v5942
      %v6182 = vmul.f32 %v5630, %v5952
      %v6183 = vmul.f32 %v5631, %v5962
      %v6184 = vmul.f32 %v5632, %v5972
      %v6185 = vmul.f32 %v5633, %v5982
      %v6186 = vmul.f32 %v5634, %v5992
      %v6187 = vmul.f32 %v5635, %v6002
      %v6188 = vmul.f32 %v5636, %v6012
      %v6189 = vmul.f32 %v5637, %v6022
      %v6190 = vmul.f32 %v5638, %v6032
      %v6191 = vmul.f32 %v5639, %v6042
      %v6192 = vmul.f32 %v5640, %v6052
      %v6193 = vmul.f32 %v5641, %v6062
      %v6194 = vmul.f32 %v5642, %v6072
      %v6195 = vmul.f32 %v5643, %v6082
      %v6196 = vmul.f32 %v5644, %v6092
      %v6197 = vmul.f32 %v5645, %v6102
      %v6198 = vmul.f32 %v5646, %v6112
      %v6199 = vmul.f32 %v5647, %v6122
      %v6200 = vmul.f32 %v5648, %v6132
      %v6201 = vmul.f32 %v5649, %v6142
      %v6202 = vmul.f32 %v5650, %v6152
      %v6203 = vmul.f32 %v5651, %v6162
      %v6204 = vmul.f32 %v5652, %v6172
      %v6205 = vpack.c.bf16 %v6173, %v6173
      %v6206 = vpack.c.bf16 %v6174, %v6174
      %v6207 = vpack.c.bf16 %v6175, %v6175
      %v6208 = vpack.c.bf16 %v6176, %v6176
      %v6209 = vpack.c.bf16 %v6177, %v6177
      %v6210 = vpack.c.bf16 %v6178, %v6178
      %v6211 = vpack.c.bf16 %v6179, %v6179
      %v6212 = vpack.c.bf16 %v6180, %v6180
      %v6213 = vpack.c.bf16 %v6181, %v6181
      %v6214 = vpack.c.bf16 %v6182, %v6182
      %v6215 = vpack.c.bf16 %v6183, %v6183
      %v6216 = vpack.c.bf16 %v6184, %v6184
      %v6217 = vpack.c.bf16 %v6185, %v6185
      %v6218 = vpack.c.bf16 %v6186, %v6186
      %v6219 = vpack.c.bf16 %v6187, %v6187
      %v6220 = vpack.c.bf16 %v6188, %v6188
      %v6221 = vpack.c.bf16 %v6189, %v6189
      %v6222 = vpack.c.bf16 %v6190, %v6190
      %v6223 = vpack.c.bf16 %v6191, %v6191
      %v6224 = vpack.c.bf16 %v6192, %v6192
      %v6225 = vpack.c.bf16 %v6193, %v6193
      %v6226 = vpack.c.bf16 %v6194, %v6194
      %v6227 = vpack.c.bf16 %v6195, %v6195
      %v6228 = vpack.c.bf16 %v6196, %v6196
      %v6229 = vpack.c.bf16 %v6197, %v6197
      %v6230 = vpack.c.bf16 %v6198, %v6198
      %v6231 = vpack.c.bf16 %v6199, %v6199
      %v6232 = vpack.c.bf16 %v6200, %v6200
      %v6233 = vpack.c.bf16 %v6201, %v6201
      %v6234 = vpack.c.bf16 %v6202, %v6202
      %v6235 = vpack.c.bf16 %v6203, %v6203
      %v6236 = vpack.c.bf16 %v6204, %v6204
      %vm6237 = vcmask 60416
      %6238 = vst.msk [vmem:[%s332] sm:$0xf] %vm6237, %v6205
      %6239 = vst.msk [vmem:[%s332 + $0x4] sm:$0xf] %vm6237, %v6206
      %6240 = vst.msk [vmem:[%s332 + $0x8] sm:$0xf] %vm6237, %v6207
      %6241 = vst.msk [vmem:[%s332 + $0xc] sm:$0xf] %vm6237, %v6208
      %6242 = vst.msk [vmem:[%s332 + $0x10] sm:$0xf] %vm6237, %v6209
      %6243 = vst.msk [vmem:[%s332 + $0x14] sm:$0xf] %vm6237, %v6210
      %6244 = vst.msk [vmem:[%s332 + $0x18] sm:$0xf] %vm6237, %v6211
      %6245 = vst.msk [vmem:[%s332 + $0x1c] sm:$0xf] %vm6237, %v6212
      %6246 = vst.msk [vmem:[%s332 + $0x20] sm:$0xf] %vm6237, %v6213
      %6247 = vst.msk [vmem:[%s332 + $0x24] sm:$0xf] %vm6237, %v6214
      %6248 = vst.msk [vmem:[%s332 + $0x28] sm:$0xf] %vm6237, %v6215
      %6249 = vst.msk [vmem:[%s332 + $0x2c] sm:$0xf] %vm6237, %v6216
      %6250 = vst.msk [vmem:[%s332 + $0x30] sm:$0xf] %vm6237, %v6217
      %6251 = vst.msk [vmem:[%s332 + $0x34] sm:$0xf] %vm6237, %v6218
      %6252 = vst.msk [vmem:[%s332 + $0x38] sm:$0xf] %vm6237, %v6219
      %6253 = vst.msk [vmem:[%s332 + $0x3c] sm:$0xf] %vm6237, %v6220
      %6254 = vst.msk [vmem:[%s332 + $0x40] sm:$0xf] %vm6237, %v6221
      %6255 = vst.msk [vmem:[%s332 + $0x44] sm:$0xf] %vm6237, %v6222
      %6256 = vst.msk [vmem:[%s332 + $0x48] sm:$0xf] %vm6237, %v6223
      %6257 = vst.msk [vmem:[%s332 + $0x4c] sm:$0xf] %vm6237, %v6224
      %6258 = vst.msk [vmem:[%s332 + $0x50] sm:$0xf] %vm6237, %v6225
      %6259 = vst.msk [vmem:[%s332 + $0x54] sm:$0xf] %vm6237, %v6226
      %6260 = vst.msk [vmem:[%s332 + $0x58] sm:$0xf] %vm6237, %v6227
      %6261 = vst.msk [vmem:[%s332 + $0x5c] sm:$0xf] %vm6237, %v6228
      %6262 = vst.msk [vmem:[%s332 + $0x60] sm:$0xf] %vm6237, %v6229
      %6263 = vst.msk [vmem:[%s332 + $0x64] sm:$0xf] %vm6237, %v6230
      %6264 = vst.msk [vmem:[%s332 + $0x68] sm:$0xf] %vm6237, %v6231
      %6265 = vst.msk [vmem:[%s332 + $0x6c] sm:$0xf] %vm6237, %v6232
      %6266 = vst.msk [vmem:[%s332 + $0x70] sm:$0xf] %vm6237, %v6233
      %6267 = vst.msk [vmem:[%s332 + $0x74] sm:$0xf] %vm6237, %v6234
      %6268 = vst.msk [vmem:[%s332 + $0x78] sm:$0xf] %vm6237, %v6235
      %6269 = vst.msk [vmem:[%s332 + $0x7c] sm:$0xf] %vm6237, %v6236
      %s6270 = smul.u32 32, %s21
      %p6271 = scmp.lt.s32.totalorder %s20, 1
      %s6272 = scalar_select %p6271, %s20, 1
      %p6273 = scmp.lt.s32.totalorder %s6270, 31
      %s6274 = scalar_select %p6273, %s6270, 31
      %s6275 = smul.addr %s6272, 32
      %s6276 = sadd.s32 %s6274, %s6275
      %s6277 = smul.addr %s6276, 4
      %s6278 = scalar_lea.vmem %s5, %s6277
      // Predicated region
      $region41: #{tpu_custom_call.1} parent=39 // pred_check
        %p6279 = pneg %p171
      $region42: #{tpu_custom_call.1} parent=39 // pred_check_branch
        %6281 = sbr.rel (%p6279) target = $region44
      $region43: #{tpu_custom_call.1} parent=39 // pred_region
        %s6282 = smul.u32 32, %s21
      $region44: #{tpu_custom_call.1} parent=39 // pred_fallthru
        _
    $region40: #{tpu_custom_call.1} parent=5 // pred_fallthru
      _
    %p6283 = scmp.le.s32.totalorder 2, %s11
    // Predicated region
    $region45: #{tpu_custom_call.1} parent=5 // pred_check
      %p6284 = pneg %p6283
    $region46: #{tpu_custom_call.1} parent=5 // pred_check_branch
      %6286 = sbr.rel (%p6284) target = $region48
    $region47: #{tpu_custom_call.1} parent=5 // pred_region
      %s6287 = ssub.s32 %s11, 2
      // Predicated region
      $region49: #{tpu_custom_call.1} parent=47 // pred_check
        %p6288 = pneg %p177
      $region50: #{tpu_custom_call.1} parent=47 // pred_check_branch
        %6290 = sbr.rel (%p6288) target = $region52
      $region51: #{tpu_custom_call.1} parent=47 // pred_region
        %s6291 = smul.u32 32, %s23
        %p6292 = scmp.lt.s32.totalorder %s22, 1
        %s6293 = scalar_select %p6292, %s22, 1
        %p6294 = scmp.lt.s32.totalorder %s6291, 31
        %s6295 = scalar_select %p6294, %s6291, 31
        %s6296 = smul.addr %s6293, 32
        %s6297 = sadd.s32 %s6295, %s6296
        %s6298 = smul.addr %s6297, 4
        %s6299 = scalar_lea.vmem %s5, %s6298
      $region52: #{tpu_custom_call.1} parent=47 // pred_fallthru
        _
    $region48: #{tpu_custom_call.1} parent=5 // pred_fallthru
      _
  $region6: #{tpu_custom_call.1} parent=0 // loop_footer
    %s15 = sadd.s32 1, %s11
  $region7: #{tpu_custom_call.1} parent=0 // loop_footer_branch
    %10 = sbr.rel target = $region3
  $region8: #{tpu_custom_call.1} parent=0 // loop_exit
    _

</llo_original>
